<compile_context>
chip_gen: v7x
topology: tpu7x:2x2x1
jax: 0.10.0
libtpu: 0.0.40
codegen_flags: <defaults>
</compile_context>

<pallas_src>
import numpy as np
import jax
import jax.numpy as jnp
from jax.experimental import pallas as pl
from jax.experimental.pallas import tpu as pltpu

IN_DIM = 16
OUT_DIM = 2 * IN_DIM          # = in_dim * 2, as in the module
MEM_LEN = 64                  # params['memory_len']
H_A = 500                     # hidden sizes hard-coded in the module
H_B = 1000
BATCH = 1                     # params['batch_size'] = 1

HA_P = 512                    # 500  -> next multiple of 128 (lane axis only)
HB_P = 1024                   # 1000 -> next multiple of 128 (lane axis only)


def memstream_forward_kernel(
    x_ref, mean_ref, inv_std_ref,
    dw1_ref, db1_ref, dw2_ref, db2_ref, dw3_ref, db3_ref,
    gw1_ref, gb1_ref, gw2_ref, gb2_ref, gw3_ref, gb3_ref,
    mem_ref, out_ref,
):
    # new = (x - mean) / std with new[:, std == 0] = 0.
    # inv_std is precomputed as where(std == 0, 0, 1/std), so one multiply
    # implements both the divide and the zeroing of constant features.
    new = (x_ref[...] - mean_ref[...]) * inv_std_ref[...]

    def dense(act_f32, w_ref, b_ref):
        # bf16 weights (halved HBM traffic), f32 accumulation on the MXU.
        return jnp.dot(act_f32.astype(jnp.bfloat16), w_ref[...],
                       preferred_element_type=jnp.float32) + b_ref[...]

    # discriminator: Linear -> ReLU -> Linear -> ReLU -> Linear -> Sigmoid
    h = jnp.maximum(dense(new, dw1_ref, db1_ref), 0.0)
    h = jnp.maximum(dense(h, dw2_ref, db2_ref), 0.0)
    d = jax.nn.sigmoid(dense(h, dw3_ref, db3_ref))

    # generator: Linear -> ReLU -> Linear -> ReLU -> Linear -> Tanh
    g = jnp.maximum(dense(d, gw1_ref, gb1_ref), 0.0)
    g = jnp.maximum(dense(g, gw2_ref, gb2_ref), 0.0)
    enc = jnp.tanh(dense(g, gw3_ref, gb3_ref))                     # (1, OUT_DIM)

    # loss = min over memory rows of the L1 distance to encoder_output.
    dist = jnp.sum(jnp.abs(mem_ref[...] - enc), axis=1, keepdims=True)  # (N, 1)
    out_ref[...] = jnp.min(dist, axis=0, keepdims=True)                 # (1, 1)


def _pad_to(a, rows, cols):
    return jnp.pad(a, ((0, rows - a.shape[0]), (0, cols - a.shape[1])))


def prepare_params(disc_params, gen_params):
    """One-time weight packing (hidden-dim lane padding + bf16 cast).

    Runs once at model-init time so the per-call forward streams only the
    already-packed bf16 weights from HBM.  Weights are stored as
    (in_features, out_features), i.e. PyTorch weight.T.
    """
    (dw1, db1), (dw2, db2), (dw3, db3) = disc_params
    (gw1, gb1), (gw2, gb2), (gw3, gb3) = gen_params
    bf16 = jnp.bfloat16
    return (
        # discriminator
        _pad_to(dw1, IN_DIM, HB_P).astype(bf16), _pad_to(db1[None, :], 1, HB_P),
        _pad_to(dw2, HB_P, HA_P).astype(bf16),   _pad_to(db2[None, :], 1, HA_P),
        _pad_to(dw3, HA_P, IN_DIM).astype(bf16), db3[None, :],
        # generator
        _pad_to(gw1, IN_DIM, HA_P).astype(bf16), _pad_to(gb1[None, :], 1, HA_P),
        _pad_to(gw2, HA_P, HB_P).astype(bf16),   _pad_to(gb2[None, :], 1, HB_P),
        _pad_to(gw3, HB_P, OUT_DIM).astype(bf16), gb3[None, :],
    )


@jax.jit
def memstream_forward(x, mean, inv_std, packed_params, memory):
    args = (x, mean[None, :], inv_std[None, :], *packed_params, memory)

    bytes_accessed = int(
        sum(int(np.prod(a.shape)) * a.dtype.itemsize for a in args)) + 4
    flops = 2 * (IN_DIM * HB_P + HB_P * HA_P + HA_P * IN_DIM
                 + IN_DIM * HA_P + HA_P * HB_P + HB_P * OUT_DIM)

    vmem = pl.BlockSpec(memory_space=pltpu.MemorySpace.VMEM)
    out = pl.pallas_call(
        memstream_forward_kernel,
        out_shape=jax.ShapeDtypeStruct((1, 1), jnp.float32),
        in_specs=[vmem] * len(args),
        out_specs=vmem,
        cost_estimate=pl.CostEstimate(
            flops=flops,
            transcendentals=IN_DIM + OUT_DIM,   # sigmoid + tanh lanes
            bytes_accessed=bytes_accessed),
    )(*args)
    return out[0, 0]


def memstream_forward_ref(x, mean, std, disc_params, gen_params, memory):
    zero = std == 0.0
    new = jnp.where(zero, 0.0, (x - mean) / jnp.where(zero, 1.0, std))
    (dw1, db1), (dw2, db2), (dw3, db3) = disc_params
    (gw1, gb1), (gw2, gb2), (gw3, gb3) = gen_params
    h = jax.nn.relu(new @ dw1 + db1)
    h = jax.nn.relu(h @ dw2 + db2)
    d = jax.nn.sigmoid(h @ dw3 + db3)
    g = jax.nn.relu(d @ gw1 + gb1)
    g = jax.nn.relu(g @ gw2 + gb2)
    enc = jnp.tanh(g @ gw3 + gb3)
    return jnp.min(jnp.sum(jnp.abs(memory - enc), axis=1))


def _linear_params(key, fan_in, fan_out):
    kw, kb = jax.random.split(key)
    w = jax.random.normal(kw, (fan_in, fan_out), jnp.float32) * 0.05
    b = jax.random.normal(kb, (fan_out,), jnp.float32) * 0.05
    return w, b


if __name__ == "__main__":
    key = jax.random.PRNGKey(0)
    ks = jax.random.split(key, 10)

    # discriminator weights (stored as (in, out), i.e. PyTorch weight.T)
    disc_params = (
        _linear_params(ks[0], IN_DIM, H_B),
        _linear_params(ks[1], H_B, H_A),
        _linear_params(ks[2], H_A, IN_DIM),
    )
    # generator weights
    gen_params = (
        _linear_params(ks[3], IN_DIM, H_A),
        _linear_params(ks[4], H_A, H_B),
        _linear_params(ks[5], H_B, OUT_DIM),
    )

    # memory bank and stored data (torch.randn in __init__)
    memory = jax.random.normal(ks[6], (MEM_LEN, OUT_DIM), jnp.float32)
    mem_data = jax.random.normal(ks[7], (MEM_LEN, IN_DIM), jnp.float32)
    # force one constant feature so the std == 0 branch is exercised
    mem_data = mem_data.at[:, 3].set(1.5)

    mean = jnp.mean(mem_data, axis=0)
    std = jnp.std(mem_data, axis=0, ddof=1)     # torch.std is unbiased
    inv_std = jnp.where(std == 0.0, 0.0, 1.0 / jnp.where(std == 0.0, 1.0, std))

    x = jax.random.normal(ks[8], (BATCH, IN_DIM), jnp.float32)

    # One-time weight prep (pad + bf16 cast) -- NOT on the per-call path.
    packed = prepare_params(disc_params, gen_params)
    packed = jax.block_until_ready(packed)

    loss = memstream_forward(x, mean, inv_std, packed, memory)
    loss = jax.block_until_ready(loss)

    # Reference uses the same bf16-rounded weights so the check isolates
    # kernel correctness from the intentional weight quantization.
    disc_q = tuple((w.astype(jnp.bfloat16).astype(jnp.float32), b)
                   for w, b in disc_params)
    gen_q = tuple((w.astype(jnp.bfloat16).astype(jnp.float32), b)
                  for w, b in gen_params)
    ref = memstream_forward_ref(x, mean, std, disc_q, gen_q, memory)
    np.testing.assert_allclose(np.asarray(loss), np.asarray(ref),
                               rtol=5e-2, atol=5e-2)

    print("KERNEL_OK")
</pallas_src>

<mosaic_0001>
module attributes {stable_mosaic.version = 11 : i64} {
  func.func @memstream_forward_kernel(%arg0: memref<1x16xf32, #tpu.memory_space<vmem>>, %arg1: memref<1x16xf32, #tpu.memory_space<vmem>>, %arg2: memref<1x16xf32, #tpu.memory_space<vmem>>, %arg3: memref<16x1024xbf16, #tpu.memory_space<vmem>>, %arg4: memref<1x1024xf32, #tpu.memory_space<vmem>>, %arg5: memref<1024x512xbf16, #tpu.memory_space<vmem>>, %arg6: memref<1x512xf32, #tpu.memory_space<vmem>>, %arg7: memref<512x16xbf16, #tpu.memory_space<vmem>>, %arg8: memref<1x16xf32, #tpu.memory_space<vmem>>, %arg9: memref<16x512xbf16, #tpu.memory_space<vmem>>, %arg10: memref<1x512xf32, #tpu.memory_space<vmem>>, %arg11: memref<512x1024xbf16, #tpu.memory_space<vmem>>, %arg12: memref<1x1024xf32, #tpu.memory_space<vmem>>, %arg13: memref<1024x32xbf16, #tpu.memory_space<vmem>>, %arg14: memref<1x32xf32, #tpu.memory_space<vmem>>, %arg15: memref<64x32xf32, #tpu.memory_space<vmem>>, %arg16: memref<1x1xf32, #tpu.memory_space<vmem>>) attributes {dimension_semantics = [], scalar_prefetch = 0 : i64, scratch_operands = 0 : i64, tpu.core_type = #tpu.core_type<tc>} {
    %c0 = arith.constant 0 : index
    %c0_0 = arith.constant 0 : index
    %0 = vector.load %arg0[%c0, %c0_0] : memref<1x16xf32, #tpu.memory_space<vmem>>, vector<1x16xf32>
    %c0_1 = arith.constant 0 : index
    %c0_2 = arith.constant 0 : index
    %1 = vector.load %arg1[%c0_1, %c0_2] : memref<1x16xf32, #tpu.memory_space<vmem>>, vector<1x16xf32>
    %2 = arith.subf %0, %1 : vector<1x16xf32>
    %c0_3 = arith.constant 0 : index
    %c0_4 = arith.constant 0 : index
    %3 = vector.load %arg2[%c0_3, %c0_4] : memref<1x16xf32, #tpu.memory_space<vmem>>, vector<1x16xf32>
    %4 = arith.mulf %2, %3 : vector<1x16xf32>
    %5 = arith.truncf %4 : vector<1x16xf32> to vector<1x16xbf16>
    %c0_5 = arith.constant 0 : index
    %c0_6 = arith.constant 0 : index
    %6 = vector.load %arg3[%c0_5, %c0_6] : memref<16x1024xbf16, #tpu.memory_space<vmem>>, vector<16x1024xbf16>
    %cst = arith.constant dense<0.000000e+00> : vector<1x1024xf32>
    %7 = tpu.matmul %5, %6, %cst {dimension_numbers = #tpu.dot_dimension_numbers<[1], [0], [0], [1], [0, 0, 1, 1], [], []>} : vector<1x16xbf16>, vector<16x1024xbf16>, vector<1x1024xf32> -> vector<1x1024xf32>
    %c0_7 = arith.constant 0 : index
    %c0_8 = arith.constant 0 : index
    %8 = vector.load %arg4[%c0_7, %c0_8] : memref<1x1024xf32, #tpu.memory_space<vmem>>, vector<1x1024xf32>
    %9 = arith.addf %7, %8 : vector<1x1024xf32>
    %cst_9 = arith.constant 0.000000e+00 : f32
    %10 = vector.broadcast %cst_9 : f32 to vector<1x1024xf32>
    %11 = arith.maximumf %9, %10 : vector<1x1024xf32>
    %12 = arith.truncf %11 : vector<1x1024xf32> to vector<1x1024xbf16>
    %c0_10 = arith.constant 0 : index
    %c0_11 = arith.constant 0 : index
    %13 = vector.load %arg5[%c0_10, %c0_11] : memref<1024x512xbf16, #tpu.memory_space<vmem>>, vector<1024x512xbf16>
    %cst_12 = arith.constant dense<0.000000e+00> : vector<1x512xf32>
    %14 = tpu.matmul %12, %13, %cst_12 {dimension_numbers = #tpu.dot_dimension_numbers<[1], [0], [0], [1], [0, 0, 1, 1], [], []>} : vector<1x1024xbf16>, vector<1024x512xbf16>, vector<1x512xf32> -> vector<1x512xf32>
    %c0_13 = arith.constant 0 : index
    %c0_14 = arith.constant 0 : index
    %15 = vector.load %arg6[%c0_13, %c0_14] : memref<1x512xf32, #tpu.memory_space<vmem>>, vector<1x512xf32>
    %16 = arith.addf %14, %15 : vector<1x512xf32>
    %cst_15 = arith.constant 0.000000e+00 : f32
    %17 = vector.broadcast %cst_15 : f32 to vector<1x512xf32>
    %18 = arith.maximumf %16, %17 : vector<1x512xf32>
    %19 = arith.truncf %18 : vector<1x512xf32> to vector<1x512xbf16>
    %c0_16 = arith.constant 0 : index
    %c0_17 = arith.constant 0 : index
    %20 = vector.load %arg7[%c0_16, %c0_17] : memref<512x16xbf16, #tpu.memory_space<vmem>>, vector<512x16xbf16>
    %cst_18 = arith.constant dense<0.000000e+00> : vector<1x16xf32>
    %21 = tpu.matmul %19, %20, %cst_18 {dimension_numbers = #tpu.dot_dimension_numbers<[1], [0], [0], [1], [0, 0, 1, 1], [], []>} : vector<1x512xbf16>, vector<512x16xbf16>, vector<1x16xf32> -> vector<1x16xf32>
    %c0_19 = arith.constant 0 : index
    %c0_20 = arith.constant 0 : index
    %22 = vector.load %arg8[%c0_19, %c0_20] : memref<1x16xf32, #tpu.memory_space<vmem>>, vector<1x16xf32>
    %23 = arith.addf %21, %22 : vector<1x16xf32>
    %24 = arith.negf %23 : vector<1x16xf32>
    %25 = math.exp %24 : vector<1x16xf32>
    %cst_21 = arith.constant 1.000000e+00 : f32
    %26 = vector.broadcast %cst_21 : f32 to vector<1x16xf32>
    %27 = arith.addf %26, %25 : vector<1x16xf32>
    %28 = arith.divf %26, %27 : vector<1x16xf32>
    %29 = arith.truncf %28 : vector<1x16xf32> to vector<1x16xbf16>
    %c0_22 = arith.constant 0 : index
    %c0_23 = arith.constant 0 : index
    %30 = vector.load %arg9[%c0_22, %c0_23] : memref<16x512xbf16, #tpu.memory_space<vmem>>, vector<16x512xbf16>
    %cst_24 = arith.constant dense<0.000000e+00> : vector<1x512xf32>
    %31 = tpu.matmul %29, %30, %cst_24 {dimension_numbers = #tpu.dot_dimension_numbers<[1], [0], [0], [1], [0, 0, 1, 1], [], []>} : vector<1x16xbf16>, vector<16x512xbf16>, vector<1x512xf32> -> vector<1x512xf32>
    %c0_25 = arith.constant 0 : index
    %c0_26 = arith.constant 0 : index
    %32 = vector.load %arg10[%c0_25, %c0_26] : memref<1x512xf32, #tpu.memory_space<vmem>>, vector<1x512xf32>
    %33 = arith.addf %31, %32 : vector<1x512xf32>
    %cst_27 = arith.constant 0.000000e+00 : f32
    %34 = vector.broadcast %cst_27 : f32 to vector<1x512xf32>
    %35 = arith.maximumf %33, %34 : vector<1x512xf32>
    %36 = arith.truncf %35 : vector<1x512xf32> to vector<1x512xbf16>
    %c0_28 = arith.constant 0 : index
    %c0_29 = arith.constant 0 : index
    %37 = vector.load %arg11[%c0_28, %c0_29] : memref<512x1024xbf16, #tpu.memory_space<vmem>>, vector<512x1024xbf16>
    %cst_30 = arith.constant dense<0.000000e+00> : vector<1x1024xf32>
    %38 = tpu.matmul %36, %37, %cst_30 {dimension_numbers = #tpu.dot_dimension_numbers<[1], [0], [0], [1], [0, 0, 1, 1], [], []>} : vector<1x512xbf16>, vector<512x1024xbf16>, vector<1x1024xf32> -> vector<1x1024xf32>
    %c0_31 = arith.constant 0 : index
    %c0_32 = arith.constant 0 : index
    %39 = vector.load %arg12[%c0_31, %c0_32] : memref<1x1024xf32, #tpu.memory_space<vmem>>, vector<1x1024xf32>
    %40 = arith.addf %38, %39 : vector<1x1024xf32>
    %cst_33 = arith.constant 0.000000e+00 : f32
    %41 = vector.broadcast %cst_33 : f32 to vector<1x1024xf32>
    %42 = arith.maximumf %40, %41 : vector<1x1024xf32>
    %43 = arith.truncf %42 : vector<1x1024xf32> to vector<1x1024xbf16>
    %c0_34 = arith.constant 0 : index
    %c0_35 = arith.constant 0 : index
    %44 = vector.load %arg13[%c0_34, %c0_35] : memref<1024x32xbf16, #tpu.memory_space<vmem>>, vector<1024x32xbf16>
    %cst_36 = arith.constant dense<0.000000e+00> : vector<1x32xf32>
    %45 = tpu.matmul %43, %44, %cst_36 {dimension_numbers = #tpu.dot_dimension_numbers<[1], [0], [0], [1], [0, 0, 1, 1], [], []>} : vector<1x1024xbf16>, vector<1024x32xbf16>, vector<1x32xf32> -> vector<1x32xf32>
    %c0_37 = arith.constant 0 : index
    %c0_38 = arith.constant 0 : index
    %46 = vector.load %arg14[%c0_37, %c0_38] : memref<1x32xf32, #tpu.memory_space<vmem>>, vector<1x32xf32>
    %47 = arith.addf %45, %46 : vector<1x32xf32>
    %48 = math.tanh %47 : vector<1x32xf32>
    %c0_39 = arith.constant 0 : index
    %c0_40 = arith.constant 0 : index
    %49 = vector.load %arg15[%c0_39, %c0_40] : memref<64x32xf32, #tpu.memory_space<vmem>>, vector<64x32xf32>
    %50 = vector.broadcast %48 : vector<1x32xf32> to vector<64x32xf32>
    %51 = arith.subf %49, %50 : vector<64x32xf32>
    %52 = math.absf %51 : vector<64x32xf32>
    %cst_41 = arith.constant dense<0.000000e+00> : vector<64xf32>
    %53 = vector.multi_reduction <add>, %52, %cst_41 [1] : vector<64x32xf32> to vector<64xf32>
    %54 = vector.shape_cast %53 : vector<64xf32> to vector<64x1xf32>
    %cst_42 = arith.constant dense<0x7F800000> : vector<1xf32>
    %55 = vector.multi_reduction <minimumf>, %54, %cst_42 [0] : vector<64x1xf32> to vector<1xf32>
    %56 = vector.shape_cast %55 : vector<1xf32> to vector<1x1xf32>
    %c0_43 = arith.constant 0 : index
    %c0_44 = arith.constant 0 : index
    %57 = vector.load %arg16[%c0_43, %c0_44] : memref<1x1xf32, #tpu.memory_space<vmem>>, vector<1x1xf32>
    tpu.vector_store %arg16[%c0_43, %c0_44], %56 {strides = array<i32>} : memref<1x1xf32, #tpu.memory_space<vmem>>, vector<1x1xf32>,
    return
  }
}

</mosaic_0001>

<llo_original>
// kernel: memstream_forward.1
$region0: #{memstream_forward.1}
  #allocation0 [shape = 'u32[]', space=smem, size = 0x4, offset = 0x4, fixed_abs, tag = 'smem constant byte address 0x4 - core index']
  #allocation1 [shape = 'u32[144,128]{1,0:T(1,128)}', space=vmem, size = 0x12000, scoped, tag = 'internal scratch']
  %s0 = inlined_call_operand.vmem [shape: f32[1,16], index: 0, kind: input, shape index: {}]
  %s1 = inlined_call_operand.vmem [shape: f32[1,16], index: 1, kind: input, shape index: {}]
  %s2 = inlined_call_operand.vmem [shape: f32[1,16], index: 2, kind: input, shape index: {}]
  %s3 = inlined_call_operand.vmem [shape: bf16[16,1024], index: 3, kind: input, shape index: {}]
  %s4 = inlined_call_operand.vmem [shape: f32[1,1024], index: 4, kind: input, shape index: {}]
  %s5 = inlined_call_operand.hbm [shape: bf16[1024,512], index: 5, kind: input, shape index: {}]
  %s6 = inlined_call_operand.vmem [shape: f32[1,512], index: 6, kind: input, shape index: {}]
  %s7 = inlined_call_operand.vmem [shape: bf16[512,16], index: 7, kind: input, shape index: {}]
  %s8 = inlined_call_operand.vmem [shape: f32[1,16], index: 8, kind: input, shape index: {}]
  %s9 = inlined_call_operand.vmem [shape: bf16[16,512], index: 9, kind: input, shape index: {}]
  %s10 = inlined_call_operand.vmem [shape: f32[1,512], index: 10, kind: input, shape index: {}]
  %s11 = inlined_call_operand.hbm [shape: bf16[512,1024], index: 11, kind: input, shape index: {}]
  %s12 = inlined_call_operand.vmem [shape: f32[1,1024], index: 12, kind: input, shape index: {}]
  %s13 = inlined_call_operand.vmem [shape: bf16[1024,32], index: 13, kind: input, shape index: {}]
  %s14 = inlined_call_operand.vmem [shape: f32[1,32], index: 14, kind: input, shape index: {}]
  %s15 = inlined_call_operand.vmem [shape: f32[64,32], index: 15, kind: input, shape index: {}]
  %s16 = inlined_call_operand.hbm [shape: f32[1,1], index: 16, kind: output, shape index: {}]
  %s17 = sld [smem:[#allocation0]]
  $region82: #{memstream_forward.1} parent=0
    _
  %s19 = ssub.s32 1, %s17
  %s20 = scalar_select 0, %s19, %s17
  $region1: #{memstream_forward.1} parent=0
    #allocation2 [shape = 'u8[1048576]{0}', space=vmem, size = 0x100000, scoped, tag = 'input window, operand 5, single buffered']
    #allocation3 [shape = 's32[1]{0}', space=sflag, size = 0x4, scoped, tag = 'scoped memory for memstream_forward.1']
    #allocation4 [shape = 's32[1]{0}', space=sflag, size = 0x4, scoped, tag = 'scoped memory for memstream_forward.1']
    #allocation5 [shape = 'u8[1048576]{0}', space=vmem, size = 0x100000, scoped, tag = 'input window, operand 11, single buffered']
    #allocation6 [shape = 's32[1]{0}', space=sflag, size = 0x4, scoped, tag = 'scoped memory for memstream_forward.1']
    #allocation7 [shape = 'u8[512]{0}', space=vmem, size = 0x400, scoped, tag = 'output window, operand 0, single buffered']
    %21 = vsyncpa [#allocation3], 0
    %22 = vsyncpa [#allocation6], 0
    %23 = vsyncpa [#allocation4], 0
    // Predicated region
    $region2: #{memstream_forward.1} parent=1 // pred_check
      _
    $region3: #{memstream_forward.1} parent=1 // pred_check_branch
      %25 = sbr.rel (0) target = $region5
    $region4: #{memstream_forward.1} parent=1 // pred_region
      _
    $region5: #{memstream_forward.1} parent=1 // pred_fallthru
      _
    // Predicated region
    $region6: #{memstream_forward.1} parent=1 // pred_check
      _
    $region7: #{memstream_forward.1} parent=1 // pred_check_branch
      %27 = sbr.rel (0) target = $region9
    $region8: #{memstream_forward.1} parent=1 // pred_region
      _
    $region9: #{memstream_forward.1} parent=1 // pred_fallthru
      _
    // Predicated region
    $region10: #{memstream_forward.1} parent=1 // pred_check
      _
    $region11: #{memstream_forward.1} parent=1 // pred_check_branch
      %29 = sbr.rel (0) target = $region13
    $region12: #{memstream_forward.1} parent=1 // pred_region
      _
    $region13: #{memstream_forward.1} parent=1 // pred_fallthru
      _
    // Predicated region
    $region14: #{memstream_forward.1} parent=1 // pred_check
      _
    $region15: #{memstream_forward.1} parent=1 // pred_check_branch
      %31 = sbr.rel (0) target = $region17
    $region16: #{memstream_forward.1} parent=1 // pred_region
      _
    $region17: #{memstream_forward.1} parent=1 // pred_fallthru
      _
    // Predicated region
    $region18: #{memstream_forward.1} parent=1 // pred_check
      _
    $region19: #{memstream_forward.1} parent=1 // pred_check_branch
      %33 = sbr.rel (0) target = $region21
    $region20: #{memstream_forward.1} parent=1 // pred_region
      _
    $region21: #{memstream_forward.1} parent=1 // pred_fallthru
      _
    // Predicated region
    $region22: #{memstream_forward.1} parent=1 // pred_check
      _
    $region23: #{memstream_forward.1} parent=1 // pred_check_branch
      %35 = sbr.rel (0) target = $region25
    $region24: #{memstream_forward.1} parent=1 // pred_region
      %s37 = ssub.s32 32768, 32768
      %38 = vsyncadd [#allocation3], %s37
      %s39 = sshll.u32 [#allocation2], 4
      %s40 = int_to_ptr.vmem [resolvable:$true] %s39
      %45 = dma.hbm_to_vmem [thread:$0]  %s5, 32768, %s40, [#allocation3], 256, 256, 16
    $region25: #{memstream_forward.1} parent=1 // pred_fallthru
      _
    // Predicated region
    $region26: #{memstream_forward.1} parent=1 // pred_check
      _
    $region27: #{memstream_forward.1} parent=1 // pred_check_branch
      %47 = sbr.rel (0) target = $region29
    $region28: #{memstream_forward.1} parent=1 // pred_region
      _
    $region29: #{memstream_forward.1} parent=1 // pred_fallthru
      _
    // Predicated region
    $region30: #{memstream_forward.1} parent=1 // pred_check
      _
    $region31: #{memstream_forward.1} parent=1 // pred_check_branch
      %49 = sbr.rel (0) target = $region33
    $region32: #{memstream_forward.1} parent=1 // pred_region
      _
    $region33: #{memstream_forward.1} parent=1 // pred_fallthru
      _
    // Predicated region
    $region34: #{memstream_forward.1} parent=1 // pred_check
      _
    $region35: #{memstream_forward.1} parent=1 // pred_check_branch
      %51 = sbr.rel (0) target = $region37
    $region36: #{memstream_forward.1} parent=1 // pred_region
      _
    $region37: #{memstream_forward.1} parent=1 // pred_fallthru
      _
    // Predicated region
    $region38: #{memstream_forward.1} parent=1 // pred_check
      _
    $region39: #{memstream_forward.1} parent=1 // pred_check_branch
      %53 = sbr.rel (0) target = $region41
    $region40: #{memstream_forward.1} parent=1 // pred_region
      _
    $region41: #{memstream_forward.1} parent=1 // pred_fallthru
      _
    // Predicated region
    $region42: #{memstream_forward.1} parent=1 // pred_check
      _
    $region43: #{memstream_forward.1} parent=1 // pred_check_branch
      %55 = sbr.rel (0) target = $region45
    $region44: #{memstream_forward.1} parent=1 // pred_region
      _
    $region45: #{memstream_forward.1} parent=1 // pred_fallthru
      _
    // Predicated region
    $region46: #{memstream_forward.1} parent=1 // pred_check
      _
    $region47: #{memstream_forward.1} parent=1 // pred_check_branch
      %57 = sbr.rel (0) target = $region49
    $region48: #{memstream_forward.1} parent=1 // pred_region
      %s59 = ssub.s32 32768, 32768
      %60 = vsyncadd [#allocation6], %s59
      %s61 = sshll.u32 [#allocation5], 4
      %s62 = int_to_ptr.vmem [resolvable:$true] %s61
      %67 = dma.hbm_to_vmem [thread:$0]  %s11, 32768, %s62, [#allocation6], 512, 512, 32
    $region49: #{memstream_forward.1} parent=1 // pred_fallthru
      _
    // Predicated region
    $region50: #{memstream_forward.1} parent=1 // pred_check
      _
    $region51: #{memstream_forward.1} parent=1 // pred_check_branch
      %69 = sbr.rel (0) target = $region53
    $region52: #{memstream_forward.1} parent=1 // pred_region
      _
    $region53: #{memstream_forward.1} parent=1 // pred_fallthru
      _
    // Predicated region
    $region54: #{memstream_forward.1} parent=1 // pred_check
      _
    $region55: #{memstream_forward.1} parent=1 // pred_check_branch
      %71 = sbr.rel (0) target = $region57
    $region56: #{memstream_forward.1} parent=1 // pred_region
      _
    $region57: #{memstream_forward.1} parent=1 // pred_fallthru
      _
    // Predicated region
    $region58: #{memstream_forward.1} parent=1 // pred_check
      _
    $region59: #{memstream_forward.1} parent=1 // pred_check_branch
      %73 = sbr.rel (0) target = $region61
    $region60: #{memstream_forward.1} parent=1 // pred_region
      _
    $region61: #{memstream_forward.1} parent=1 // pred_fallthru
      _
    // Predicated region
    $region62: #{memstream_forward.1} parent=1 // pred_check
      _
    $region63: #{memstream_forward.1} parent=1 // pred_check_branch
      %75 = sbr.rel (0) target = $region65
    $region64: #{memstream_forward.1} parent=1 // pred_region
      _
    $region65: #{memstream_forward.1} parent=1 // pred_fallthru
      _
    // Predicated region
    $region66: #{memstream_forward.1} parent=1 // pred_check
      _
    $region67: #{memstream_forward.1} parent=1 // pred_check_branch
      %77 = sbr.rel (0) target = $region69
    $region68: #{memstream_forward.1} parent=1 // pred_region
      %78 = dma.done [#allocation3], 32768
    $region69: #{memstream_forward.1} parent=1 // pred_fallthru
      _
    // Predicated region
    $region70: #{memstream_forward.1} parent=1 // pred_check
      _
    $region71: #{memstream_forward.1} parent=1 // pred_check_branch
      %80 = sbr.rel (0) target = $region73
    $region72: #{memstream_forward.1} parent=1 // pred_region
      %81 = dma.done [#allocation6], 32768
    $region73: #{memstream_forward.1} parent=1 // pred_fallthru
      _
    %v83 = vld [vmem:[%s0] sm:$0x1]
    %v84 = vld [vmem:[%s1] sm:$0x1]
    %v85 = vsub.f32 %v83, %v84
    %v86 = vld [vmem:[%s2] sm:$0x1]
    %v87 = vmul.f32 %v85, %v86
    %v88 = vpack.c.bf16 %v87, %v87
    %v89 = vld [vmem:[%s3] sm:$0xff]
    %v90 = vld [vmem:[%s3 + $0x8] sm:$0xff]
    %v91 = vld [vmem:[%s3 + $0x10] sm:$0xff]
    %v92 = vld [vmem:[%s3 + $0x18] sm:$0xff]
    %v93 = vld [vmem:[%s3 + $0x20] sm:$0xff]
    %v94 = vld [vmem:[%s3 + $0x28] sm:$0xff]
    %v95 = vld [vmem:[%s3 + $0x30] sm:$0xff]
    %v96 = vld [vmem:[%s3 + $0x38] sm:$0xff]
    %v97 = vld [vmem:[%s4] sm:$0xff]
    %v106 = vunpack.c.l.b16 %v89
    %v107 = vunpack.c.h.b16 %v89
    %v108 = vunpack.c.l.b16 %v90
    %v109 = vunpack.c.h.b16 %v90
    %v110 = vunpack.c.l.b16 %v91
    %v111 = vunpack.c.h.b16 %v91
    %v112 = vunpack.c.l.b16 %v92
    %v113 = vunpack.c.h.b16 %v92
    %v114 = vunpack.c.l.b16 %v93
    %v115 = vunpack.c.h.b16 %v93
    %v116 = vunpack.c.l.b16 %v94
    %v117 = vunpack.c.h.b16 %v94
    %v118 = vunpack.c.l.b16 %v95
    %v119 = vunpack.c.h.b16 %v95
    %v120 = vunpack.c.l.b16 %v96
    %v121 = vunpack.c.h.b16 %v96
    %v122 = vpack.c.b16 %v114, %v106
    %v123 = vpack.c.b16 %v115, %v107
    %v124 = vpack.c.b16 %v116, %v108
    %v125 = vpack.c.b16 %v117, %v109
    %v126 = vpack.c.b16 %v118, %v110
    %v127 = vpack.c.b16 %v119, %v111
    %v128 = vpack.c.b16 %v120, %v112
    %v129 = vpack.c.b16 %v121, %v113
    %v139 = vlaneseq
    %v140 = vshrl.u32 %v139, 7
    %v141 = vsub.s32 0, %v140
    %v142 = vrot.slane %v97, %v141
    %v143 = vlaneseq
    %v144 = vshrl.u32 %v143, 7
    %v145 = vsub.s32 1, %v144
    %v146 = vrot.slane %v97, %v145
    %v147 = vlaneseq
    %v148 = vshrl.u32 %v147, 7
    %v149 = vsub.s32 2, %v148
    %v150 = vrot.slane %v97, %v149
    %v151 = vlaneseq
    %v152 = vshrl.u32 %v151, 7
    %v153 = vsub.s32 3, %v152
    %v154 = vrot.slane %v97, %v153
    %v155 = vlaneseq
    %v156 = vshrl.u32 %v155, 7
    %v157 = vsub.s32 4, %v156
    %v158 = vrot.slane %v97, %v157
    %v159 = vlaneseq
    %v160 = vshrl.u32 %v159, 7
    %v161 = vsub.s32 5, %v160
    %v162 = vrot.slane %v97, %v161
    %v163 = vlaneseq
    %v164 = vshrl.u32 %v163, 7
    %v165 = vsub.s32 6, %v164
    %v166 = vrot.slane %v97, %v165
    %v167 = vlaneseq
    %v168 = vshrl.u32 %v167, 7
    %v169 = vsub.s32 7, %v168
    %v170 = vrot.slane %v97, %v169
    %vm179 = vcmask 130048
    %v181 = vsel %vm179, %v88, 0
    %183 = vmatprep.subr.bf16.mxu0 %v123
    %184 = vmatpush1.bf16.msra.mxu0 %v122
    %185 = vmatprep.subr.bf16.mxu0 0
    %186 = vmatpush1.bf16.msra.mxu0 0
    %187 = vmatprep.subr.bf16.mxu0 0
    %188 = vmatpush1.bf16.msra.mxu0 0
    %189 = vmatprep.subr.bf16.mxu0 0
    %190 = vmatpush1.bf16.msra.mxu0 0
    %191 = vmatprep.subr.bf16.mxu0 0
    %192 = vmatpush1.bf16.msra.mxu0 0
    %193 = vmatprep.subr.bf16.mxu0 0
    %194 = vmatpush1.bf16.msra.mxu0 0
    %195 = vmatprep.subr.bf16.mxu0 0
    %196 = vmatpush1.bf16.msra.mxu0 0
    %197 = vmatprep.subr.bf16.mxu0 0
    %198 = vmatpush1.bf16.msra.mxu0 0
    %199 = vmatprep.subr.bf16.mxu0 0
    %200 = vmatpush1.bf16.msra.mxu0 0
    %201 = vmatprep.subr.bf16.mxu0 0
    %202 = vmatpush1.bf16.msra.mxu0 0
    %203 = vmatprep.subr.bf16.mxu0 0
    %204 = vmatpush1.bf16.msra.mxu0 0
    %205 = vmatprep.subr.bf16.mxu0 0
    %206 = vmatpush1.bf16.msra.mxu0 0
    %207 = vmatprep.subr.bf16.mxu0 0
    %208 = vmatpush1.bf16.msra.mxu0 0
    %209 = vmatprep.subr.bf16.mxu0 0
    %210 = vmatpush1.bf16.msra.mxu0 0
    %211 = vmatprep.subr.bf16.mxu0 0
    %212 = vmatpush1.bf16.msra.mxu0 0
    %213 = vmatprep.subr.bf16.mxu0 0
    %214 = vmatpush1.bf16.msra.mxu0 0
    %215 = vmatprep.mubr.bf16.mxu0 0
    %216 = vmatmul.mubr.bf16.gmra.mrb[0].mxu0 %v181
    %v217 = vpop.f32.mrb[0].mxu0
    %v218 = vadd.f32 %v142, %v217
    %v219 = vpop.f32.mrb[0].mxu0
    %v220 = vadd.f32 %v146, %v219
    %v221 = vpop.f32.mrb[0].mxu0
    %v222 = vpop.f32.mrb[0].mxu0
    %223 = vdwg.mxu0
    %224 = vmatprep.subr.bf16.mxu0 %v125
    %225 = vmatpush1.bf16.msra.mxu0 %v124
    %226 = vmatprep.subr.bf16.mxu0 0
    %227 = vmatpush1.bf16.msra.mxu0 0
    %228 = vmatprep.subr.bf16.mxu0 0
    %229 = vmatpush1.bf16.msra.mxu0 0
    %230 = vmatprep.subr.bf16.mxu0 0
    %231 = vmatpush1.bf16.msra.mxu0 0
    %232 = vmatprep.subr.bf16.mxu0 0
    %233 = vmatpush1.bf16.msra.mxu0 0
    %234 = vmatprep.subr.bf16.mxu0 0
    %235 = vmatpush1.bf16.msra.mxu0 0
    %236 = vmatprep.subr.bf16.mxu0 0
    %237 = vmatpush1.bf16.msra.mxu0 0
    %238 = vmatprep.subr.bf16.mxu0 0
    %239 = vmatpush1.bf16.msra.mxu0 0
    %240 = vmatprep.subr.bf16.mxu0 0
    %241 = vmatpush1.bf16.msra.mxu0 0
    %242 = vmatprep.subr.bf16.mxu0 0
    %243 = vmatpush1.bf16.msra.mxu0 0
    %244 = vmatprep.subr.bf16.mxu0 0
    %245 = vmatpush1.bf16.msra.mxu0 0
    %246 = vmatprep.subr.bf16.mxu0 0
    %247 = vmatpush1.bf16.msra.mxu0 0
    %248 = vmatprep.subr.bf16.mxu0 0
    %249 = vmatpush1.bf16.msra.mxu0 0
    %250 = vmatprep.subr.bf16.mxu0 0
    %251 = vmatpush1.bf16.msra.mxu0 0
    %252 = vmatprep.subr.bf16.mxu0 0
    %253 = vmatpush1.bf16.msra.mxu0 0
    %254 = vmatprep.subr.bf16.mxu0 0
    %255 = vmatpush1.bf16.msra.mxu0 0
    %256 = vmatprep.mubr.bf16.mxu0 0
    %257 = vmatmul.mubr.bf16.gmra.mrb[0].mxu0 %v181
    %v258 = vpop.f32.mrb[0].mxu0
    %v259 = vadd.f32 %v150, %v258
    %v260 = vpop.f32.mrb[0].mxu0
    %v261 = vadd.f32 %v154, %v260
    %v262 = vpop.f32.mrb[0].mxu0
    %v263 = vpop.f32.mrb[0].mxu0
    %264 = vdwg.mxu0
    %265 = vmatprep.subr.bf16.mxu0 %v127
    %266 = vmatpush1.bf16.msra.mxu0 %v126
    %267 = vmatprep.subr.bf16.mxu0 0
    %268 = vmatpush1.bf16.msra.mxu0 0
    %269 = vmatprep.subr.bf16.mxu0 0
    %270 = vmatpush1.bf16.msra.mxu0 0
    %271 = vmatprep.subr.bf16.mxu0 0
    %272 = vmatpush1.bf16.msra.mxu0 0
    %273 = vmatprep.subr.bf16.mxu0 0
    %274 = vmatpush1.bf16.msra.mxu0 0
    %275 = vmatprep.subr.bf16.mxu0 0
    %276 = vmatpush1.bf16.msra.mxu0 0
    %277 = vmatprep.subr.bf16.mxu0 0
    %278 = vmatpush1.bf16.msra.mxu0 0
    %279 = vmatprep.subr.bf16.mxu0 0
    %280 = vmatpush1.bf16.msra.mxu0 0
    %281 = vmatprep.subr.bf16.mxu0 0
    %282 = vmatpush1.bf16.msra.mxu0 0
    %283 = vmatprep.subr.bf16.mxu0 0
    %284 = vmatpush1.bf16.msra.mxu0 0
    %285 = vmatprep.subr.bf16.mxu0 0
    %286 = vmatpush1.bf16.msra.mxu0 0
    %287 = vmatprep.subr.bf16.mxu0 0
    %288 = vmatpush1.bf16.msra.mxu0 0
    %289 = vmatprep.subr.bf16.mxu0 0
    %290 = vmatpush1.bf16.msra.mxu0 0
    %291 = vmatprep.subr.bf16.mxu0 0
    %292 = vmatpush1.bf16.msra.mxu0 0
    %293 = vmatprep.subr.bf16.mxu0 0
    %294 = vmatpush1.bf16.msra.mxu0 0
    %295 = vmatprep.subr.bf16.mxu0 0
    %296 = vmatpush1.bf16.msra.mxu0 0
    %297 = vmatprep.mubr.bf16.mxu0 0
    %298 = vmatmul.mubr.bf16.gmra.mrb[0].mxu0 %v181
    %v299 = vpop.f32.mrb[0].mxu0
    %v300 = vadd.f32 %v158, %v299
    %v301 = vpop.f32.mrb[0].mxu0
    %v302 = vadd.f32 %v162, %v301
    %v303 = vpop.f32.mrb[0].mxu0
    %v304 = vpop.f32.mrb[0].mxu0
    %305 = vdwg.mxu0
    %306 = vmatprep.subr.bf16.mxu0 %v129
    %307 = vmatpush1.bf16.msra.mxu0 %v128
    %308 = vmatprep.subr.bf16.mxu0 0
    %309 = vmatpush1.bf16.msra.mxu0 0
    %310 = vmatprep.subr.bf16.mxu0 0
    %311 = vmatpush1.bf16.msra.mxu0 0
    %312 = vmatprep.subr.bf16.mxu0 0
    %313 = vmatpush1.bf16.msra.mxu0 0
    %314 = vmatprep.subr.bf16.mxu0 0
    %315 = vmatpush1.bf16.msra.mxu0 0
    %316 = vmatprep.subr.bf16.mxu0 0
    %317 = vmatpush1.bf16.msra.mxu0 0
    %318 = vmatprep.subr.bf16.mxu0 0
    %319 = vmatpush1.bf16.msra.mxu0 0
    %320 = vmatprep.subr.bf16.mxu0 0
    %321 = vmatpush1.bf16.msra.mxu0 0
    %322 = vmatprep.subr.bf16.mxu0 0
    %323 = vmatpush1.bf16.msra.mxu0 0
    %324 = vmatprep.subr.bf16.mxu0 0
    %325 = vmatpush1.bf16.msra.mxu0 0
    %326 = vmatprep.subr.bf16.mxu0 0
    %327 = vmatpush1.bf16.msra.mxu0 0
    %328 = vmatprep.subr.bf16.mxu0 0
    %329 = vmatpush1.bf16.msra.mxu0 0
    %330 = vmatprep.subr.bf16.mxu0 0
    %331 = vmatpush1.bf16.msra.mxu0 0
    %332 = vmatprep.subr.bf16.mxu0 0
    %333 = vmatpush1.bf16.msra.mxu0 0
    %334 = vmatprep.subr.bf16.mxu0 0
    %335 = vmatpush1.bf16.msra.mxu0 0
    %336 = vmatprep.subr.bf16.mxu0 0
    %337 = vmatpush1.bf16.msra.mxu0 0
    %338 = vmatprep.mubr.bf16.mxu0 0
    %339 = vmatmul.mubr.bf16.gmra.mrb[0].mxu0 %v181
    %v340 = vpop.f32.mrb[0].mxu0
    %v341 = vadd.f32 %v166, %v340
    %v342 = vpop.f32.mrb[0].mxu0
    %v343 = vadd.f32 %v170, %v342
    %v344 = vpop.f32.mrb[0].mxu0
    %v345 = vpop.f32.mrb[0].mxu0
    %346 = vdwg.mxu0
    %v347 = vmax.f32 %v218, 0.0
    %v348 = vmax.f32 %v220, 0.0
    %v349 = vmax.f32 %v259, 0.0
    %v350 = vmax.f32 %v261, 0.0
    %v351 = vmax.f32 %v300, 0.0
    %v352 = vmax.f32 %v302, 0.0
    %v353 = vmax.f32 %v341, 0.0
    %v354 = vmax.f32 %v343, 0.0
    %v355 = vpack.c.bf16 %v347, %v347
    %v356 = vpack.c.bf16 %v348, %v348
    %v357 = vpack.c.bf16 %v349, %v349
    %v358 = vpack.c.bf16 %v350, %v350
    %v359 = vpack.c.bf16 %v351, %v351
    %v360 = vpack.c.bf16 %v352, %v352
    %v361 = vpack.c.bf16 %v353, %v353
    %v362 = vpack.c.bf16 %v354, %v354
    %v363 = vld [vmem:[#allocation2] sm:$0xff]
    %v364 = vld [vmem:[#allocation2 + $0x8] sm:$0xff]
    %v365 = vld [vmem:[#allocation2 + $0x10] sm:$0xff]
    %v366 = vld [vmem:[#allocation2 + $0x18] sm:$0xff]
    %v367 = vld [vmem:[#allocation2 + $0x20] sm:$0xff]
    %v368 = vld [vmem:[#allocation2 + $0x28] sm:$0xff]
    %v369 = vld [vmem:[#allocation2 + $0x30] sm:$0xff]
    %v370 = vld [vmem:[#allocation2 + $0x38] sm:$0xff]
    %v371 = vld [vmem:[#allocation2 + $0x40] sm:$0xff]
    %v372 = vld [vmem:[#allocation2 + $0x48] sm:$0xff]
    %v373 = vld [vmem:[#allocation2 + $0x50] sm:$0xff]
    %v374 = vld [vmem:[#allocation2 + $0x58] sm:$0xff]
    %v375 = vld [vmem:[#allocation2 + $0x60] sm:$0xff]
    %v376 = vld [vmem:[#allocation2 + $0x68] sm:$0xff]
    %v377 = vld [vmem:[#allocation2 + $0x70] sm:$0xff]
    %v378 = vld [vmem:[#allocation2 + $0x78] sm:$0xff]
    %v379 = vld [vmem:[#allocation2 + $0x80] sm:$0xff]
    %v380 = vld [vmem:[#allocation2 + $0x88] sm:$0xff]
    %v381 = vld [vmem:[#allocation2 + $0x90] sm:$0xff]
    %v382 = vld [vmem:[#allocation2 + $0x98] sm:$0xff]
    %v383 = vld [vmem:[#allocation2 + $0xa0] sm:$0xff]
    %v384 = vld [vmem:[#allocation2 + $0xa8] sm:$0xff]
    %v385 = vld [vmem:[#allocation2 + $0xb0] sm:$0xff]
    %v386 = vld [vmem:[#allocation2 + $0xb8] sm:$0xff]
    %v387 = vld [vmem:[#allocation2 + $0xc0] sm:$0xff]
    %v388 = vld [vmem:[#allocation2 + $0xc8] sm:$0xff]
    %v389 = vld [vmem:[#allocation2 + $0xd0] sm:$0xff]
    %v390 = vld [vmem:[#allocation2 + $0xd8] sm:$0xff]
    %v391 = vld [vmem:[#allocation2 + $0xe0] sm:$0xff]
    %v392 = vld [vmem:[#allocation2 + $0xe8] sm:$0xff]
    %v393 = vld [vmem:[#allocation2 + $0xf0] sm:$0xff]
    %v394 = vld [vmem:[#allocation2 + $0xf8] sm:$0xff]
    %v395 = vld [vmem:[#allocation2 + $0x100] sm:$0xff]
    %v396 = vld [vmem:[#allocation2 + $0x108] sm:$0xff]
    %v397 = vld [vmem:[#allocation2 + $0x110] sm:$0xff]
    %v398 = vld [vmem:[#allocation2 + $0x118] sm:$0xff]
    %v399 = vld [vmem:[#allocation2 + $0x120] sm:$0xff]
    %v400 = vld [vmem:[#allocation2 + $0x128] sm:$0xff]
    %v401 = vld [vmem:[#allocation2 + $0x130] sm:$0xff]
    %v402 = vld [vmem:[#allocation2 + $0x138] sm:$0xff]
    %v403 = vld [vmem:[#allocation2 + $0x140] sm:$0xff]
    %v404 = vld [vmem:[#allocation2 + $0x148] sm:$0xff]
    %v405 = vld [vmem:[#allocation2 + $0x150] sm:$0xff]
    %v406 = vld [vmem:[#allocation2 + $0x158] sm:$0xff]
    %v407 = vld [vmem:[#allocation2 + $0x160] sm:$0xff]
    %v408 = vld [vmem:[#allocation2 + $0x168] sm:$0xff]
    %v409 = vld [vmem:[#allocation2 + $0x170] sm:$0xff]
    %v410 = vld [vmem:[#allocation2 + $0x178] sm:$0xff]
    %v411 = vld [vmem:[#allocation2 + $0x180] sm:$0xff]
    %v412 = vld [vmem:[#allocation2 + $0x188] sm:$0xff]
    %v413 = vld [vmem:[#allocation2 + $0x190] sm:$0xff]
    %v414 = vld [vmem:[#allocation2 + $0x198] sm:$0xff]
    %v415 = vld [vmem:[#allocation2 + $0x1a0] sm:$0xff]
    %v416 = vld [vmem:[#allocation2 + $0x1a8] sm:$0xff]
    %v417 = vld [vmem:[#allocation2 + $0x1b0] sm:$0xff]
    %v418 = vld [vmem:[#allocation2 + $0x1b8] sm:$0xff]
    %v419 = vld [vmem:[#allocation2 + $0x1c0] sm:$0xff]
    %v420 = vld [vmem:[#allocation2 + $0x1c8] sm:$0xff]
    %v421 = vld [vmem:[#allocation2 + $0x1d0] sm:$0xff]
    %v422 = vld [vmem:[#allocation2 + $0x1d8] sm:$0xff]
    %v423 = vld [vmem:[#allocation2 + $0x1e0] sm:$0xff]
    %v424 = vld [vmem:[#allocation2 + $0x1e8] sm:$0xff]
    %v425 = vld [vmem:[#allocation2 + $0x1f0] sm:$0xff]
    %v426 = vld [vmem:[#allocation2 + $0x1f8] sm:$0xff]
    %v427 = vld [vmem:[#allocation2 + $0x200] sm:$0xff]
    %v428 = vld [vmem:[#allocation2 + $0x208] sm:$0xff]
    %v429 = vld [vmem:[#allocation2 + $0x210] sm:$0xff]
    %v430 = vld [vmem:[#allocation2 + $0x218] sm:$0xff]
    %v431 = vld [vmem:[#allocation2 + $0x220] sm:$0xff]
    %v432 = vld [vmem:[#allocation2 + $0x228] sm:$0xff]
    %v433 = vld [vmem:[#allocation2 + $0x230] sm:$0xff]
    %v434 = vld [vmem:[#allocation2 + $0x238] sm:$0xff]
    %v435 = vld [vmem:[#allocation2 + $0x240] sm:$0xff]
    %v436 = vld [vmem:[#allocation2 + $0x248] sm:$0xff]
    %v437 = vld [vmem:[#allocation2 + $0x250] sm:$0xff]
    %v438 = vld [vmem:[#allocation2 + $0x258] sm:$0xff]
    %v439 = vld [vmem:[#allocation2 + $0x260] sm:$0xff]
    %v440 = vld [vmem:[#allocation2 + $0x268] sm:$0xff]
    %v441 = vld [vmem:[#allocation2 + $0x270] sm:$0xff]
    %v442 = vld [vmem:[#allocation2 + $0x278] sm:$0xff]
    %v443 = vld [vmem:[#allocation2 + $0x280] sm:$0xff]
    %v444 = vld [vmem:[#allocation2 + $0x288] sm:$0xff]
    %v445 = vld [vmem:[#allocation2 + $0x290] sm:$0xff]
    %v446 = vld [vmem:[#allocation2 + $0x298] sm:$0xff]
    %v447 = vld [vmem:[#allocation2 + $0x2a0] sm:$0xff]
    %v448 = vld [vmem:[#allocation2 + $0x2a8] sm:$0xff]
    %v449 = vld [vmem:[#allocation2 + $0x2b0] sm:$0xff]
    %v450 = vld [vmem:[#allocation2 + $0x2b8] sm:$0xff]
    %v451 = vld [vmem:[#allocation2 + $0x2c0] sm:$0xff]
    %v452 = vld [vmem:[#allocation2 + $0x2c8] sm:$0xff]
    %v453 = vld [vmem:[#allocation2 + $0x2d0] sm:$0xff]
    %v454 = vld [vmem:[#allocation2 + $0x2d8] sm:$0xff]
    %v455 = vld [vmem:[#allocation2 + $0x2e0] sm:$0xff]
    %v456 = vld [vmem:[#allocation2 + $0x2e8] sm:$0xff]
    %v457 = vld [vmem:[#allocation2 + $0x2f0] sm:$0xff]
    %v458 = vld [vmem:[#allocation2 + $0x2f8] sm:$0xff]
    %v459 = vld [vmem:[#allocation2 + $0x300] sm:$0xff]
    %v460 = vld [vmem:[#allocation2 + $0x308] sm:$0xff]
    %v461 = vld [vmem:[#allocation2 + $0x310] sm:$0xff]
    %v462 = vld [vmem:[#allocation2 + $0x318] sm:$0xff]
    %v463 = vld [vmem:[#allocation2 + $0x320] sm:$0xff]
    %v464 = vld [vmem:[#allocation2 + $0x328] sm:$0xff]
    %v465 = vld [vmem:[#allocation2 + $0x330] sm:$0xff]
    %v466 = vld [vmem:[#allocation2 + $0x338] sm:$0xff]
    %v467 = vld [vmem:[#allocation2 + $0x340] sm:$0xff]
    %v468 = vld [vmem:[#allocation2 + $0x348] sm:$0xff]
    %v469 = vld [vmem:[#allocation2 + $0x350] sm:$0xff]
    %v470 = vld [vmem:[#allocation2 + $0x358] sm:$0xff]
    %v471 = vld [vmem:[#allocation2 + $0x360] sm:$0xff]
    %v472 = vld [vmem:[#allocation2 + $0x368] sm:$0xff]
    %v473 = vld [vmem:[#allocation2 + $0x370] sm:$0xff]
    %v474 = vld [vmem:[#allocation2 + $0x378] sm:$0xff]
    %v475 = vld [vmem:[#allocation2 + $0x380] sm:$0xff]
    %v476 = vld [vmem:[#allocation2 + $0x388] sm:$0xff]
    %v477 = vld [vmem:[#allocation2 + $0x390] sm:$0xff]
    %v478 = vld [vmem:[#allocation2 + $0x398] sm:$0xff]
    %v479 = vld [vmem:[#allocation2 + $0x3a0] sm:$0xff]
    %v480 = vld [vmem:[#allocation2 + $0x3a8] sm:$0xff]
    %v481 = vld [vmem:[#allocation2 + $0x3b0] sm:$0xff]
    %v482 = vld [vmem:[#allocation2 + $0x3b8] sm:$0xff]
    %v483 = vld [vmem:[#allocation2 + $0x3c0] sm:$0xff]
    %v484 = vld [vmem:[#allocation2 + $0x3c8] sm:$0xff]
    %v485 = vld [vmem:[#allocation2 + $0x3d0] sm:$0xff]
    %v486 = vld [vmem:[#allocation2 + $0x3d8] sm:$0xff]
    %v487 = vld [vmem:[#allocation2 + $0x3e0] sm:$0xff]
    %v488 = vld [vmem:[#allocation2 + $0x3e8] sm:$0xff]
    %v489 = vld [vmem:[#allocation2 + $0x3f0] sm:$0xff]
    %v490 = vld [vmem:[#allocation2 + $0x3f8] sm:$0xff]
    %v491 = vld [vmem:[#allocation2 + $0x400] sm:$0xff]
    %v492 = vld [vmem:[#allocation2 + $0x408] sm:$0xff]
    %v493 = vld [vmem:[#allocation2 + $0x410] sm:$0xff]
    %v494 = vld [vmem:[#allocation2 + $0x418] sm:$0xff]
    %v495 = vld [vmem:[#allocation2 + $0x420] sm:$0xff]
    %v496 = vld [vmem:[#allocation2 + $0x428] sm:$0xff]
    %v497 = vld [vmem:[#allocation2 + $0x430] sm:$0xff]
    %v498 = vld [vmem:[#allocation2 + $0x438] sm:$0xff]
    %v499 = vld [vmem:[#allocation2 + $0x440] sm:$0xff]
    %v500 = vld [vmem:[#allocation2 + $0x448] sm:$0xff]
    %v501 = vld [vmem:[#allocation2 + $0x450] sm:$0xff]
    %v502 = vld [vmem:[#allocation2 + $0x458] sm:$0xff]
    %v503 = vld [vmem:[#allocation2 + $0x460] sm:$0xff]
    %v504 = vld [vmem:[#allocation2 + $0x468] sm:$0xff]
    %v505 = vld [vmem:[#allocation2 + $0x470] sm:$0xff]
    %v506 = vld [vmem:[#allocation2 + $0x478] sm:$0xff]
    %v507 = vld [vmem:[#allocation2 + $0x480] sm:$0xff]
    %v508 = vld [vmem:[#allocation2 + $0x488] sm:$0xff]
    %v509 = vld [vmem:[#allocation2 + $0x490] sm:$0xff]
    %v510 = vld [vmem:[#allocation2 + $0x498] sm:$0xff]
    %v511 = vld [vmem:[#allocation2 + $0x4a0] sm:$0xff]
    %v512 = vld [vmem:[#allocation2 + $0x4a8] sm:$0xff]
    %v513 = vld [vmem:[#allocation2 + $0x4b0] sm:$0xff]
    %v514 = vld [vmem:[#allocation2 + $0x4b8] sm:$0xff]
    %v515 = vld [vmem:[#allocation2 + $0x4c0] sm:$0xff]
    %v516 = vld [vmem:[#allocation2 + $0x4c8] sm:$0xff]
    %v517 = vld [vmem:[#allocation2 + $0x4d0] sm:$0xff]
    %v518 = vld [vmem:[#allocation2 + $0x4d8] sm:$0xff]
    %v519 = vld [vmem:[#allocation2 + $0x4e0] sm:$0xff]
    %v520 = vld [vmem:[#allocation2 + $0x4e8] sm:$0xff]
    %v521 = vld [vmem:[#allocation2 + $0x4f0] sm:$0xff]
    %v522 = vld [vmem:[#allocation2 + $0x4f8] sm:$0xff]
    %v523 = vld [vmem:[#allocation2 + $0x500] sm:$0xff]
    %v524 = vld [vmem:[#allocation2 + $0x508] sm:$0xff]
    %v525 = vld [vmem:[#allocation2 + $0x510] sm:$0xff]
    %v526 = vld [vmem:[#allocation2 + $0x518] sm:$0xff]
    %v527 = vld [vmem:[#allocation2 + $0x520] sm:$0xff]
    %v528 = vld [vmem:[#allocation2 + $0x528] sm:$0xff]
    %v529 = vld [vmem:[#allocation2 + $0x530] sm:$0xff]
    %v530 = vld [vmem:[#allocation2 + $0x538] sm:$0xff]
    %v531 = vld [vmem:[#allocation2 + $0x540] sm:$0xff]
    %v532 = vld [vmem:[#allocation2 + $0x548] sm:$0xff]
    %v533 = vld [vmem:[#allocation2 + $0x550] sm:$0xff]
    %v534 = vld [vmem:[#allocation2 + $0x558] sm:$0xff]
    %v535 = vld [vmem:[#allocation2 + $0x560] sm:$0xff]
    %v536 = vld [vmem:[#allocation2 + $0x568] sm:$0xff]
    %v537 = vld [vmem:[#allocation2 + $0x570] sm:$0xff]
    %v538 = vld [vmem:[#allocation2 + $0x578] sm:$0xff]
    %v539 = vld [vmem:[#allocation2 + $0x580] sm:$0xff]
    %v540 = vld [vmem:[#allocation2 + $0x588] sm:$0xff]
    %v541 = vld [vmem:[#allocation2 + $0x590] sm:$0xff]
    %v542 = vld [vmem:[#allocation2 + $0x598] sm:$0xff]
    %v543 = vld [vmem:[#allocation2 + $0x5a0] sm:$0xff]
    %v544 = vld [vmem:[#allocation2 + $0x5a8] sm:$0xff]
    %v545 = vld [vmem:[#allocation2 + $0x5b0] sm:$0xff]
    %v546 = vld [vmem:[#allocation2 + $0x5b8] sm:$0xff]
    %v547 = vld [vmem:[#allocation2 + $0x5c0] sm:$0xff]
    %v548 = vld [vmem:[#allocation2 + $0x5c8] sm:$0xff]
    %v549 = vld [vmem:[#allocation2 + $0x5d0] sm:$0xff]
    %v550 = vld [vmem:[#allocation2 + $0x5d8] sm:$0xff]
    %v551 = vld [vmem:[#allocation2 + $0x5e0] sm:$0xff]
    %v552 = vld [vmem:[#allocation2 + $0x5e8] sm:$0xff]
    %v553 = vld [vmem:[#allocation2 + $0x5f0] sm:$0xff]
    %v554 = vld [vmem:[#allocation2 + $0x5f8] sm:$0xff]
    %v555 = vld [vmem:[#allocation2 + $0x600] sm:$0xff]
    %v556 = vld [vmem:[#allocation2 + $0x608] sm:$0xff]
    %v557 = vld [vmem:[#allocation2 + $0x610] sm:$0xff]
    %v558 = vld [vmem:[#allocation2 + $0x618] sm:$0xff]
    %v559 = vld [vmem:[#allocation2 + $0x620] sm:$0xff]
    %v560 = vld [vmem:[#allocation2 + $0x628] sm:$0xff]
    %v561 = vld [vmem:[#allocation2 + $0x630] sm:$0xff]
    %v562 = vld [vmem:[#allocation2 + $0x638] sm:$0xff]
    %v563 = vld [vmem:[#allocation2 + $0x640] sm:$0xff]
    %v564 = vld [vmem:[#allocation2 + $0x648] sm:$0xff]
    %v565 = vld [vmem:[#allocation2 + $0x650] sm:$0xff]
    %v566 = vld [vmem:[#allocation2 + $0x658] sm:$0xff]
    %v567 = vld [vmem:[#allocation2 + $0x660] sm:$0xff]
    %v568 = vld [vmem:[#allocation2 + $0x668] sm:$0xff]
    %v569 = vld [vmem:[#allocation2 + $0x670] sm:$0xff]
    %v570 = vld [vmem:[#allocation2 + $0x678] sm:$0xff]
    %v571 = vld [vmem:[#allocation2 + $0x680] sm:$0xff]
    %v572 = vld [vmem:[#allocation2 + $0x688] sm:$0xff]
    %v573 = vld [vmem:[#allocation2 + $0x690] sm:$0xff]
    %v574 = vld [vmem:[#allocation2 + $0x698] sm:$0xff]
    %v575 = vld [vmem:[#allocation2 + $0x6a0] sm:$0xff]
    %v576 = vld [vmem:[#allocation2 + $0x6a8] sm:$0xff]
    %v577 = vld [vmem:[#allocation2 + $0x6b0] sm:$0xff]
    %v578 = vld [vmem:[#allocation2 + $0x6b8] sm:$0xff]
    %v579 = vld [vmem:[#allocation2 + $0x6c0] sm:$0xff]
    %v580 = vld [vmem:[#allocation2 + $0x6c8] sm:$0xff]
    %v581 = vld [vmem:[#allocation2 + $0x6d0] sm:$0xff]
    %v582 = vld [vmem:[#allocation2 + $0x6d8] sm:$0xff]
    %v583 = vld [vmem:[#allocation2 + $0x6e0] sm:$0xff]
    %v584 = vld [vmem:[#allocation2 + $0x6e8] sm:$0xff]
    %v585 = vld [vmem:[#allocation2 + $0x6f0] sm:$0xff]
    %v586 = vld [vmem:[#allocation2 + $0x6f8] sm:$0xff]
    %v587 = vld [vmem:[#allocation2 + $0x700] sm:$0xff]
    %v588 = vld [vmem:[#allocation2 + $0x708] sm:$0xff]
    %v589 = vld [vmem:[#allocation2 + $0x710] sm:$0xff]
    %v590 = vld [vmem:[#allocation2 + $0x718] sm:$0xff]
    %v591 = vld [vmem:[#allocation2 + $0x720] sm:$0xff]
    %v592 = vld [vmem:[#allocation2 + $0x728] sm:$0xff]
    %v593 = vld [vmem:[#allocation2 + $0x730] sm:$0xff]
    %v594 = vld [vmem:[#allocation2 + $0x738] sm:$0xff]
    %v595 = vld [vmem:[#allocation2 + $0x740] sm:$0xff]
    %v596 = vld [vmem:[#allocation2 + $0x748] sm:$0xff]
    %v597 = vld [vmem:[#allocation2 + $0x750] sm:$0xff]
    %v598 = vld [vmem:[#allocation2 + $0x758] sm:$0xff]
    %v599 = vld [vmem:[#allocation2 + $0x760] sm:$0xff]
    %v600 = vld [vmem:[#allocation2 + $0x768] sm:$0xff]
    %v601 = vld [vmem:[#allocation2 + $0x770] sm:$0xff]
    %v602 = vld [vmem:[#allocation2 + $0x778] sm:$0xff]
    %v603 = vld [vmem:[#allocation2 + $0x780] sm:$0xff]
    %v604 = vld [vmem:[#allocation2 + $0x788] sm:$0xff]
    %v605 = vld [vmem:[#allocation2 + $0x790] sm:$0xff]
    %v606 = vld [vmem:[#allocation2 + $0x798] sm:$0xff]
    %v607 = vld [vmem:[#allocation2 + $0x7a0] sm:$0xff]
    %v608 = vld [vmem:[#allocation2 + $0x7a8] sm:$0xff]
    %v609 = vld [vmem:[#allocation2 + $0x7b0] sm:$0xff]
    %v610 = vld [vmem:[#allocation2 + $0x7b8] sm:$0xff]
    %v611 = vld [vmem:[#allocation2 + $0x7c0] sm:$0xff]
    %v612 = vld [vmem:[#allocation2 + $0x7c8] sm:$0xff]
    %v613 = vld [vmem:[#allocation2 + $0x7d0] sm:$0xff]
    %v614 = vld [vmem:[#allocation2 + $0x7d8] sm:$0xff]
    %v615 = vld [vmem:[#allocation2 + $0x7e0] sm:$0xff]
    %v616 = vld [vmem:[#allocation2 + $0x7e8] sm:$0xff]
    %v617 = vld [vmem:[#allocation2 + $0x7f0] sm:$0xff]
    %v618 = vld [vmem:[#allocation2 + $0x7f8] sm:$0xff]
    %v619 = vld [vmem:[%s6] sm:$0xf]
    %v876 = vunpack.c.l.b16 %v363
    %v877 = vunpack.c.h.b16 %v363
    %v878 = vunpack.c.l.b16 %v364
    %v879 = vunpack.c.h.b16 %v364
    %v880 = vunpack.c.l.b16 %v365
    %v881 = vunpack.c.h.b16 %v365
    %v882 = vunpack.c.l.b16 %v366
    %v883 = vunpack.c.h.b16 %v366
    %v884 = vunpack.c.l.b16 %v367
    %v885 = vunpack.c.h.b16 %v367
    %v886 = vunpack.c.l.b16 %v368
    %v887 = vunpack.c.h.b16 %v368
    %v888 = vunpack.c.l.b16 %v369
    %v889 = vunpack.c.h.b16 %v369
    %v890 = vunpack.c.l.b16 %v370
    %v891 = vunpack.c.h.b16 %v370
    %v892 = vunpack.c.l.b16 %v371
    %v893 = vunpack.c.h.b16 %v371
    %v894 = vunpack.c.l.b16 %v372
    %v895 = vunpack.c.h.b16 %v372
    %v896 = vunpack.c.l.b16 %v373
    %v897 = vunpack.c.h.b16 %v373
    %v898 = vunpack.c.l.b16 %v374
    %v899 = vunpack.c.h.b16 %v374
    %v900 = vunpack.c.l.b16 %v375
    %v901 = vunpack.c.h.b16 %v375
    %v902 = vunpack.c.l.b16 %v376
    %v903 = vunpack.c.h.b16 %v376
    %v904 = vunpack.c.l.b16 %v377
    %v905 = vunpack.c.h.b16 %v377
    %v906 = vunpack.c.l.b16 %v378
    %v907 = vunpack.c.h.b16 %v378
    %v908 = vunpack.c.l.b16 %v379
    %v909 = vunpack.c.h.b16 %v379
    %v910 = vunpack.c.l.b16 %v380
    %v911 = vunpack.c.h.b16 %v380
    %v912 = vunpack.c.l.b16 %v381
    %v913 = vunpack.c.h.b16 %v381
    %v914 = vunpack.c.l.b16 %v382
    %v915 = vunpack.c.h.b16 %v382
    %v916 = vunpack.c.l.b16 %v383
    %v917 = vunpack.c.h.b16 %v383
    %v918 = vunpack.c.l.b16 %v384
    %v919 = vunpack.c.h.b16 %v384
    %v920 = vunpack.c.l.b16 %v385
    %v921 = vunpack.c.h.b16 %v385
    %v922 = vunpack.c.l.b16 %v386
    %v923 = vunpack.c.h.b16 %v386
    %v924 = vunpack.c.l.b16 %v387
    %v925 = vunpack.c.h.b16 %v387
    %v926 = vunpack.c.l.b16 %v388
    %v927 = vunpack.c.h.b16 %v388
    %v928 = vunpack.c.l.b16 %v389
    %v929 = vunpack.c.h.b16 %v389
    %v930 = vunpack.c.l.b16 %v390
    %v931 = vunpack.c.h.b16 %v390
    %v932 = vunpack.c.l.b16 %v391
    %v933 = vunpack.c.h.b16 %v391
    %v934 = vunpack.c.l.b16 %v392
    %v935 = vunpack.c.h.b16 %v392
    %v936 = vunpack.c.l.b16 %v393
    %v937 = vunpack.c.h.b16 %v393
    %v938 = vunpack.c.l.b16 %v394
    %v939 = vunpack.c.h.b16 %v394
    %v940 = vunpack.c.l.b16 %v395
    %v941 = vunpack.c.h.b16 %v395
    %v942 = vunpack.c.l.b16 %v396
    %v943 = vunpack.c.h.b16 %v396
    %v944 = vunpack.c.l.b16 %v397
    %v945 = vunpack.c.h.b16 %v397
    %v946 = vunpack.c.l.b16 %v398
    %v947 = vunpack.c.h.b16 %v398
    %v948 = vunpack.c.l.b16 %v399
    %v949 = vunpack.c.h.b16 %v399
    %v950 = vunpack.c.l.b16 %v400
    %v951 = vunpack.c.h.b16 %v400
    %v952 = vunpack.c.l.b16 %v401
    %v953 = vunpack.c.h.b16 %v401
    %v954 = vunpack.c.l.b16 %v402
    %v955 = vunpack.c.h.b16 %v402
    %v956 = vunpack.c.l.b16 %v403
    %v957 = vunpack.c.h.b16 %v403
    %v958 = vunpack.c.l.b16 %v404
    %v959 = vunpack.c.h.b16 %v404
    %v960 = vunpack.c.l.b16 %v405
    %v961 = vunpack.c.h.b16 %v405
    %v962 = vunpack.c.l.b16 %v406
    %v963 = vunpack.c.h.b16 %v406
    %v964 = vunpack.c.l.b16 %v407
    %v965 = vunpack.c.h.b16 %v407
    %v966 = vunpack.c.l.b16 %v408
    %v967 = vunpack.c.h.b16 %v408
    %v968 = vunpack.c.l.b16 %v409
    %v969 = vunpack.c.h.b16 %v409
    %v970 = vunpack.c.l.b16 %v410
    %v971 = vunpack.c.h.b16 %v410
    %v972 = vunpack.c.l.b16 %v411
    %v973 = vunpack.c.h.b16 %v411
    %v974 = vunpack.c.l.b16 %v412
    %v975 = vunpack.c.h.b16 %v412
    %v976 = vunpack.c.l.b16 %v413
    %v977 = vunpack.c.h.b16 %v413
    %v978 = vunpack.c.l.b16 %v414
    %v979 = vunpack.c.h.b16 %v414
    %v980 = vunpack.c.l.b16 %v415
    %v981 = vunpack.c.h.b16 %v415
    %v982 = vunpack.c.l.b16 %v416
    %v983 = vunpack.c.h.b16 %v416
    %v984 = vunpack.c.l.b16 %v417
    %v985 = vunpack.c.h.b16 %v417
    %v986 = vunpack.c.l.b16 %v418
    %v987 = vunpack.c.h.b16 %v418
    %v988 = vunpack.c.l.b16 %v419
    %v989 = vunpack.c.h.b16 %v419
    %v990 = vunpack.c.l.b16 %v420
    %v991 = vunpack.c.h.b16 %v420
    %v992 = vunpack.c.l.b16 %v421
    %v993 = vunpack.c.h.b16 %v421
    %v994 = vunpack.c.l.b16 %v422
    %v995 = vunpack.c.h.b16 %v422
    %v996 = vunpack.c.l.b16 %v423
    %v997 = vunpack.c.h.b16 %v423
    %v998 = vunpack.c.l.b16 %v424
    %v999 = vunpack.c.h.b16 %v424
    %v1000 = vunpack.c.l.b16 %v425
    %v1001 = vunpack.c.h.b16 %v425
    %v1002 = vunpack.c.l.b16 %v426
    %v1003 = vunpack.c.h.b16 %v426
    %v1004 = vunpack.c.l.b16 %v427
    %v1005 = vunpack.c.h.b16 %v427
    %v1006 = vunpack.c.l.b16 %v428
    %v1007 = vunpack.c.h.b16 %v428
    %v1008 = vunpack.c.l.b16 %v429
    %v1009 = vunpack.c.h.b16 %v429
    %v1010 = vunpack.c.l.b16 %v430
    %v1011 = vunpack.c.h.b16 %v430
    %v1012 = vunpack.c.l.b16 %v431
    %v1013 = vunpack.c.h.b16 %v431
    %v1014 = vunpack.c.l.b16 %v432
    %v1015 = vunpack.c.h.b16 %v432
    %v1016 = vunpack.c.l.b16 %v433
    %v1017 = vunpack.c.h.b16 %v433
    %v1018 = vunpack.c.l.b16 %v434
    %v1019 = vunpack.c.h.b16 %v434
    %v1020 = vunpack.c.l.b16 %v435
    %v1021 = vunpack.c.h.b16 %v435
    %v1022 = vunpack.c.l.b16 %v436
    %v1023 = vunpack.c.h.b16 %v436
    %v1024 = vunpack.c.l.b16 %v437
    %v1025 = vunpack.c.h.b16 %v437
    %v1026 = vunpack.c.l.b16 %v438
    %v1027 = vunpack.c.h.b16 %v438
    %v1028 = vunpack.c.l.b16 %v439
    %v1029 = vunpack.c.h.b16 %v439
    %v1030 = vunpack.c.l.b16 %v440
    %v1031 = vunpack.c.h.b16 %v440
    %v1032 = vunpack.c.l.b16 %v441
    %v1033 = vunpack.c.h.b16 %v441
    %v1034 = vunpack.c.l.b16 %v442
    %v1035 = vunpack.c.h.b16 %v442
    %v1036 = vunpack.c.l.b16 %v443
    %v1037 = vunpack.c.h.b16 %v443
    %v1038 = vunpack.c.l.b16 %v444
    %v1039 = vunpack.c.h.b16 %v444
    %v1040 = vunpack.c.l.b16 %v445
    %v1041 = vunpack.c.h.b16 %v445
    %v1042 = vunpack.c.l.b16 %v446
    %v1043 = vunpack.c.h.b16 %v446
    %v1044 = vunpack.c.l.b16 %v447
    %v1045 = vunpack.c.h.b16 %v447
    %v1046 = vunpack.c.l.b16 %v448
    %v1047 = vunpack.c.h.b16 %v448
    %v1048 = vunpack.c.l.b16 %v449
    %v1049 = vunpack.c.h.b16 %v449
    %v1050 = vunpack.c.l.b16 %v450
    %v1051 = vunpack.c.h.b16 %v450
    %v1052 = vunpack.c.l.b16 %v451
    %v1053 = vunpack.c.h.b16 %v451
    %v1054 = vunpack.c.l.b16 %v452
    %v1055 = vunpack.c.h.b16 %v452
    %v1056 = vunpack.c.l.b16 %v453
    %v1057 = vunpack.c.h.b16 %v453
    %v1058 = vunpack.c.l.b16 %v454
    %v1059 = vunpack.c.h.b16 %v454
    %v1060 = vunpack.c.l.b16 %v455
    %v1061 = vunpack.c.h.b16 %v455
    %v1062 = vunpack.c.l.b16 %v456
    %v1063 = vunpack.c.h.b16 %v456
    %v1064 = vunpack.c.l.b16 %v457
    %v1065 = vunpack.c.h.b16 %v457
    %v1066 = vunpack.c.l.b16 %v458
    %v1067 = vunpack.c.h.b16 %v458
    %v1068 = vunpack.c.l.b16 %v459
    %v1069 = vunpack.c.h.b16 %v459
    %v1070 = vunpack.c.l.b16 %v460
    %v1071 = vunpack.c.h.b16 %v460
    %v1072 = vunpack.c.l.b16 %v461
    %v1073 = vunpack.c.h.b16 %v461
    %v1074 = vunpack.c.l.b16 %v462
    %v1075 = vunpack.c.h.b16 %v462
    %v1076 = vunpack.c.l.b16 %v463
    %v1077 = vunpack.c.h.b16 %v463
    %v1078 = vunpack.c.l.b16 %v464
    %v1079 = vunpack.c.h.b16 %v464
    %v1080 = vunpack.c.l.b16 %v465
    %v1081 = vunpack.c.h.b16 %v465
    %v1082 = vunpack.c.l.b16 %v466
    %v1083 = vunpack.c.h.b16 %v466
    %v1084 = vunpack.c.l.b16 %v467
    %v1085 = vunpack.c.h.b16 %v467
    %v1086 = vunpack.c.l.b16 %v468
    %v1087 = vunpack.c.h.b16 %v468
    %v1088 = vunpack.c.l.b16 %v469
    %v1089 = vunpack.c.h.b16 %v469
    %v1090 = vunpack.c.l.b16 %v470
    %v1091 = vunpack.c.h.b16 %v470
    %v1092 = vunpack.c.l.b16 %v471
    %v1093 = vunpack.c.h.b16 %v471
    %v1094 = vunpack.c.l.b16 %v472
    %v1095 = vunpack.c.h.b16 %v472
    %v1096 = vunpack.c.l.b16 %v473
    %v1097 = vunpack.c.h.b16 %v473
    %v1098 = vunpack.c.l.b16 %v474
    %v1099 = vunpack.c.h.b16 %v474
    %v1100 = vunpack.c.l.b16 %v475
    %v1101 = vunpack.c.h.b16 %v475
    %v1102 = vunpack.c.l.b16 %v476
    %v1103 = vunpack.c.h.b16 %v476
    %v1104 = vunpack.c.l.b16 %v477
    %v1105 = vunpack.c.h.b16 %v477
    %v1106 = vunpack.c.l.b16 %v478
    %v1107 = vunpack.c.h.b16 %v478
    %v1108 = vunpack.c.l.b16 %v479
    %v1109 = vunpack.c.h.b16 %v479
    %v1110 = vunpack.c.l.b16 %v480
    %v1111 = vunpack.c.h.b16 %v480
    %v1112 = vunpack.c.l.b16 %v481
    %v1113 = vunpack.c.h.b16 %v481
    %v1114 = vunpack.c.l.b16 %v482
    %v1115 = vunpack.c.h.b16 %v482
    %v1116 = vunpack.c.l.b16 %v483
    %v1117 = vunpack.c.h.b16 %v483
    %v1118 = vunpack.c.l.b16 %v484
    %v1119 = vunpack.c.h.b16 %v484
    %v1120 = vunpack.c.l.b16 %v485
    %v1121 = vunpack.c.h.b16 %v485
    %v1122 = vunpack.c.l.b16 %v486
    %v1123 = vunpack.c.h.b16 %v486
    %v1124 = vunpack.c.l.b16 %v487
    %v1125 = vunpack.c.h.b16 %v487
    %v1126 = vunpack.c.l.b16 %v488
    %v1127 = vunpack.c.h.b16 %v488
    %v1128 = vunpack.c.l.b16 %v489
    %v1129 = vunpack.c.h.b16 %v489
    %v1130 = vunpack.c.l.b16 %v490
    %v1131 = vunpack.c.h.b16 %v490
    %v1132 = vunpack.c.l.b16 %v491
    %v1133 = vunpack.c.h.b16 %v491
    %v1134 = vunpack.c.l.b16 %v492
    %v1135 = vunpack.c.h.b16 %v492
    %v1136 = vunpack.c.l.b16 %v493
    %v1137 = vunpack.c.h.b16 %v493
    %v1138 = vunpack.c.l.b16 %v494
    %v1139 = vunpack.c.h.b16 %v494
    %v1140 = vunpack.c.l.b16 %v495
    %v1141 = vunpack.c.h.b16 %v495
    %v1142 = vunpack.c.l.b16 %v496
    %v1143 = vunpack.c.h.b16 %v496
    %v1144 = vunpack.c.l.b16 %v497
    %v1145 = vunpack.c.h.b16 %v497
    %v1146 = vunpack.c.l.b16 %v498
    %v1147 = vunpack.c.h.b16 %v498
    %v1148 = vunpack.c.l.b16 %v499
    %v1149 = vunpack.c.h.b16 %v499
    %v1150 = vunpack.c.l.b16 %v500
    %v1151 = vunpack.c.h.b16 %v500
    %v1152 = vunpack.c.l.b16 %v501
    %v1153 = vunpack.c.h.b16 %v501
    %v1154 = vunpack.c.l.b16 %v502
    %v1155 = vunpack.c.h.b16 %v502
    %v1156 = vunpack.c.l.b16 %v503
    %v1157 = vunpack.c.h.b16 %v503
    %v1158 = vunpack.c.l.b16 %v504
    %v1159 = vunpack.c.h.b16 %v504
    %v1160 = vunpack.c.l.b16 %v505
    %v1161 = vunpack.c.h.b16 %v505
    %v1162 = vunpack.c.l.b16 %v506
    %v1163 = vunpack.c.h.b16 %v506
    %v1164 = vunpack.c.l.b16 %v507
    %v1165 = vunpack.c.h.b16 %v507
    %v1166 = vunpack.c.l.b16 %v508
    %v1167 = vunpack.c.h.b16 %v508
    %v1168 = vunpack.c.l.b16 %v509
    %v1169 = vunpack.c.h.b16 %v509
    %v1170 = vunpack.c.l.b16 %v510
    %v1171 = vunpack.c.h.b16 %v510
    %v1172 = vunpack.c.l.b16 %v511
    %v1173 = vunpack.c.h.b16 %v511
    %v1174 = vunpack.c.l.b16 %v512
    %v1175 = vunpack.c.h.b16 %v512
    %v1176 = vunpack.c.l.b16 %v513
    %v1177 = vunpack.c.h.b16 %v513
    %v1178 = vunpack.c.l.b16 %v514
    %v1179 = vunpack.c.h.b16 %v514
    %v1180 = vunpack.c.l.b16 %v515
    %v1181 = vunpack.c.h.b16 %v515
    %v1182 = vunpack.c.l.b16 %v516
    %v1183 = vunpack.c.h.b16 %v516
    %v1184 = vunpack.c.l.b16 %v517
    %v1185 = vunpack.c.h.b16 %v517
    %v1186 = vunpack.c.l.b16 %v518
    %v1187 = vunpack.c.h.b16 %v518
    %v1188 = vunpack.c.l.b16 %v519
    %v1189 = vunpack.c.h.b16 %v519
    %v1190 = vunpack.c.l.b16 %v520
    %v1191 = vunpack.c.h.b16 %v520
    %v1192 = vunpack.c.l.b16 %v521
    %v1193 = vunpack.c.h.b16 %v521
    %v1194 = vunpack.c.l.b16 %v522
    %v1195 = vunpack.c.h.b16 %v522
    %v1196 = vunpack.c.l.b16 %v523
    %v1197 = vunpack.c.h.b16 %v523
    %v1198 = vunpack.c.l.b16 %v524
    %v1199 = vunpack.c.h.b16 %v524
    %v1200 = vunpack.c.l.b16 %v525
    %v1201 = vunpack.c.h.b16 %v525
    %v1202 = vunpack.c.l.b16 %v526
    %v1203 = vunpack.c.h.b16 %v526
    %v1204 = vunpack.c.l.b16 %v527
    %v1205 = vunpack.c.h.b16 %v527
    %v1206 = vunpack.c.l.b16 %v528
    %v1207 = vunpack.c.h.b16 %v528
    %v1208 = vunpack.c.l.b16 %v529
    %v1209 = vunpack.c.h.b16 %v529
    %v1210 = vunpack.c.l.b16 %v530
    %v1211 = vunpack.c.h.b16 %v530
    %v1212 = vunpack.c.l.b16 %v531
    %v1213 = vunpack.c.h.b16 %v531
    %v1214 = vunpack.c.l.b16 %v532
    %v1215 = vunpack.c.h.b16 %v532
    %v1216 = vunpack.c.l.b16 %v533
    %v1217 = vunpack.c.h.b16 %v533
    %v1218 = vunpack.c.l.b16 %v534
    %v1219 = vunpack.c.h.b16 %v534
    %v1220 = vunpack.c.l.b16 %v535
    %v1221 = vunpack.c.h.b16 %v535
    %v1222 = vunpack.c.l.b16 %v536
    %v1223 = vunpack.c.h.b16 %v536
    %v1224 = vunpack.c.l.b16 %v537
    %v1225 = vunpack.c.h.b16 %v537
    %v1226 = vunpack.c.l.b16 %v538
    %v1227 = vunpack.c.h.b16 %v538
    %v1228 = vunpack.c.l.b16 %v539
    %v1229 = vunpack.c.h.b16 %v539
    %v1230 = vunpack.c.l.b16 %v540
    %v1231 = vunpack.c.h.b16 %v540
    %v1232 = vunpack.c.l.b16 %v541
    %v1233 = vunpack.c.h.b16 %v541
    %v1234 = vunpack.c.l.b16 %v542
    %v1235 = vunpack.c.h.b16 %v542
    %v1236 = vunpack.c.l.b16 %v543
    %v1237 = vunpack.c.h.b16 %v543
    %v1238 = vunpack.c.l.b16 %v544
    %v1239 = vunpack.c.h.b16 %v544
    %v1240 = vunpack.c.l.b16 %v545
    %v1241 = vunpack.c.h.b16 %v545
    %v1242 = vunpack.c.l.b16 %v546
    %v1243 = vunpack.c.h.b16 %v546
    %v1244 = vunpack.c.l.b16 %v547
    %v1245 = vunpack.c.h.b16 %v547
    %v1246 = vunpack.c.l.b16 %v548
    %v1247 = vunpack.c.h.b16 %v548
    %v1248 = vunpack.c.l.b16 %v549
    %v1249 = vunpack.c.h.b16 %v549
    %v1250 = vunpack.c.l.b16 %v550
    %v1251 = vunpack.c.h.b16 %v550
    %v1252 = vunpack.c.l.b16 %v551
    %v1253 = vunpack.c.h.b16 %v551
    %v1254 = vunpack.c.l.b16 %v552
    %v1255 = vunpack.c.h.b16 %v552
    %v1256 = vunpack.c.l.b16 %v553
    %v1257 = vunpack.c.h.b16 %v553
    %v1258 = vunpack.c.l.b16 %v554
    %v1259 = vunpack.c.h.b16 %v554
    %v1260 = vunpack.c.l.b16 %v555
    %v1261 = vunpack.c.h.b16 %v555
    %v1262 = vunpack.c.l.b16 %v556
    %v1263 = vunpack.c.h.b16 %v556
    %v1264 = vunpack.c.l.b16 %v557
    %v1265 = vunpack.c.h.b16 %v557
    %v1266 = vunpack.c.l.b16 %v558
    %v1267 = vunpack.c.h.b16 %v558
    %v1268 = vunpack.c.l.b16 %v559
    %v1269 = vunpack.c.h.b16 %v559
    %v1270 = vunpack.c.l.b16 %v560
    %v1271 = vunpack.c.h.b16 %v560
    %v1272 = vunpack.c.l.b16 %v561
    %v1273 = vunpack.c.h.b16 %v561
    %v1274 = vunpack.c.l.b16 %v562
    %v1275 = vunpack.c.h.b16 %v562
    %v1276 = vunpack.c.l.b16 %v563
    %v1277 = vunpack.c.h.b16 %v563
    %v1278 = vunpack.c.l.b16 %v564
    %v1279 = vunpack.c.h.b16 %v564
    %v1280 = vunpack.c.l.b16 %v565
    %v1281 = vunpack.c.h.b16 %v565
    %v1282 = vunpack.c.l.b16 %v566
    %v1283 = vunpack.c.h.b16 %v566
    %v1284 = vunpack.c.l.b16 %v567
    %v1285 = vunpack.c.h.b16 %v567
    %v1286 = vunpack.c.l.b16 %v568
    %v1287 = vunpack.c.h.b16 %v568
    %v1288 = vunpack.c.l.b16 %v569
    %v1289 = vunpack.c.h.b16 %v569
    %v1290 = vunpack.c.l.b16 %v570
    %v1291 = vunpack.c.h.b16 %v570
    %v1292 = vunpack.c.l.b16 %v571
    %v1293 = vunpack.c.h.b16 %v571
    %v1294 = vunpack.c.l.b16 %v572
    %v1295 = vunpack.c.h.b16 %v572
    %v1296 = vunpack.c.l.b16 %v573
    %v1297 = vunpack.c.h.b16 %v573
    %v1298 = vunpack.c.l.b16 %v574
    %v1299 = vunpack.c.h.b16 %v574
    %v1300 = vunpack.c.l.b16 %v575
    %v1301 = vunpack.c.h.b16 %v575
    %v1302 = vunpack.c.l.b16 %v576
    %v1303 = vunpack.c.h.b16 %v576
    %v1304 = vunpack.c.l.b16 %v577
    %v1305 = vunpack.c.h.b16 %v577
    %v1306 = vunpack.c.l.b16 %v578
    %v1307 = vunpack.c.h.b16 %v578
    %v1308 = vunpack.c.l.b16 %v579
    %v1309 = vunpack.c.h.b16 %v579
    %v1310 = vunpack.c.l.b16 %v580
    %v1311 = vunpack.c.h.b16 %v580
    %v1312 = vunpack.c.l.b16 %v581
    %v1313 = vunpack.c.h.b16 %v581
    %v1314 = vunpack.c.l.b16 %v582
    %v1315 = vunpack.c.h.b16 %v582
    %v1316 = vunpack.c.l.b16 %v583
    %v1317 = vunpack.c.h.b16 %v583
    %v1318 = vunpack.c.l.b16 %v584
    %v1319 = vunpack.c.h.b16 %v584
    %v1320 = vunpack.c.l.b16 %v585
    %v1321 = vunpack.c.h.b16 %v585
    %v1322 = vunpack.c.l.b16 %v586
    %v1323 = vunpack.c.h.b16 %v586
    %v1324 = vunpack.c.l.b16 %v587
    %v1325 = vunpack.c.h.b16 %v587
    %v1326 = vunpack.c.l.b16 %v588
    %v1327 = vunpack.c.h.b16 %v588
    %v1328 = vunpack.c.l.b16 %v589
    %v1329 = vunpack.c.h.b16 %v589
    %v1330 = vunpack.c.l.b16 %v590
    %v1331 = vunpack.c.h.b16 %v590
    %v1332 = vunpack.c.l.b16 %v591
    %v1333 = vunpack.c.h.b16 %v591
    %v1334 = vunpack.c.l.b16 %v592
    %v1335 = vunpack.c.h.b16 %v592
    %v1336 = vunpack.c.l.b16 %v593
    %v1337 = vunpack.c.h.b16 %v593
    %v1338 = vunpack.c.l.b16 %v594
    %v1339 = vunpack.c.h.b16 %v594
    %v1340 = vunpack.c.l.b16 %v595
    %v1341 = vunpack.c.h.b16 %v595
    %v1342 = vunpack.c.l.b16 %v596
    %v1343 = vunpack.c.h.b16 %v596
    %v1344 = vunpack.c.l.b16 %v597
    %v1345 = vunpack.c.h.b16 %v597
    %v1346 = vunpack.c.l.b16 %v598
    %v1347 = vunpack.c.h.b16 %v598
    %v1348 = vunpack.c.l.b16 %v599
    %v1349 = vunpack.c.h.b16 %v599
    %v1350 = vunpack.c.l.b16 %v600
    %v1351 = vunpack.c.h.b16 %v600
    %v1352 = vunpack.c.l.b16 %v601
    %v1353 = vunpack.c.h.b16 %v601
    %v1354 = vunpack.c.l.b16 %v602
    %v1355 = vunpack.c.h.b16 %v602
    %v1356 = vunpack.c.l.b16 %v603
    %v1357 = vunpack.c.h.b16 %v603
    %v1358 = vunpack.c.l.b16 %v604
    %v1359 = vunpack.c.h.b16 %v604
    %v1360 = vunpack.c.l.b16 %v605
    %v1361 = vunpack.c.h.b16 %v605
    %v1362 = vunpack.c.l.b16 %v606
    %v1363 = vunpack.c.h.b16 %v606
    %v1364 = vunpack.c.l.b16 %v607
    %v1365 = vunpack.c.h.b16 %v607
    %v1366 = vunpack.c.l.b16 %v608
    %v1367 = vunpack.c.h.b16 %v608
    %v1368 = vunpack.c.l.b16 %v609
    %v1369 = vunpack.c.h.b16 %v609
    %v1370 = vunpack.c.l.b16 %v610
    %v1371 = vunpack.c.h.b16 %v610
    %v1372 = vunpack.c.l.b16 %v611
    %v1373 = vunpack.c.h.b16 %v611
    %v1374 = vunpack.c.l.b16 %v612
    %v1375 = vunpack.c.h.b16 %v612
    %v1376 = vunpack.c.l.b16 %v613
    %v1377 = vunpack.c.h.b16 %v613
    %v1378 = vunpack.c.l.b16 %v614
    %v1379 = vunpack.c.h.b16 %v614
    %v1380 = vunpack.c.l.b16 %v615
    %v1381 = vunpack.c.h.b16 %v615
    %v1382 = vunpack.c.l.b16 %v616
    %v1383 = vunpack.c.h.b16 %v616
    %v1384 = vunpack.c.l.b16 %v617
    %v1385 = vunpack.c.h.b16 %v617
    %v1386 = vunpack.c.l.b16 %v618
    %v1387 = vunpack.c.h.b16 %v618
    %v1388 = vpack.c.b16 %v880, %v876
    %v1389 = vpack.c.b16 %v881, %v877
    %v1390 = vpack.c.b16 %v882, %v878
    %v1391 = vpack.c.b16 %v883, %v879
    %v1392 = vpack.c.b16 %v888, %v884
    %v1393 = vpack.c.b16 %v889, %v885
    %v1394 = vpack.c.b16 %v890, %v886
    %v1395 = vpack.c.b16 %v891, %v887
    %v1396 = vpack.c.b16 %v896, %v892
    %v1397 = vpack.c.b16 %v897, %v893
    %v1398 = vpack.c.b16 %v898, %v894
    %v1399 = vpack.c.b16 %v899, %v895
    %v1400 = vpack.c.b16 %v904, %v900
    %v1401 = vpack.c.b16 %v905, %v901
    %v1402 = vpack.c.b16 %v906, %v902
    %v1403 = vpack.c.b16 %v907, %v903
    %v1404 = vpack.c.b16 %v912, %v908
    %v1405 = vpack.c.b16 %v913, %v909
    %v1406 = vpack.c.b16 %v914, %v910
    %v1407 = vpack.c.b16 %v915, %v911
    %v1408 = vpack.c.b16 %v920, %v916
    %v1409 = vpack.c.b16 %v921, %v917
    %v1410 = vpack.c.b16 %v922, %v918
    %v1411 = vpack.c.b16 %v923, %v919
    %v1412 = vpack.c.b16 %v928, %v924
    %v1413 = vpack.c.b16 %v929, %v925
    %v1414 = vpack.c.b16 %v930, %v926
    %v1415 = vpack.c.b16 %v931, %v927
    %v1416 = vpack.c.b16 %v936, %v932
    %v1417 = vpack.c.b16 %v937, %v933
    %v1418 = vpack.c.b16 %v938, %v934
    %v1419 = vpack.c.b16 %v939, %v935
    %v1420 = vpack.c.b16 %v944, %v940
    %v1421 = vpack.c.b16 %v945, %v941
    %v1422 = vpack.c.b16 %v946, %v942
    %v1423 = vpack.c.b16 %v947, %v943
    %v1424 = vpack.c.b16 %v952, %v948
    %v1425 = vpack.c.b16 %v953, %v949
    %v1426 = vpack.c.b16 %v954, %v950
    %v1427 = vpack.c.b16 %v955, %v951
    %v1428 = vpack.c.b16 %v960, %v956
    %v1429 = vpack.c.b16 %v961, %v957
    %v1430 = vpack.c.b16 %v962, %v958
    %v1431 = vpack.c.b16 %v963, %v959
    %v1432 = vpack.c.b16 %v968, %v964
    %v1433 = vpack.c.b16 %v969, %v965
    %v1434 = vpack.c.b16 %v970, %v966
    %v1435 = vpack.c.b16 %v971, %v967
    %v1436 = vpack.c.b16 %v976, %v972
    %v1437 = vpack.c.b16 %v977, %v973
    %v1438 = vpack.c.b16 %v978, %v974
    %v1439 = vpack.c.b16 %v979, %v975
    %v1440 = vpack.c.b16 %v984, %v980
    %v1441 = vpack.c.b16 %v985, %v981
    %v1442 = vpack.c.b16 %v986, %v982
    %v1443 = vpack.c.b16 %v987, %v983
    %v1444 = vpack.c.b16 %v992, %v988
    %v1445 = vpack.c.b16 %v993, %v989
    %v1446 = vpack.c.b16 %v994, %v990
    %v1447 = vpack.c.b16 %v995, %v991
    %v1448 = vpack.c.b16 %v1000, %v996
    %v1449 = vpack.c.b16 %v1001, %v997
    %v1450 = vpack.c.b16 %v1002, %v998
    %v1451 = vpack.c.b16 %v1003, %v999
    %v1452 = vpack.c.b16 %v1008, %v1004
    %v1453 = vpack.c.b16 %v1009, %v1005
    %v1454 = vpack.c.b16 %v1010, %v1006
    %v1455 = vpack.c.b16 %v1011, %v1007
    %v1456 = vpack.c.b16 %v1016, %v1012
    %v1457 = vpack.c.b16 %v1017, %v1013
    %v1458 = vpack.c.b16 %v1018, %v1014
    %v1459 = vpack.c.b16 %v1019, %v1015
    %v1460 = vpack.c.b16 %v1024, %v1020
    %v1461 = vpack.c.b16 %v1025, %v1021
    %v1462 = vpack.c.b16 %v1026, %v1022
    %v1463 = vpack.c.b16 %v1027, %v1023
    %v1464 = vpack.c.b16 %v1032, %v1028
    %v1465 = vpack.c.b16 %v1033, %v1029
    %v1466 = vpack.c.b16 %v1034, %v1030
    %v1467 = vpack.c.b16 %v1035, %v1031
    %v1468 = vpack.c.b16 %v1040, %v1036
    %v1469 = vpack.c.b16 %v1041, %v1037
    %v1470 = vpack.c.b16 %v1042, %v1038
    %v1471 = vpack.c.b16 %v1043, %v1039
    %v1472 = vpack.c.b16 %v1048, %v1044
    %v1473 = vpack.c.b16 %v1049, %v1045
    %v1474 = vpack.c.b16 %v1050, %v1046
    %v1475 = vpack.c.b16 %v1051, %v1047
    %v1476 = vpack.c.b16 %v1056, %v1052
    %v1477 = vpack.c.b16 %v1057, %v1053
    %v1478 = vpack.c.b16 %v1058, %v1054
    %v1479 = vpack.c.b16 %v1059, %v1055
    %v1480 = vpack.c.b16 %v1064, %v1060
    %v1481 = vpack.c.b16 %v1065, %v1061
    %v1482 = vpack.c.b16 %v1066, %v1062
    %v1483 = vpack.c.b16 %v1067, %v1063
    %v1484 = vpack.c.b16 %v1072, %v1068
    %v1485 = vpack.c.b16 %v1073, %v1069
    %v1486 = vpack.c.b16 %v1074, %v1070
    %v1487 = vpack.c.b16 %v1075, %v1071
    %v1488 = vpack.c.b16 %v1080, %v1076
    %v1489 = vpack.c.b16 %v1081, %v1077
    %v1490 = vpack.c.b16 %v1082, %v1078
    %v1491 = vpack.c.b16 %v1083, %v1079
    %v1492 = vpack.c.b16 %v1088, %v1084
    %v1493 = vpack.c.b16 %v1089, %v1085
    %v1494 = vpack.c.b16 %v1090, %v1086
    %v1495 = vpack.c.b16 %v1091, %v1087
    %v1496 = vpack.c.b16 %v1096, %v1092
    %v1497 = vpack.c.b16 %v1097, %v1093
    %v1498 = vpack.c.b16 %v1098, %v1094
    %v1499 = vpack.c.b16 %v1099, %v1095
    %v1500 = vpack.c.b16 %v1104, %v1100
    %v1501 = vpack.c.b16 %v1105, %v1101
    %v1502 = vpack.c.b16 %v1106, %v1102
    %v1503 = vpack.c.b16 %v1107, %v1103
    %v1504 = vpack.c.b16 %v1112, %v1108
    %v1505 = vpack.c.b16 %v1113, %v1109
    %v1506 = vpack.c.b16 %v1114, %v1110
    %v1507 = vpack.c.b16 %v1115, %v1111
    %v1508 = vpack.c.b16 %v1120, %v1116
    %v1509 = vpack.c.b16 %v1121, %v1117
    %v1510 = vpack.c.b16 %v1122, %v1118
    %v1511 = vpack.c.b16 %v1123, %v1119
    %v1512 = vpack.c.b16 %v1128, %v1124
    %v1513 = vpack.c.b16 %v1129, %v1125
    %v1514 = vpack.c.b16 %v1130, %v1126
    %v1515 = vpack.c.b16 %v1131, %v1127
    %v1516 = vpack.c.b16 %v1136, %v1132
    %v1517 = vpack.c.b16 %v1137, %v1133
    %v1518 = vpack.c.b16 %v1138, %v1134
    %v1519 = vpack.c.b16 %v1139, %v1135
    %v1520 = vpack.c.b16 %v1144, %v1140
    %v1521 = vpack.c.b16 %v1145, %v1141
    %v1522 = vpack.c.b16 %v1146, %v1142
    %v1523 = vpack.c.b16 %v1147, %v1143
    %v1524 = vpack.c.b16 %v1152, %v1148
    %v1525 = vpack.c.b16 %v1153, %v1149
    %v1526 = vpack.c.b16 %v1154, %v1150
    %v1527 = vpack.c.b16 %v1155, %v1151
    %v1528 = vpack.c.b16 %v1160, %v1156
    %v1529 = vpack.c.b16 %v1161, %v1157
    %v1530 = vpack.c.b16 %v1162, %v1158
    %v1531 = vpack.c.b16 %v1163, %v1159
    %v1532 = vpack.c.b16 %v1168, %v1164
    %v1533 = vpack.c.b16 %v1169, %v1165
    %v1534 = vpack.c.b16 %v1170, %v1166
    %v1535 = vpack.c.b16 %v1171, %v1167
    %v1536 = vpack.c.b16 %v1176, %v1172
    %v1537 = vpack.c.b16 %v1177, %v1173
    %v1538 = vpack.c.b16 %v1178, %v1174
    %v1539 = vpack.c.b16 %v1179, %v1175
    %v1540 = vpack.c.b16 %v1184, %v1180
    %v1541 = vpack.c.b16 %v1185, %v1181
    %v1542 = vpack.c.b16 %v1186, %v1182
    %v1543 = vpack.c.b16 %v1187, %v1183
    %v1544 = vpack.c.b16 %v1192, %v1188
    %v1545 = vpack.c.b16 %v1193, %v1189
    %v1546 = vpack.c.b16 %v1194, %v1190
    %v1547 = vpack.c.b16 %v1195, %v1191
    %v1548 = vpack.c.b16 %v1200, %v1196
    %v1549 = vpack.c.b16 %v1201, %v1197
    %v1550 = vpack.c.b16 %v1202, %v1198
    %v1551 = vpack.c.b16 %v1203, %v1199
    %v1552 = vpack.c.b16 %v1208, %v1204
    %v1553 = vpack.c.b16 %v1209, %v1205
    %v1554 = vpack.c.b16 %v1210, %v1206
    %v1555 = vpack.c.b16 %v1211, %v1207
    %v1556 = vpack.c.b16 %v1216, %v1212
    %v1557 = vpack.c.b16 %v1217, %v1213
    %v1558 = vpack.c.b16 %v1218, %v1214
    %v1559 = vpack.c.b16 %v1219, %v1215
    %v1560 = vpack.c.b16 %v1224, %v1220
    %v1561 = vpack.c.b16 %v1225, %v1221
    %v1562 = vpack.c.b16 %v1226, %v1222
    %v1563 = vpack.c.b16 %v1227, %v1223
    %v1564 = vpack.c.b16 %v1232, %v1228
    %v1565 = vpack.c.b16 %v1233, %v1229
    %v1566 = vpack.c.b16 %v1234, %v1230
    %v1567 = vpack.c.b16 %v1235, %v1231
    %v1568 = vpack.c.b16 %v1240, %v1236
    %v1569 = vpack.c.b16 %v1241, %v1237
    %v1570 = vpack.c.b16 %v1242, %v1238
    %v1571 = vpack.c.b16 %v1243, %v1239
    %v1572 = vpack.c.b16 %v1248, %v1244
    %v1573 = vpack.c.b16 %v1249, %v1245
    %v1574 = vpack.c.b16 %v1250, %v1246
    %v1575 = vpack.c.b16 %v1251, %v1247
    %v1576 = vpack.c.b16 %v1256, %v1252
    %v1577 = vpack.c.b16 %v1257, %v1253
    %v1578 = vpack.c.b16 %v1258, %v1254
    %v1579 = vpack.c.b16 %v1259, %v1255
    %v1580 = vpack.c.b16 %v1264, %v1260
    %v1581 = vpack.c.b16 %v1265, %v1261
    %v1582 = vpack.c.b16 %v1266, %v1262
    %v1583 = vpack.c.b16 %v1267, %v1263
    %v1584 = vpack.c.b16 %v1272, %v1268
    %v1585 = vpack.c.b16 %v1273, %v1269
    %v1586 = vpack.c.b16 %v1274, %v1270
    %v1587 = vpack.c.b16 %v1275, %v1271
    %v1588 = vpack.c.b16 %v1280, %v1276
    %v1589 = vpack.c.b16 %v1281, %v1277
    %v1590 = vpack.c.b16 %v1282, %v1278
    %v1591 = vpack.c.b16 %v1283, %v1279
    %v1592 = vpack.c.b16 %v1288, %v1284
    %v1593 = vpack.c.b16 %v1289, %v1285
    %v1594 = vpack.c.b16 %v1290, %v1286
    %v1595 = vpack.c.b16 %v1291, %v1287
    %v1596 = vpack.c.b16 %v1296, %v1292
    %v1597 = vpack.c.b16 %v1297, %v1293
    %v1598 = vpack.c.b16 %v1298, %v1294
    %v1599 = vpack.c.b16 %v1299, %v1295
    %v1600 = vpack.c.b16 %v1304, %v1300
    %v1601 = vpack.c.b16 %v1305, %v1301
    %v1602 = vpack.c.b16 %v1306, %v1302
    %v1603 = vpack.c.b16 %v1307, %v1303
    %v1604 = vpack.c.b16 %v1312, %v1308
    %v1605 = vpack.c.b16 %v1313, %v1309
    %v1606 = vpack.c.b16 %v1314, %v1310
    %v1607 = vpack.c.b16 %v1315, %v1311
    %v1608 = vpack.c.b16 %v1320, %v1316
    %v1609 = vpack.c.b16 %v1321, %v1317
    %v1610 = vpack.c.b16 %v1322, %v1318
    %v1611 = vpack.c.b16 %v1323, %v1319
    %v1612 = vpack.c.b16 %v1328, %v1324
    %v1613 = vpack.c.b16 %v1329, %v1325
    %v1614 = vpack.c.b16 %v1330, %v1326
    %v1615 = vpack.c.b16 %v1331, %v1327
    %v1616 = vpack.c.b16 %v1336, %v1332
    %v1617 = vpack.c.b16 %v1337, %v1333
    %v1618 = vpack.c.b16 %v1338, %v1334
    %v1619 = vpack.c.b16 %v1339, %v1335
    %v1620 = vpack.c.b16 %v1344, %v1340
    %v1621 = vpack.c.b16 %v1345, %v1341
    %v1622 = vpack.c.b16 %v1346, %v1342
    %v1623 = vpack.c.b16 %v1347, %v1343
    %v1624 = vpack.c.b16 %v1352, %v1348
    %v1625 = vpack.c.b16 %v1353, %v1349
    %v1626 = vpack.c.b16 %v1354, %v1350
    %v1627 = vpack.c.b16 %v1355, %v1351
    %v1628 = vpack.c.b16 %v1360, %v1356
    %v1629 = vpack.c.b16 %v1361, %v1357
    %v1630 = vpack.c.b16 %v1362, %v1358
    %v1631 = vpack.c.b16 %v1363, %v1359
    %v1632 = vpack.c.b16 %v1368, %v1364
    %v1633 = vpack.c.b16 %v1369, %v1365
    %v1634 = vpack.c.b16 %v1370, %v1366
    %v1635 = vpack.c.b16 %v1371, %v1367
    %v1636 = vpack.c.b16 %v1376, %v1372
    %v1637 = vpack.c.b16 %v1377, %v1373
    %v1638 = vpack.c.b16 %v1378, %v1374
    %v1639 = vpack.c.b16 %v1379, %v1375
    %v1640 = vpack.c.b16 %v1384, %v1380
    %v1641 = vpack.c.b16 %v1385, %v1381
    %v1642 = vpack.c.b16 %v1386, %v1382
    %v1643 = vpack.c.b16 %v1387, %v1383
    %v1901 = vlaneseq
    %v1902 = vshrl.u32 %v1901, 7
    %v1903 = vsub.s32 0, %v1902
    %v1904 = vrot.slane %v619, %v1903
    %v1905 = vlaneseq
    %v1906 = vshrl.u32 %v1905, 7
    %v1907 = vsub.s32 1, %v1906
    %v1908 = vrot.slane %v619, %v1907
    %v1909 = vlaneseq
    %v1910 = vshrl.u32 %v1909, 7
    %v1911 = vsub.s32 2, %v1910
    %v1912 = vrot.slane %v619, %v1911
    %v1913 = vlaneseq
    %v1914 = vshrl.u32 %v1913, 7
    %v1915 = vsub.s32 3, %v1914
    %v1916 = vrot.slane %v619, %v1915
    %1921 = vmatprep.subr.bf16.mxu0 %v1389
    %1922 = vmatpush1.bf16.msra.mxu0 %v1388
    %1923 = vmatprep.subr.bf16.mxu0 %v1393
    %1924 = vmatpush1.bf16.msra.mxu0 %v1392
    %1925 = vmatprep.subr.bf16.mxu0 %v1397
    %1926 = vmatpush1.bf16.msra.mxu0 %v1396
    %1927 = vmatprep.subr.bf16.mxu0 %v1401
    %1928 = vmatpush1.bf16.msra.mxu0 %v1400
    %1929 = vmatprep.subr.bf16.mxu0 %v1405
    %1930 = vmatpush1.bf16.msra.mxu0 %v1404
    %1931 = vmatprep.subr.bf16.mxu0 %v1409
    %1932 = vmatpush1.bf16.msra.mxu0 %v1408
    %1933 = vmatprep.subr.bf16.mxu0 %v1413
    %1934 = vmatpush1.bf16.msra.mxu0 %v1412
    %1935 = vmatprep.subr.bf16.mxu0 %v1417
    %1936 = vmatpush1.bf16.msra.mxu0 %v1416
    %1937 = vmatprep.subr.bf16.mxu0 %v1421
    %1938 = vmatpush1.bf16.msra.mxu0 %v1420
    %1939 = vmatprep.subr.bf16.mxu0 %v1425
    %1940 = vmatpush1.bf16.msra.mxu0 %v1424
    %1941 = vmatprep.subr.bf16.mxu0 %v1429
    %1942 = vmatpush1.bf16.msra.mxu0 %v1428
    %1943 = vmatprep.subr.bf16.mxu0 %v1433
    %1944 = vmatpush1.bf16.msra.mxu0 %v1432
    %1945 = vmatprep.subr.bf16.mxu0 %v1437
    %1946 = vmatpush1.bf16.msra.mxu0 %v1436
    %1947 = vmatprep.subr.bf16.mxu0 %v1441
    %1948 = vmatpush1.bf16.msra.mxu0 %v1440
    %1949 = vmatprep.subr.bf16.mxu0 %v1445
    %1950 = vmatpush1.bf16.msra.mxu0 %v1444
    %1951 = vmatprep.subr.bf16.mxu0 %v1449
    %1952 = vmatpush1.bf16.msra.mxu0 %v1448
    %1953 = vmatprep.mubr.bf16.mxu0 %v356
    %1954 = vmatmul.mubr.bf16.gmra.mrb[0].mxu0 %v355
    %v1955 = vpop.f32.mrb[0].mxu0
    %v1956 = vadd.f32 %v1904, %v1955
    %v1957 = vpop.f32.mrb[0].mxu0
    %v1958 = vadd.f32 %v1908, %v1957
    %v1959 = vpop.f32.mrb[0].mxu0
    %v1960 = vpop.f32.mrb[0].mxu0
    %1961 = vdwg.mxu0
    %1962 = vmatprep.subr.bf16.mxu0 %v1453
    %1963 = vmatpush1.bf16.msra.mxu0 %v1452
    %1964 = vmatprep.subr.bf16.mxu0 %v1457
    %1965 = vmatpush1.bf16.msra.mxu0 %v1456
    %1966 = vmatprep.subr.bf16.mxu0 %v1461
    %1967 = vmatpush1.bf16.msra.mxu0 %v1460
    %1968 = vmatprep.subr.bf16.mxu0 %v1465
    %1969 = vmatpush1.bf16.msra.mxu0 %v1464
    %1970 = vmatprep.subr.bf16.mxu0 %v1469
    %1971 = vmatpush1.bf16.msra.mxu0 %v1468
    %1972 = vmatprep.subr.bf16.mxu0 %v1473
    %1973 = vmatpush1.bf16.msra.mxu0 %v1472
    %1974 = vmatprep.subr.bf16.mxu0 %v1477
    %1975 = vmatpush1.bf16.msra.mxu0 %v1476
    %1976 = vmatprep.subr.bf16.mxu0 %v1481
    %1977 = vmatpush1.bf16.msra.mxu0 %v1480
    %1978 = vmatprep.subr.bf16.mxu0 %v1485
    %1979 = vmatpush1.bf16.msra.mxu0 %v1484
    %1980 = vmatprep.subr.bf16.mxu0 %v1489
    %1981 = vmatpush1.bf16.msra.mxu0 %v1488
    %1982 = vmatprep.subr.bf16.mxu0 %v1493
    %1983 = vmatpush1.bf16.msra.mxu0 %v1492
    %1984 = vmatprep.subr.bf16.mxu0 %v1497
    %1985 = vmatpush1.bf16.msra.mxu0 %v1496
    %1986 = vmatprep.subr.bf16.mxu0 %v1501
    %1987 = vmatpush1.bf16.msra.mxu0 %v1500
    %1988 = vmatprep.subr.bf16.mxu0 %v1505
    %1989 = vmatpush1.bf16.msra.mxu0 %v1504
    %1990 = vmatprep.subr.bf16.mxu0 %v1509
    %1991 = vmatpush1.bf16.msra.mxu0 %v1508
    %1992 = vmatprep.subr.bf16.mxu0 %v1513
    %1993 = vmatpush1.bf16.msra.mxu0 %v1512
    %1994 = vmatprep.mubr.bf16.mxu0 %v358
    %1995 = vmatmul.mubr.bf16.gmra.mrb[0].mxu0 %v357
    %v1996 = vpop.f32.mrb[0].mxu0
    %v1997 = vadd.f32 %v1956, %v1996
    %v1998 = vpop.f32.mrb[0].mxu0
    %v1999 = vadd.f32 %v1958, %v1998
    %v2000 = vpop.f32.mrb[0].mxu0
    %v2001 = vpop.f32.mrb[0].mxu0
    %2002 = vdwg.mxu0
    %2003 = vmatprep.subr.bf16.mxu0 %v1517
    %2004 = vmatpush1.bf16.msra.mxu0 %v1516
    %2005 = vmatprep.subr.bf16.mxu0 %v1521
    %2006 = vmatpush1.bf16.msra.mxu0 %v1520
    %2007 = vmatprep.subr.bf16.mxu0 %v1525
    %2008 = vmatpush1.bf16.msra.mxu0 %v1524
    %2009 = vmatprep.subr.bf16.mxu0 %v1529
    %2010 = vmatpush1.bf16.msra.mxu0 %v1528
    %2011 = vmatprep.subr.bf16.mxu0 %v1533
    %2012 = vmatpush1.bf16.msra.mxu0 %v1532
    %2013 = vmatprep.subr.bf16.mxu0 %v1537
    %2014 = vmatpush1.bf16.msra.mxu0 %v1536
    %2015 = vmatprep.subr.bf16.mxu0 %v1541
    %2016 = vmatpush1.bf16.msra.mxu0 %v1540
    %2017 = vmatprep.subr.bf16.mxu0 %v1545
    %2018 = vmatpush1.bf16.msra.mxu0 %v1544
    %2019 = vmatprep.subr.bf16.mxu0 %v1549
    %2020 = vmatpush1.bf16.msra.mxu0 %v1548
    %2021 = vmatprep.subr.bf16.mxu0 %v1553
    %2022 = vmatpush1.bf16.msra.mxu0 %v1552
    %2023 = vmatprep.subr.bf16.mxu0 %v1557
    %2024 = vmatpush1.bf16.msra.mxu0 %v1556
    %2025 = vmatprep.subr.bf16.mxu0 %v1561
    %2026 = vmatpush1.bf16.msra.mxu0 %v1560
    %2027 = vmatprep.subr.bf16.mxu0 %v1565
    %2028 = vmatpush1.bf16.msra.mxu0 %v1564
    %2029 = vmatprep.subr.bf16.mxu0 %v1569
    %2030 = vmatpush1.bf16.msra.mxu0 %v1568
    %2031 = vmatprep.subr.bf16.mxu0 %v1573
    %2032 = vmatpush1.bf16.msra.mxu0 %v1572
    %2033 = vmatprep.subr.bf16.mxu0 %v1577
    %2034 = vmatpush1.bf16.msra.mxu0 %v1576
    %2035 = vmatprep.mubr.bf16.mxu0 %v360
    %2036 = vmatmul.mubr.bf16.gmra.mrb[0].mxu0 %v359
    %v2037 = vpop.f32.mrb[0].mxu0
    %v2038 = vadd.f32 %v1997, %v2037
    %v2039 = vpop.f32.mrb[0].mxu0
    %v2040 = vadd.f32 %v1999, %v2039
    %v2041 = vpop.f32.mrb[0].mxu0
    %v2042 = vpop.f32.mrb[0].mxu0
    %2043 = vdwg.mxu0
    %2044 = vmatprep.subr.bf16.mxu0 %v1581
    %2045 = vmatpush1.bf16.msra.mxu0 %v1580
    %2046 = vmatprep.subr.bf16.mxu0 %v1585
    %2047 = vmatpush1.bf16.msra.mxu0 %v1584
    %2048 = vmatprep.subr.bf16.mxu0 %v1589
    %2049 = vmatpush1.bf16.msra.mxu0 %v1588
    %2050 = vmatprep.subr.bf16.mxu0 %v1593
    %2051 = vmatpush1.bf16.msra.mxu0 %v1592
    %2052 = vmatprep.subr.bf16.mxu0 %v1597
    %2053 = vmatpush1.bf16.msra.mxu0 %v1596
    %2054 = vmatprep.subr.bf16.mxu0 %v1601
    %2055 = vmatpush1.bf16.msra.mxu0 %v1600
    %2056 = vmatprep.subr.bf16.mxu0 %v1605
    %2057 = vmatpush1.bf16.msra.mxu0 %v1604
    %2058 = vmatprep.subr.bf16.mxu0 %v1609
    %2059 = vmatpush1.bf16.msra.mxu0 %v1608
    %2060 = vmatprep.subr.bf16.mxu0 %v1613
    %2061 = vmatpush1.bf16.msra.mxu0 %v1612
    %2062 = vmatprep.subr.bf16.mxu0 %v1617
    %2063 = vmatpush1.bf16.msra.mxu0 %v1616
    %2064 = vmatprep.subr.bf16.mxu0 %v1621
    %2065 = vmatpush1.bf16.msra.mxu0 %v1620
    %2066 = vmatprep.subr.bf16.mxu0 %v1625
    %2067 = vmatpush1.bf16.msra.mxu0 %v1624
    %2068 = vmatprep.subr.bf16.mxu0 %v1629
    %2069 = vmatpush1.bf16.msra.mxu0 %v1628
    %2070 = vmatprep.subr.bf16.mxu0 %v1633
    %2071 = vmatpush1.bf16.msra.mxu0 %v1632
    %2072 = vmatprep.subr.bf16.mxu0 %v1637
    %2073 = vmatpush1.bf16.msra.mxu0 %v1636
    %2074 = vmatprep.subr.bf16.mxu0 %v1641
    %2075 = vmatpush1.bf16.msra.mxu0 %v1640
    %2076 = vmatprep.mubr.bf16.mxu0 %v362
    %2077 = vmatmul.mubr.bf16.gmra.mrb[0].mxu0 %v361
    %v2078 = vpop.f32.mrb[0].mxu0
    %v2079 = vadd.f32 %v2038, %v2078
    %v2080 = vpop.f32.mrb[0].mxu0
    %v2081 = vadd.f32 %v2040, %v2080
    %v2082 = vpop.f32.mrb[0].mxu0
    %v2083 = vpop.f32.mrb[0].mxu0
    %2084 = vdwg.mxu0
    %2085 = vmatprep.subr.bf16.mxu0 %v1391
    %2086 = vmatpush1.bf16.msra.mxu0 %v1390
    %2087 = vmatprep.subr.bf16.mxu0 %v1395
    %2088 = vmatpush1.bf16.msra.mxu0 %v1394
    %2089 = vmatprep.subr.bf16.mxu0 %v1399
    %2090 = vmatpush1.bf16.msra.mxu0 %v1398
    %2091 = vmatprep.subr.bf16.mxu0 %v1403
    %2092 = vmatpush1.bf16.msra.mxu0 %v1402
    %2093 = vmatprep.subr.bf16.mxu0 %v1407
    %2094 = vmatpush1.bf16.msra.mxu0 %v1406
    %2095 = vmatprep.subr.bf16.mxu0 %v1411
    %2096 = vmatpush1.bf16.msra.mxu0 %v1410
    %2097 = vmatprep.subr.bf16.mxu0 %v1415
    %2098 = vmatpush1.bf16.msra.mxu0 %v1414
    %2099 = vmatprep.subr.bf16.mxu0 %v1419
    %2100 = vmatpush1.bf16.msra.mxu0 %v1418
    %2101 = vmatprep.subr.bf16.mxu0 %v1423
    %2102 = vmatpush1.bf16.msra.mxu0 %v1422
    %2103 = vmatprep.subr.bf16.mxu0 %v1427
    %2104 = vmatpush1.bf16.msra.mxu0 %v1426
    %2105 = vmatprep.subr.bf16.mxu0 %v1431
    %2106 = vmatpush1.bf16.msra.mxu0 %v1430
    %2107 = vmatprep.subr.bf16.mxu0 %v1435
    %2108 = vmatpush1.bf16.msra.mxu0 %v1434
    %2109 = vmatprep.subr.bf16.mxu0 %v1439
    %2110 = vmatpush1.bf16.msra.mxu0 %v1438
    %2111 = vmatprep.subr.bf16.mxu0 %v1443
    %2112 = vmatpush1.bf16.msra.mxu0 %v1442
    %2113 = vmatprep.subr.bf16.mxu0 %v1447
    %2114 = vmatpush1.bf16.msra.mxu0 %v1446
    %2115 = vmatprep.subr.bf16.mxu0 %v1451
    %2116 = vmatpush1.bf16.msra.mxu0 %v1450
    %2117 = vmatprep.mubr.bf16.mxu0 %v356
    %2118 = vmatmul.mubr.bf16.gmra.mrb[0].mxu0 %v355
    %v2119 = vpop.f32.mrb[0].mxu0
    %v2120 = vadd.f32 %v1912, %v2119
    %v2121 = vpop.f32.mrb[0].mxu0
    %v2122 = vadd.f32 %v1916, %v2121
    %v2123 = vpop.f32.mrb[0].mxu0
    %v2124 = vpop.f32.mrb[0].mxu0
    %2125 = vdwg.mxu0
    %2126 = vmatprep.subr.bf16.mxu0 %v1455
    %2127 = vmatpush1.bf16.msra.mxu0 %v1454
    %2128 = vmatprep.subr.bf16.mxu0 %v1459
    %2129 = vmatpush1.bf16.msra.mxu0 %v1458
    %2130 = vmatprep.subr.bf16.mxu0 %v1463
    %2131 = vmatpush1.bf16.msra.mxu0 %v1462
    %2132 = vmatprep.subr.bf16.mxu0 %v1467
    %2133 = vmatpush1.bf16.msra.mxu0 %v1466
    %2134 = vmatprep.subr.bf16.mxu0 %v1471
    %2135 = vmatpush1.bf16.msra.mxu0 %v1470
    %2136 = vmatprep.subr.bf16.mxu0 %v1475
    %2137 = vmatpush1.bf16.msra.mxu0 %v1474
    %2138 = vmatprep.subr.bf16.mxu0 %v1479
    %2139 = vmatpush1.bf16.msra.mxu0 %v1478
    %2140 = vmatprep.subr.bf16.mxu0 %v1483
    %2141 = vmatpush1.bf16.msra.mxu0 %v1482
    %2142 = vmatprep.subr.bf16.mxu0 %v1487
    %2143 = vmatpush1.bf16.msra.mxu0 %v1486
    %2144 = vmatprep.subr.bf16.mxu0 %v1491
    %2145 = vmatpush1.bf16.msra.mxu0 %v1490
    %2146 = vmatprep.subr.bf16.mxu0 %v1495
    %2147 = vmatpush1.bf16.msra.mxu0 %v1494
    %2148 = vmatprep.subr.bf16.mxu0 %v1499
    %2149 = vmatpush1.bf16.msra.mxu0 %v1498
    %2150 = vmatprep.subr.bf16.mxu0 %v1503
    %2151 = vmatpush1.bf16.msra.mxu0 %v1502
    %2152 = vmatprep.subr.bf16.mxu0 %v1507
    %2153 = vmatpush1.bf16.msra.mxu0 %v1506
    %2154 = vmatprep.subr.bf16.mxu0 %v1511
    %2155 = vmatpush1.bf16.msra.mxu0 %v1510
    %2156 = vmatprep.subr.bf16.mxu0 %v1515
    %2157 = vmatpush1.bf16.msra.mxu0 %v1514
    %2158 = vmatprep.mubr.bf16.mxu0 %v358
    %2159 = vmatmul.mubr.bf16.gmra.mrb[0].mxu0 %v357
    %v2160 = vpop.f32.mrb[0].mxu0
    %v2161 = vadd.f32 %v2120, %v2160
    %v2162 = vpop.f32.mrb[0].mxu0
    %v2163 = vadd.f32 %v2122, %v2162
    %v2164 = vpop.f32.mrb[0].mxu0
    %v2165 = vpop.f32.mrb[0].mxu0
    %2166 = vdwg.mxu0
    %2167 = vmatprep.subr.bf16.mxu0 %v1519
    %2168 = vmatpush1.bf16.msra.mxu0 %v1518
    %2169 = vmatprep.subr.bf16.mxu0 %v1523
    %2170 = vmatpush1.bf16.msra.mxu0 %v1522
    %2171 = vmatprep.subr.bf16.mxu0 %v1527
    %2172 = vmatpush1.bf16.msra.mxu0 %v1526
    %2173 = vmatprep.subr.bf16.mxu0 %v1531
    %2174 = vmatpush1.bf16.msra.mxu0 %v1530
    %2175 = vmatprep.subr.bf16.mxu0 %v1535
    %2176 = vmatpush1.bf16.msra.mxu0 %v1534
    %2177 = vmatprep.subr.bf16.mxu0 %v1539
    %2178 = vmatpush1.bf16.msra.mxu0 %v1538
    %2179 = vmatprep.subr.bf16.mxu0 %v1543
    %2180 = vmatpush1.bf16.msra.mxu0 %v1542
    %2181 = vmatprep.subr.bf16.mxu0 %v1547
    %2182 = vmatpush1.bf16.msra.mxu0 %v1546
    %2183 = vmatprep.subr.bf16.mxu0 %v1551
    %2184 = vmatpush1.bf16.msra.mxu0 %v1550
    %2185 = vmatprep.subr.bf16.mxu0 %v1555
    %2186 = vmatpush1.bf16.msra.mxu0 %v1554
    %2187 = vmatprep.subr.bf16.mxu0 %v1559
    %2188 = vmatpush1.bf16.msra.mxu0 %v1558
    %2189 = vmatprep.subr.bf16.mxu0 %v1563
    %2190 = vmatpush1.bf16.msra.mxu0 %v1562
    %2191 = vmatprep.subr.bf16.mxu0 %v1567
    %2192 = vmatpush1.bf16.msra.mxu0 %v1566
    %2193 = vmatprep.subr.bf16.mxu0 %v1571
    %2194 = vmatpush1.bf16.msra.mxu0 %v1570
    %2195 = vmatprep.subr.bf16.mxu0 %v1575
    %2196 = vmatpush1.bf16.msra.mxu0 %v1574
    %2197 = vmatprep.subr.bf16.mxu0 %v1579
    %2198 = vmatpush1.bf16.msra.mxu0 %v1578
    %2199 = vmatprep.mubr.bf16.mxu0 %v360
    %2200 = vmatmul.mubr.bf16.gmra.mrb[0].mxu0 %v359
    %v2201 = vpop.f32.mrb[0].mxu0
    %v2202 = vadd.f32 %v2161, %v2201
    %v2203 = vpop.f32.mrb[0].mxu0
    %v2204 = vadd.f32 %v2163, %v2203
    %v2205 = vpop.f32.mrb[0].mxu0
    %v2206 = vpop.f32.mrb[0].mxu0
    %2207 = vdwg.mxu0
    %2208 = vmatprep.subr.bf16.mxu0 %v1583
    %2209 = vmatpush1.bf16.msra.mxu0 %v1582
    %2210 = vmatprep.subr.bf16.mxu0 %v1587
    %2211 = vmatpush1.bf16.msra.mxu0 %v1586
    %2212 = vmatprep.subr.bf16.mxu0 %v1591
    %2213 = vmatpush1.bf16.msra.mxu0 %v1590
    %2214 = vmatprep.subr.bf16.mxu0 %v1595
    %2215 = vmatpush1.bf16.msra.mxu0 %v1594
    %2216 = vmatprep.subr.bf16.mxu0 %v1599
    %2217 = vmatpush1.bf16.msra.mxu0 %v1598
    %2218 = vmatprep.subr.bf16.mxu0 %v1603
    %2219 = vmatpush1.bf16.msra.mxu0 %v1602
    %2220 = vmatprep.subr.bf16.mxu0 %v1607
    %2221 = vmatpush1.bf16.msra.mxu0 %v1606
    %2222 = vmatprep.subr.bf16.mxu0 %v1611
    %2223 = vmatpush1.bf16.msra.mxu0 %v1610
    %2224 = vmatprep.subr.bf16.mxu0 %v1615
    %2225 = vmatpush1.bf16.msra.mxu0 %v1614
    %2226 = vmatprep.subr.bf16.mxu0 %v1619
    %2227 = vmatpush1.bf16.msra.mxu0 %v1618
    %2228 = vmatprep.subr.bf16.mxu0 %v1623
    %2229 = vmatpush1.bf16.msra.mxu0 %v1622
    %2230 = vmatprep.subr.bf16.mxu0 %v1627
    %2231 = vmatpush1.bf16.msra.mxu0 %v1626
    %2232 = vmatprep.subr.bf16.mxu0 %v1631
    %2233 = vmatpush1.bf16.msra.mxu0 %v1630
    %2234 = vmatprep.subr.bf16.mxu0 %v1635
    %2235 = vmatpush1.bf16.msra.mxu0 %v1634
    %2236 = vmatprep.subr.bf16.mxu0 %v1639
    %2237 = vmatpush1.bf16.msra.mxu0 %v1638
    %2238 = vmatprep.subr.bf16.mxu0 %v1643
    %2239 = vmatpush1.bf16.msra.mxu0 %v1642
    %2240 = vmatprep.mubr.bf16.mxu0 %v362
    %2241 = vmatmul.mubr.bf16.gmra.mrb[0].mxu0 %v361
    %v2242 = vpop.f32.mrb[0].mxu0
    %v2243 = vadd.f32 %v2202, %v2242
    %v2244 = vpop.f32.mrb[0].mxu0
    %v2245 = vadd.f32 %v2204, %v2244
    %v2246 = vpop.f32.mrb[0].mxu0
    %v2247 = vpop.f32.mrb[0].mxu0
    %2248 = vdwg.mxu0
    %v2249 = vmax.f32 %v2079, 0.0
    %v2250 = vmax.f32 %v2081, 0.0
    %v2251 = vmax.f32 %v2243, 0.0
    %v2252 = vmax.f32 %v2245, 0.0
    %v2253 = vpack.c.bf16 %v2249, %v2249
    %v2254 = vpack.c.bf16 %v2250, %v2250
    %v2255 = vpack.c.bf16 %v2251, %v2251
    %v2256 = vpack.c.bf16 %v2252, %v2252
    %v2257 = vld [vmem:[%s7] sm:$0xf]
    %v2258 = vld [vmem:[%s7 + $0x4] sm:$0xf]
    %v2259 = vld [vmem:[%s7 + $0x8] sm:$0xf]
    %v2260 = vld [vmem:[%s7 + $0xc] sm:$0xf]
    %v2261 = vld [vmem:[%s7 + $0x10] sm:$0xf]
    %v2262 = vld [vmem:[%s7 + $0x14] sm:$0xf]
    %v2263 = vld [vmem:[%s7 + $0x18] sm:$0xf]
    %v2264 = vld [vmem:[%s7 + $0x1c] sm:$0xf]
    %v2265 = vld [vmem:[%s7 + $0x20] sm:$0xf]
    %v2266 = vld [vmem:[%s7 + $0x24] sm:$0xf]
    %v2267 = vld [vmem:[%s7 + $0x28] sm:$0xf]
    %v2268 = vld [vmem:[%s7 + $0x2c] sm:$0xf]
    %v2269 = vld [vmem:[%s7 + $0x30] sm:$0xf]
    %v2270 = vld [vmem:[%s7 + $0x34] sm:$0xf]
    %v2271 = vld [vmem:[%s7 + $0x38] sm:$0xf]
    %v2272 = vld [vmem:[%s7 + $0x3c] sm:$0xf]
    %v2273 = vld [vmem:[%s7 + $0x40] sm:$0xf]
    %v2274 = vld [vmem:[%s7 + $0x44] sm:$0xf]
    %v2275 = vld [vmem:[%s7 + $0x48] sm:$0xf]
    %v2276 = vld [vmem:[%s7 + $0x4c] sm:$0xf]
    %v2277 = vld [vmem:[%s7 + $0x50] sm:$0xf]
    %v2278 = vld [vmem:[%s7 + $0x54] sm:$0xf]
    %v2279 = vld [vmem:[%s7 + $0x58] sm:$0xf]
    %v2280 = vld [vmem:[%s7 + $0x5c] sm:$0xf]
    %v2281 = vld [vmem:[%s7 + $0x60] sm:$0xf]
    %v2282 = vld [vmem:[%s7 + $0x64] sm:$0xf]
    %v2283 = vld [vmem:[%s7 + $0x68] sm:$0xf]
    %v2284 = vld [vmem:[%s7 + $0x6c] sm:$0xf]
    %v2285 = vld [vmem:[%s7 + $0x70] sm:$0xf]
    %v2286 = vld [vmem:[%s7 + $0x74] sm:$0xf]
    %v2287 = vld [vmem:[%s7 + $0x78] sm:$0xf]
    %v2288 = vld [vmem:[%s7 + $0x7c] sm:$0xf]
    %v2289 = vld [vmem:[%s7 + $0x80] sm:$0xf]
    %v2290 = vld [vmem:[%s7 + $0x84] sm:$0xf]
    %v2291 = vld [vmem:[%s7 + $0x88] sm:$0xf]
    %v2292 = vld [vmem:[%s7 + $0x8c] sm:$0xf]
    %v2293 = vld [vmem:[%s7 + $0x90] sm:$0xf]
    %v2294 = vld [vmem:[%s7 + $0x94] sm:$0xf]
    %v2295 = vld [vmem:[%s7 + $0x98] sm:$0xf]
    %v2296 = vld [vmem:[%s7 + $0x9c] sm:$0xf]
    %v2297 = vld [vmem:[%s7 + $0xa0] sm:$0xf]
    %v2298 = vld [vmem:[%s7 + $0xa4] sm:$0xf]
    %v2299 = vld [vmem:[%s7 + $0xa8] sm:$0xf]
    %v2300 = vld [vmem:[%s7 + $0xac] sm:$0xf]
    %v2301 = vld [vmem:[%s7 + $0xb0] sm:$0xf]
    %v2302 = vld [vmem:[%s7 + $0xb4] sm:$0xf]
    %v2303 = vld [vmem:[%s7 + $0xb8] sm:$0xf]
    %v2304 = vld [vmem:[%s7 + $0xbc] sm:$0xf]
    %v2305 = vld [vmem:[%s7 + $0xc0] sm:$0xf]
    %v2306 = vld [vmem:[%s7 + $0xc4] sm:$0xf]
    %v2307 = vld [vmem:[%s7 + $0xc8] sm:$0xf]
    %v2308 = vld [vmem:[%s7 + $0xcc] sm:$0xf]
    %v2309 = vld [vmem:[%s7 + $0xd0] sm:$0xf]
    %v2310 = vld [vmem:[%s7 + $0xd4] sm:$0xf]
    %v2311 = vld [vmem:[%s7 + $0xd8] sm:$0xf]
    %v2312 = vld [vmem:[%s7 + $0xdc] sm:$0xf]
    %v2313 = vld [vmem:[%s7 + $0xe0] sm:$0xf]
    %v2314 = vld [vmem:[%s7 + $0xe4] sm:$0xf]
    %v2315 = vld [vmem:[%s7 + $0xe8] sm:$0xf]
    %v2316 = vld [vmem:[%s7 + $0xec] sm:$0xf]
    %v2317 = vld [vmem:[%s7 + $0xf0] sm:$0xf]
    %v2318 = vld [vmem:[%s7 + $0xf4] sm:$0xf]
    %v2319 = vld [vmem:[%s7 + $0xf8] sm:$0xf]
    %v2320 = vld [vmem:[%s7 + $0xfc] sm:$0xf]
    %v2321 = vld [vmem:[%s8] sm:$0x1]
    %v2386 = vunpack.c.l.b16 %v2257
    %v2387 = vunpack.c.l.b16 %v2258
    %v2388 = vunpack.c.l.b16 %v2259
    %v2389 = vunpack.c.l.b16 %v2260
    %v2390 = vunpack.c.l.b16 %v2261
    %v2391 = vunpack.c.l.b16 %v2262
    %v2392 = vunpack.c.l.b16 %v2263
    %v2393 = vunpack.c.l.b16 %v2264
    %v2394 = vunpack.c.l.b16 %v2265
    %v2395 = vunpack.c.l.b16 %v2266
    %v2396 = vunpack.c.l.b16 %v2267
    %v2397 = vunpack.c.l.b16 %v2268
    %v2398 = vunpack.c.l.b16 %v2269
    %v2399 = vunpack.c.l.b16 %v2270
    %v2400 = vunpack.c.l.b16 %v2271
    %v2401 = vunpack.c.l.b16 %v2272
    %v2402 = vunpack.c.l.b16 %v2273
    %v2403 = vunpack.c.l.b16 %v2274
    %v2404 = vunpack.c.l.b16 %v2275
    %v2405 = vunpack.c.l.b16 %v2276
    %v2406 = vunpack.c.l.b16 %v2277
    %v2407 = vunpack.c.l.b16 %v2278
    %v2408 = vunpack.c.l.b16 %v2279
    %v2409 = vunpack.c.l.b16 %v2280
    %v2410 = vunpack.c.l.b16 %v2281
    %v2411 = vunpack.c.l.b16 %v2282
    %v2412 = vunpack.c.l.b16 %v2283
    %v2413 = vunpack.c.l.b16 %v2284
    %v2414 = vunpack.c.l.b16 %v2285
    %v2415 = vunpack.c.l.b16 %v2286
    %v2416 = vunpack.c.l.b16 %v2287
    %v2417 = vunpack.c.l.b16 %v2288
    %v2418 = vunpack.c.l.b16 %v2289
    %v2419 = vunpack.c.l.b16 %v2290
    %v2420 = vunpack.c.l.b16 %v2291
    %v2421 = vunpack.c.l.b16 %v2292
    %v2422 = vunpack.c.l.b16 %v2293
    %v2423 = vunpack.c.l.b16 %v2294
    %v2424 = vunpack.c.l.b16 %v2295
    %v2425 = vunpack.c.l.b16 %v2296
    %v2426 = vunpack.c.l.b16 %v2297
    %v2427 = vunpack.c.l.b16 %v2298
    %v2428 = vunpack.c.l.b16 %v2299
    %v2429 = vunpack.c.l.b16 %v2300
    %v2430 = vunpack.c.l.b16 %v2301
    %v2431 = vunpack.c.l.b16 %v2302
    %v2432 = vunpack.c.l.b16 %v2303
    %v2433 = vunpack.c.l.b16 %v2304
    %v2434 = vunpack.c.l.b16 %v2305
    %v2435 = vunpack.c.l.b16 %v2306
    %v2436 = vunpack.c.l.b16 %v2307
    %v2437 = vunpack.c.l.b16 %v2308
    %v2438 = vunpack.c.l.b16 %v2309
    %v2439 = vunpack.c.l.b16 %v2310
    %v2440 = vunpack.c.l.b16 %v2311
    %v2441 = vunpack.c.l.b16 %v2312
    %v2442 = vunpack.c.l.b16 %v2313
    %v2443 = vunpack.c.l.b16 %v2314
    %v2444 = vunpack.c.l.b16 %v2315
    %v2445 = vunpack.c.l.b16 %v2316
    %v2446 = vunpack.c.l.b16 %v2317
    %v2447 = vunpack.c.l.b16 %v2318
    %v2448 = vunpack.c.l.b16 %v2319
    %v2449 = vunpack.c.l.b16 %v2320
    %v2450 = vpack.c.b16 %v2387, %v2386
    %v2451 = vpack.c.b16 %v2389, %v2388
    %v2452 = vpack.c.b16 %v2391, %v2390
    %v2453 = vpack.c.b16 %v2393, %v2392
    %v2454 = vpack.c.b16 %v2395, %v2394
    %v2455 = vpack.c.b16 %v2397, %v2396
    %v2456 = vpack.c.b16 %v2399, %v2398
    %v2457 = vpack.c.b16 %v2401, %v2400
    %v2458 = vpack.c.b16 %v2403, %v2402
    %v2459 = vpack.c.b16 %v2405, %v2404
    %v2460 = vpack.c.b16 %v2407, %v2406
    %v2461 = vpack.c.b16 %v2409, %v2408
    %v2462 = vpack.c.b16 %v2411, %v2410
    %v2463 = vpack.c.b16 %v2413, %v2412
    %v2464 = vpack.c.b16 %v2415, %v2414
    %v2465 = vpack.c.b16 %v2417, %v2416
    %v2466 = vpack.c.b16 %v2419, %v2418
    %v2467 = vpack.c.b16 %v2421, %v2420
    %v2468 = vpack.c.b16 %v2423, %v2422
    %v2469 = vpack.c.b16 %v2425, %v2424
    %v2470 = vpack.c.b16 %v2427, %v2426
    %v2471 = vpack.c.b16 %v2429, %v2428
    %v2472 = vpack.c.b16 %v2431, %v2430
    %v2473 = vpack.c.b16 %v2433, %v2432
    %v2474 = vpack.c.b16 %v2435, %v2434
    %v2475 = vpack.c.b16 %v2437, %v2436
    %v2476 = vpack.c.b16 %v2439, %v2438
    %v2477 = vpack.c.b16 %v2441, %v2440
    %v2478 = vpack.c.b16 %v2443, %v2442
    %v2479 = vpack.c.b16 %v2445, %v2444
    %v2480 = vpack.c.b16 %v2447, %v2446
    %v2481 = vpack.c.b16 %v2449, %v2448
    %2514 = vmatprep.subr.bf16.mxu0 0
    %2515 = vmatpush1.bf16.msra.mxu0 %v2450
    %2516 = vmatprep.subr.bf16.mxu0 0
    %2517 = vmatpush1.bf16.msra.mxu0 %v2451
    %2518 = vmatprep.subr.bf16.mxu0 0
    %2519 = vmatpush1.bf16.msra.mxu0 %v2452
    %2520 = vmatprep.subr.bf16.mxu0 0
    %2521 = vmatpush1.bf16.msra.mxu0 %v2453
    %2522 = vmatprep.subr.bf16.mxu0 0
    %2523 = vmatpush1.bf16.msra.mxu0 %v2454
    %2524 = vmatprep.subr.bf16.mxu0 0
    %2525 = vmatpush1.bf16.msra.mxu0 %v2455
    %2526 = vmatprep.subr.bf16.mxu0 0
    %2527 = vmatpush1.bf16.msra.mxu0 %v2456
    %2528 = vmatprep.subr.bf16.mxu0 0
    %2529 = vmatpush1.bf16.msra.mxu0 %v2457
    %2530 = vmatprep.subr.bf16.mxu0 0
    %2531 = vmatpush1.bf16.msra.mxu0 %v2458
    %2532 = vmatprep.subr.bf16.mxu0 0
    %2533 = vmatpush1.bf16.msra.mxu0 %v2459
    %2534 = vmatprep.subr.bf16.mxu0 0
    %2535 = vmatpush1.bf16.msra.mxu0 %v2460
    %2536 = vmatprep.subr.bf16.mxu0 0
    %2537 = vmatpush1.bf16.msra.mxu0 %v2461
    %2538 = vmatprep.subr.bf16.mxu0 0
    %2539 = vmatpush1.bf16.msra.mxu0 %v2462
    %2540 = vmatprep.subr.bf16.mxu0 0
    %2541 = vmatpush1.bf16.msra.mxu0 %v2463
    %2542 = vmatprep.subr.bf16.mxu0 0
    %2543 = vmatpush1.bf16.msra.mxu0 %v2464
    %2544 = vmatprep.subr.bf16.mxu0 0
    %2545 = vmatpush1.bf16.msra.mxu0 %v2465
    %2546 = vmatprep.mubr.bf16.mxu0 %v2254
    %2547 = vmatmul.mubr.bf16.gmra.mrb[0].mxu0 %v2253
    %v2548 = vpop.f32.mrb[0].mxu0
    %v2549 = vadd.f32 %v2321, %v2548
    %v2550 = vpop.f32.mrb[0].mxu0
    %v2551 = vpop.f32.mrb[0].mxu0
    %v2552 = vpop.f32.mrb[0].mxu0
    %2553 = vdwg.mxu0
    %2554 = vmatprep.subr.bf16.mxu0 0
    %2555 = vmatpush1.bf16.msra.mxu0 %v2466
    %2556 = vmatprep.subr.bf16.mxu0 0
    %2557 = vmatpush1.bf16.msra.mxu0 %v2467
    %2558 = vmatprep.subr.bf16.mxu0 0
    %2559 = vmatpush1.bf16.msra.mxu0 %v2468
    %2560 = vmatprep.subr.bf16.mxu0 0
    %2561 = vmatpush1.bf16.msra.mxu0 %v2469
    %2562 = vmatprep.subr.bf16.mxu0 0
    %2563 = vmatpush1.bf16.msra.mxu0 %v2470
    %2564 = vmatprep.subr.bf16.mxu0 0
    %2565 = vmatpush1.bf16.msra.mxu0 %v2471
    %2566 = vmatprep.subr.bf16.mxu0 0
    %2567 = vmatpush1.bf16.msra.mxu0 %v2472
    %2568 = vmatprep.subr.bf16.mxu0 0
    %2569 = vmatpush1.bf16.msra.mxu0 %v2473
    %2570 = vmatprep.subr.bf16.mxu0 0
    %2571 = vmatpush1.bf16.msra.mxu0 %v2474
    %2572 = vmatprep.subr.bf16.mxu0 0
    %2573 = vmatpush1.bf16.msra.mxu0 %v2475
    %2574 = vmatprep.subr.bf16.mxu0 0
    %2575 = vmatpush1.bf16.msra.mxu0 %v2476
    %2576 = vmatprep.subr.bf16.mxu0 0
    %2577 = vmatpush1.bf16.msra.mxu0 %v2477
    %2578 = vmatprep.subr.bf16.mxu0 0
    %2579 = vmatpush1.bf16.msra.mxu0 %v2478
    %2580 = vmatprep.subr.bf16.mxu0 0
    %2581 = vmatpush1.bf16.msra.mxu0 %v2479
    %2582 = vmatprep.subr.bf16.mxu0 0
    %2583 = vmatpush1.bf16.msra.mxu0 %v2480
    %2584 = vmatprep.subr.bf16.mxu0 0
    %2585 = vmatpush1.bf16.msra.mxu0 %v2481
    %2586 = vmatprep.mubr.bf16.mxu0 %v2256
    %2587 = vmatmul.mubr.bf16.gmra.mrb[0].mxu0 %v2255
    %v2588 = vpop.f32.mrb[0].mxu0
    %v2589 = vadd.f32 %v2549, %v2588
    %v2590 = vpop.f32.mrb[0].mxu0
    %v2591 = vpop.f32.mrb[0].mxu0
    %v2592 = vpop.f32.mrb[0].mxu0
    %2593 = vdwg.mxu0
    %v2594 = vxor.u32 %v2589, 2147483648
    %v2595 = vmul.f32 %v2594, 1.442695
    %v2596 = vpow.pop %v2595
    %v2597 = vadd.f32 %v2596, 1.0
    %v2598 = vrcp.pop %v2597
    %v2599 = vmul.f32 1.0, %v2598
    %v2600 = vpack.c.bf16 %v2599, %v2599
    %v2601 = vld [vmem:[%s9] sm:$0xff]
    %v2602 = vld [vmem:[%s9 + $0x8] sm:$0xff]
    %v2603 = vld [vmem:[%s9 + $0x10] sm:$0xff]
    %v2604 = vld [vmem:[%s9 + $0x18] sm:$0xff]
    %v2605 = vld [vmem:[%s10] sm:$0xf]
    %v2610 = vunpack.c.l.b16 %v2601
    %v2611 = vunpack.c.h.b16 %v2601
    %v2612 = vunpack.c.l.b16 %v2602
    %v2613 = vunpack.c.h.b16 %v2602
    %v2614 = vunpack.c.l.b16 %v2603
    %v2615 = vunpack.c.h.b16 %v2603
    %v2616 = vunpack.c.l.b16 %v2604
    %v2617 = vunpack.c.h.b16 %v2604
    %v2618 = vpack.c.b16 %v2614, %v2610
    %v2619 = vpack.c.b16 %v2615, %v2611
    %v2620 = vpack.c.b16 %v2616, %v2612
    %v2621 = vpack.c.b16 %v2617, %v2613
    %v2627 = vlaneseq
    %v2628 = vshrl.u32 %v2627, 7
    %v2629 = vsub.s32 0, %v2628
    %v2630 = vrot.slane %v2605, %v2629
    %v2631 = vlaneseq
    %v2632 = vshrl.u32 %v2631, 7
    %v2633 = vsub.s32 1, %v2632
    %v2634 = vrot.slane %v2605, %v2633
    %v2635 = vlaneseq
    %v2636 = vshrl.u32 %v2635, 7
    %v2637 = vsub.s32 2, %v2636
    %v2638 = vrot.slane %v2605, %v2637
    %v2639 = vlaneseq
    %v2640 = vshrl.u32 %v2639, 7
    %v2641 = vsub.s32 3, %v2640
    %v2642 = vrot.slane %v2605, %v2641
    %v2648 = vsel %vm179, %v2600, 0
    %2650 = vmatprep.subr.bf16.mxu0 %v2619
    %2651 = vmatpush1.bf16.msra.mxu0 %v2618
    %2652 = vmatprep.subr.bf16.mxu0 0
    %2653 = vmatpush1.bf16.msra.mxu0 0
    %2654 = vmatprep.subr.bf16.mxu0 0
    %2655 = vmatpush1.bf16.msra.mxu0 0
    %2656 = vmatprep.subr.bf16.mxu0 0
    %2657 = vmatpush1.bf16.msra.mxu0 0
    %2658 = vmatprep.subr.bf16.mxu0 0
    %2659 = vmatpush1.bf16.msra.mxu0 0
    %2660 = vmatprep.subr.bf16.mxu0 0
    %2661 = vmatpush1.bf16.msra.mxu0 0
    %2662 = vmatprep.subr.bf16.mxu0 0
    %2663 = vmatpush1.bf16.msra.mxu0 0
    %2664 = vmatprep.subr.bf16.mxu0 0
    %2665 = vmatpush1.bf16.msra.mxu0 0
    %2666 = vmatprep.subr.bf16.mxu0 0
    %2667 = vmatpush1.bf16.msra.mxu0 0
    %2668 = vmatprep.subr.bf16.mxu0 0
    %2669 = vmatpush1.bf16.msra.mxu0 0
    %2670 = vmatprep.subr.bf16.mxu0 0
    %2671 = vmatpush1.bf16.msra.mxu0 0
    %2672 = vmatprep.subr.bf16.mxu0 0
    %2673 = vmatpush1.bf16.msra.mxu0 0
    %2674 = vmatprep.subr.bf16.mxu0 0
    %2675 = vmatpush1.bf16.msra.mxu0 0
    %2676 = vmatprep.subr.bf16.mxu0 0
    %2677 = vmatpush1.bf16.msra.mxu0 0
    %2678 = vmatprep.subr.bf16.mxu0 0
    %2679 = vmatpush1.bf16.msra.mxu0 0
    %2680 = vmatprep.subr.bf16.mxu0 0
    %2681 = vmatpush1.bf16.msra.mxu0 0
    %2682 = vmatprep.mubr.bf16.mxu0 0
    %2683 = vmatmul.mubr.bf16.gmra.mrb[0].mxu0 %v2648
    %v2684 = vpop.f32.mrb[0].mxu0
    %v2685 = vadd.f32 %v2630, %v2684
    %v2686 = vpop.f32.mrb[0].mxu0
    %v2687 = vadd.f32 %v2634, %v2686
    %v2688 = vpop.f32.mrb[0].mxu0
    %v2689 = vpop.f32.mrb[0].mxu0
    %2690 = vdwg.mxu0
    %2691 = vmatprep.subr.bf16.mxu0 %v2621
    %2692 = vmatpush1.bf16.msra.mxu0 %v2620
    %2693 = vmatprep.subr.bf16.mxu0 0
    %2694 = vmatpush1.bf16.msra.mxu0 0
    %2695 = vmatprep.subr.bf16.mxu0 0
    %2696 = vmatpush1.bf16.msra.mxu0 0
    %2697 = vmatprep.subr.bf16.mxu0 0
    %2698 = vmatpush1.bf16.msra.mxu0 0
    %2699 = vmatprep.subr.bf16.mxu0 0
    %2700 = vmatpush1.bf16.msra.mxu0 0
    %2701 = vmatprep.subr.bf16.mxu0 0
    %2702 = vmatpush1.bf16.msra.mxu0 0
    %2703 = vmatprep.subr.bf16.mxu0 0
    %2704 = vmatpush1.bf16.msra.mxu0 0
    %2705 = vmatprep.subr.bf16.mxu0 0
    %2706 = vmatpush1.bf16.msra.mxu0 0
    %2707 = vmatprep.subr.bf16.mxu0 0
    %2708 = vmatpush1.bf16.msra.mxu0 0
    %2709 = vmatprep.subr.bf16.mxu0 0
    %2710 = vmatpush1.bf16.msra.mxu0 0
    %2711 = vmatprep.subr.bf16.mxu0 0
    %2712 = vmatpush1.bf16.msra.mxu0 0
    %2713 = vmatprep.subr.bf16.mxu0 0
    %2714 = vmatpush1.bf16.msra.mxu0 0
    %2715 = vmatprep.subr.bf16.mxu0 0
    %2716 = vmatpush1.bf16.msra.mxu0 0
    %2717 = vmatprep.subr.bf16.mxu0 0
    %2718 = vmatpush1.bf16.msra.mxu0 0
    %2719 = vmatprep.subr.bf16.mxu0 0
    %2720 = vmatpush1.bf16.msra.mxu0 0
    %2721 = vmatprep.subr.bf16.mxu0 0
    %2722 = vmatpush1.bf16.msra.mxu0 0
    %2723 = vmatprep.mubr.bf16.mxu0 0
    %2724 = vmatmul.mubr.bf16.gmra.mrb[0].mxu0 %v2648
    %v2725 = vpop.f32.mrb[0].mxu0
    %v2726 = vadd.f32 %v2638, %v2725
    %v2727 = vpop.f32.mrb[0].mxu0
    %v2728 = vadd.f32 %v2642, %v2727
    %v2729 = vpop.f32.mrb[0].mxu0
    %v2730 = vpop.f32.mrb[0].mxu0
    %2731 = vdwg.mxu0
    %v2732 = vmax.f32 %v2685, 0.0
    %v2733 = vmax.f32 %v2687, 0.0
    %v2734 = vmax.f32 %v2726, 0.0
    %v2735 = vmax.f32 %v2728, 0.0
    %v2736 = vpack.c.bf16 %v2732, %v2732
    %v2737 = vpack.c.bf16 %v2733, %v2733
    %v2738 = vpack.c.bf16 %v2734, %v2734
    %v2739 = vpack.c.bf16 %v2735, %v2735
    %v2740 = vld [vmem:[#allocation5] sm:$0xff]
    %v2741 = vld [vmem:[#allocation5 + $0x8] sm:$0xff]
    %v2742 = vld [vmem:[#allocation5 + $0x10] sm:$0xff]
    %v2743 = vld [vmem:[#allocation5 + $0x18] sm:$0xff]
    %v2744 = vld [vmem:[#allocation5 + $0x20] sm:$0xff]
    %v2745 = vld [vmem:[#allocation5 + $0x28] sm:$0xff]
    %v2746 = vld [vmem:[#allocation5 + $0x30] sm:$0xff]
    %v2747 = vld [vmem:[#allocation5 + $0x38] sm:$0xff]
    %v2748 = vld [vmem:[#allocation5 + $0x40] sm:$0xff]
    %v2749 = vld [vmem:[#allocation5 + $0x48] sm:$0xff]
    %v2750 = vld [vmem:[#allocation5 + $0x50] sm:$0xff]
    %v2751 = vld [vmem:[#allocation5 + $0x58] sm:$0xff]
    %v2752 = vld [vmem:[#allocation5 + $0x60] sm:$0xff]
    %v2753 = vld [vmem:[#allocation5 + $0x68] sm:$0xff]
    %v2754 = vld [vmem:[#allocation5 + $0x70] sm:$0xff]
    %v2755 = vld [vmem:[#allocation5 + $0x78] sm:$0xff]
    %v2756 = vld [vmem:[#allocation5 + $0x80] sm:$0xff]
    %v2757 = vld [vmem:[#allocation5 + $0x88] sm:$0xff]
    %v2758 = vld [vmem:[#allocation5 + $0x90] sm:$0xff]
    %v2759 = vld [vmem:[#allocation5 + $0x98] sm:$0xff]
    %v2760 = vld [vmem:[#allocation5 + $0xa0] sm:$0xff]
    %v2761 = vld [vmem:[#allocation5 + $0xa8] sm:$0xff]
    %v2762 = vld [vmem:[#allocation5 + $0xb0] sm:$0xff]
    %v2763 = vld [vmem:[#allocation5 + $0xb8] sm:$0xff]
    %v2764 = vld [vmem:[#allocation5 + $0xc0] sm:$0xff]
    %v2765 = vld [vmem:[#allocation5 + $0xc8] sm:$0xff]
    %v2766 = vld [vmem:[#allocation5 + $0xd0] sm:$0xff]
    %v2767 = vld [vmem:[#allocation5 + $0xd8] sm:$0xff]
    %v2768 = vld [vmem:[#allocation5 + $0xe0] sm:$0xff]
    %v2769 = vld [vmem:[#allocation5 + $0xe8] sm:$0xff]
    %v2770 = vld [vmem:[#allocation5 + $0xf0] sm:$0xff]
    %v2771 = vld [vmem:[#allocation5 + $0xf8] sm:$0xff]
    %v2772 = vld [vmem:[#allocation5 + $0x100] sm:$0xff]
    %v2773 = vld [vmem:[#allocation5 + $0x108] sm:$0xff]
    %v2774 = vld [vmem:[#allocation5 + $0x110] sm:$0xff]
    %v2775 = vld [vmem:[#allocation5 + $0x118] sm:$0xff]
    %v2776 = vld [vmem:[#allocation5 + $0x120] sm:$0xff]
    %v2777 = vld [vmem:[#allocation5 + $0x128] sm:$0xff]
    %v2778 = vld [vmem:[#allocation5 + $0x130] sm:$0xff]
    %v2779 = vld [vmem:[#allocation5 + $0x138] sm:$0xff]
    %v2780 = vld [vmem:[#allocation5 + $0x140] sm:$0xff]
    %v2781 = vld [vmem:[#allocation5 + $0x148] sm:$0xff]
    %v2782 = vld [vmem:[#allocation5 + $0x150] sm:$0xff]
    %v2783 = vld [vmem:[#allocation5 + $0x158] sm:$0xff]
    %v2784 = vld [vmem:[#allocation5 + $0x160] sm:$0xff]
    %v2785 = vld [vmem:[#allocation5 + $0x168] sm:$0xff]
    %v2786 = vld [vmem:[#allocation5 + $0x170] sm:$0xff]
    %v2787 = vld [vmem:[#allocation5 + $0x178] sm:$0xff]
    %v2788 = vld [vmem:[#allocation5 + $0x180] sm:$0xff]
    %v2789 = vld [vmem:[#allocation5 + $0x188] sm:$0xff]
    %v2790 = vld [vmem:[#allocation5 + $0x190] sm:$0xff]
    %v2791 = vld [vmem:[#allocation5 + $0x198] sm:$0xff]
    %v2792 = vld [vmem:[#allocation5 + $0x1a0] sm:$0xff]
    %v2793 = vld [vmem:[#allocation5 + $0x1a8] sm:$0xff]
    %v2794 = vld [vmem:[#allocation5 + $0x1b0] sm:$0xff]
    %v2795 = vld [vmem:[#allocation5 + $0x1b8] sm:$0xff]
    %v2796 = vld [vmem:[#allocation5 + $0x1c0] sm:$0xff]
    %v2797 = vld [vmem:[#allocation5 + $0x1c8] sm:$0xff]
    %v2798 = vld [vmem:[#allocation5 + $0x1d0] sm:$0xff]
    %v2799 = vld [vmem:[#allocation5 + $0x1d8] sm:$0xff]
    %v2800 = vld [vmem:[#allocation5 + $0x1e0] sm:$0xff]
    %v2801 = vld [vmem:[#allocation5 + $0x1e8] sm:$0xff]
    %v2802 = vld [vmem:[#allocation5 + $0x1f0] sm:$0xff]
    %v2803 = vld [vmem:[#allocation5 + $0x1f8] sm:$0xff]
    %v2804 = vld [vmem:[#allocation5 + $0x200] sm:$0xff]
    %v2805 = vld [vmem:[#allocation5 + $0x208] sm:$0xff]
    %v2806 = vld [vmem:[#allocation5 + $0x210] sm:$0xff]
    %v2807 = vld [vmem:[#allocation5 + $0x218] sm:$0xff]
    %v2808 = vld [vmem:[#allocation5 + $0x220] sm:$0xff]
    %v2809 = vld [vmem:[#allocation5 + $0x228] sm:$0xff]
    %v2810 = vld [vmem:[#allocation5 + $0x230] sm:$0xff]
    %v2811 = vld [vmem:[#allocation5 + $0x238] sm:$0xff]
    %v2812 = vld [vmem:[#allocation5 + $0x240] sm:$0xff]
    %v2813 = vld [vmem:[#allocation5 + $0x248] sm:$0xff]
    %v2814 = vld [vmem:[#allocation5 + $0x250] sm:$0xff]
    %v2815 = vld [vmem:[#allocation5 + $0x258] sm:$0xff]
    %v2816 = vld [vmem:[#allocation5 + $0x260] sm:$0xff]
    %v2817 = vld [vmem:[#allocation5 + $0x268] sm:$0xff]
    %v2818 = vld [vmem:[#allocation5 + $0x270] sm:$0xff]
    %v2819 = vld [vmem:[#allocation5 + $0x278] sm:$0xff]
    %v2820 = vld [vmem:[#allocation5 + $0x280] sm:$0xff]
    %v2821 = vld [vmem:[#allocation5 + $0x288] sm:$0xff]
    %v2822 = vld [vmem:[#allocation5 + $0x290] sm:$0xff]
    %v2823 = vld [vmem:[#allocation5 + $0x298] sm:$0xff]
    %v2824 = vld [vmem:[#allocation5 + $0x2a0] sm:$0xff]
    %v2825 = vld [vmem:[#allocation5 + $0x2a8] sm:$0xff]
    %v2826 = vld [vmem:[#allocation5 + $0x2b0] sm:$0xff]
    %v2827 = vld [vmem:[#allocation5 + $0x2b8] sm:$0xff]
    %v2828 = vld [vmem:[#allocation5 + $0x2c0] sm:$0xff]
    %v2829 = vld [vmem:[#allocation5 + $0x2c8] sm:$0xff]
    %v2830 = vld [vmem:[#allocation5 + $0x2d0] sm:$0xff]
    %v2831 = vld [vmem:[#allocation5 + $0x2d8] sm:$0xff]
    %v2832 = vld [vmem:[#allocation5 + $0x2e0] sm:$0xff]
    %v2833 = vld [vmem:[#allocation5 + $0x2e8] sm:$0xff]
    %v2834 = vld [vmem:[#allocation5 + $0x2f0] sm:$0xff]
    %v2835 = vld [vmem:[#allocation5 + $0x2f8] sm:$0xff]
    %v2836 = vld [vmem:[#allocation5 + $0x300] sm:$0xff]
    %v2837 = vld [vmem:[#allocation5 + $0x308] sm:$0xff]
    %v2838 = vld [vmem:[#allocation5 + $0x310] sm:$0xff]
    %v2839 = vld [vmem:[#allocation5 + $0x318] sm:$0xff]
    %v2840 = vld [vmem:[#allocation5 + $0x320] sm:$0xff]
    %v2841 = vld [vmem:[#allocation5 + $0x328] sm:$0xff]
    %v2842 = vld [vmem:[#allocation5 + $0x330] sm:$0xff]
    %v2843 = vld [vmem:[#allocation5 + $0x338] sm:$0xff]
    %v2844 = vld [vmem:[#allocation5 + $0x340] sm:$0xff]
    %v2845 = vld [vmem:[#allocation5 + $0x348] sm:$0xff]
    %v2846 = vld [vmem:[#allocation5 + $0x350] sm:$0xff]
    %v2847 = vld [vmem:[#allocation5 + $0x358] sm:$0xff]
    %v2848 = vld [vmem:[#allocation5 + $0x360] sm:$0xff]
    %v2849 = vld [vmem:[#allocation5 + $0x368] sm:$0xff]
    %v2850 = vld [vmem:[#allocation5 + $0x370] sm:$0xff]
    %v2851 = vld [vmem:[#allocation5 + $0x378] sm:$0xff]
    %v2852 = vld [vmem:[#allocation5 + $0x380] sm:$0xff]
    %v2853 = vld [vmem:[#allocation5 + $0x388] sm:$0xff]
    %v2854 = vld [vmem:[#allocation5 + $0x390] sm:$0xff]
    %v2855 = vld [vmem:[#allocation5 + $0x398] sm:$0xff]
    %v2856 = vld [vmem:[#allocation5 + $0x3a0] sm:$0xff]
    %v2857 = vld [vmem:[#allocation5 + $0x3a8] sm:$0xff]
    %v2858 = vld [vmem:[#allocation5 + $0x3b0] sm:$0xff]
    %v2859 = vld [vmem:[#allocation5 + $0x3b8] sm:$0xff]
    %v2860 = vld [vmem:[#allocation5 + $0x3c0] sm:$0xff]
    %v2861 = vld [vmem:[#allocation5 + $0x3c8] sm:$0xff]
    %v2862 = vld [vmem:[#allocation5 + $0x3d0] sm:$0xff]
    %v2863 = vld [vmem:[#allocation5 + $0x3d8] sm:$0xff]
    %v2864 = vld [vmem:[#allocation5 + $0x3e0] sm:$0xff]
    %v2865 = vld [vmem:[#allocation5 + $0x3e8] sm:$0xff]
    %v2866 = vld [vmem:[#allocation5 + $0x3f0] sm:$0xff]
    %v2867 = vld [vmem:[#allocation5 + $0x3f8] sm:$0xff]
    %v2868 = vld [vmem:[#allocation5 + $0x400] sm:$0xff]
    %v2869 = vld [vmem:[#allocation5 + $0x408] sm:$0xff]
    %v2870 = vld [vmem:[#allocation5 + $0x410] sm:$0xff]
    %v2871 = vld [vmem:[#allocation5 + $0x418] sm:$0xff]
    %v2872 = vld [vmem:[#allocation5 + $0x420] sm:$0xff]
    %v2873 = vld [vmem:[#allocation5 + $0x428] sm:$0xff]
    %v2874 = vld [vmem:[#allocation5 + $0x430] sm:$0xff]
    %v2875 = vld [vmem:[#allocation5 + $0x438] sm:$0xff]
    %v2876 = vld [vmem:[#allocation5 + $0x440] sm:$0xff]
    %v2877 = vld [vmem:[#allocation5 + $0x448] sm:$0xff]
    %v2878 = vld [vmem:[#allocation5 + $0x450] sm:$0xff]
    %v2879 = vld [vmem:[#allocation5 + $0x458] sm:$0xff]
    %v2880 = vld [vmem:[#allocation5 + $0x460] sm:$0xff]
    %v2881 = vld [vmem:[#allocation5 + $0x468] sm:$0xff]
    %v2882 = vld [vmem:[#allocation5 + $0x470] sm:$0xff]
    %v2883 = vld [vmem:[#allocation5 + $0x478] sm:$0xff]
    %v2884 = vld [vmem:[#allocation5 + $0x480] sm:$0xff]
    %v2885 = vld [vmem:[#allocation5 + $0x488] sm:$0xff]
    %v2886 = vld [vmem:[#allocation5 + $0x490] sm:$0xff]
    %v2887 = vld [vmem:[#allocation5 + $0x498] sm:$0xff]
    %v2888 = vld [vmem:[#allocation5 + $0x4a0] sm:$0xff]
    %v2889 = vld [vmem:[#allocation5 + $0x4a8] sm:$0xff]
    %v2890 = vld [vmem:[#allocation5 + $0x4b0] sm:$0xff]
    %v2891 = vld [vmem:[#allocation5 + $0x4b8] sm:$0xff]
    %v2892 = vld [vmem:[#allocation5 + $0x4c0] sm:$0xff]
    %v2893 = vld [vmem:[#allocation5 + $0x4c8] sm:$0xff]
    %v2894 = vld [vmem:[#allocation5 + $0x4d0] sm:$0xff]
    %v2895 = vld [vmem:[#allocation5 + $0x4d8] sm:$0xff]
    %v2896 = vld [vmem:[#allocation5 + $0x4e0] sm:$0xff]
    %v2897 = vld [vmem:[#allocation5 + $0x4e8] sm:$0xff]
    %v2898 = vld [vmem:[#allocation5 + $0x4f0] sm:$0xff]
    %v2899 = vld [vmem:[#allocation5 + $0x4f8] sm:$0xff]
    %v2900 = vld [vmem:[#allocation5 + $0x500] sm:$0xff]
    %v2901 = vld [vmem:[#allocation5 + $0x508] sm:$0xff]
    %v2902 = vld [vmem:[#allocation5 + $0x510] sm:$0xff]
    %v2903 = vld [vmem:[#allocation5 + $0x518] sm:$0xff]
    %v2904 = vld [vmem:[#allocation5 + $0x520] sm:$0xff]
    %v2905 = vld [vmem:[#allocation5 + $0x528] sm:$0xff]
    %v2906 = vld [vmem:[#allocation5 + $0x530] sm:$0xff]
    %v2907 = vld [vmem:[#allocation5 + $0x538] sm:$0xff]
    %v2908 = vld [vmem:[#allocation5 + $0x540] sm:$0xff]
    %v2909 = vld [vmem:[#allocation5 + $0x548] sm:$0xff]
    %v2910 = vld [vmem:[#allocation5 + $0x550] sm:$0xff]
    %v2911 = vld [vmem:[#allocation5 + $0x558] sm:$0xff]
    %v2912 = vld [vmem:[#allocation5 + $0x560] sm:$0xff]
    %v2913 = vld [vmem:[#allocation5 + $0x568] sm:$0xff]
    %v2914 = vld [vmem:[#allocation5 + $0x570] sm:$0xff]
    %v2915 = vld [vmem:[#allocation5 + $0x578] sm:$0xff]
    %v2916 = vld [vmem:[#allocation5 + $0x580] sm:$0xff]
    %v2917 = vld [vmem:[#allocation5 + $0x588] sm:$0xff]
    %v2918 = vld [vmem:[#allocation5 + $0x590] sm:$0xff]
    %v2919 = vld [vmem:[#allocation5 + $0x598] sm:$0xff]
    %v2920 = vld [vmem:[#allocation5 + $0x5a0] sm:$0xff]
    %v2921 = vld [vmem:[#allocation5 + $0x5a8] sm:$0xff]
    %v2922 = vld [vmem:[#allocation5 + $0x5b0] sm:$0xff]
    %v2923 = vld [vmem:[#allocation5 + $0x5b8] sm:$0xff]
    %v2924 = vld [vmem:[#allocation5 + $0x5c0] sm:$0xff]
    %v2925 = vld [vmem:[#allocation5 + $0x5c8] sm:$0xff]
    %v2926 = vld [vmem:[#allocation5 + $0x5d0] sm:$0xff]
    %v2927 = vld [vmem:[#allocation5 + $0x5d8] sm:$0xff]
    %v2928 = vld [vmem:[#allocation5 + $0x5e0] sm:$0xff]
    %v2929 = vld [vmem:[#allocation5 + $0x5e8] sm:$0xff]
    %v2930 = vld [vmem:[#allocation5 + $0x5f0] sm:$0xff]
    %v2931 = vld [vmem:[#allocation5 + $0x5f8] sm:$0xff]
    %v2932 = vld [vmem:[#allocation5 + $0x600] sm:$0xff]
    %v2933 = vld [vmem:[#allocation5 + $0x608] sm:$0xff]
    %v2934 = vld [vmem:[#allocation5 + $0x610] sm:$0xff]
    %v2935 = vld [vmem:[#allocation5 + $0x618] sm:$0xff]
    %v2936 = vld [vmem:[#allocation5 + $0x620] sm:$0xff]
    %v2937 = vld [vmem:[#allocation5 + $0x628] sm:$0xff]
    %v2938 = vld [vmem:[#allocation5 + $0x630] sm:$0xff]
    %v2939 = vld [vmem:[#allocation5 + $0x638] sm:$0xff]
    %v2940 = vld [vmem:[#allocation5 + $0x640] sm:$0xff]
    %v2941 = vld [vmem:[#allocation5 + $0x648] sm:$0xff]
    %v2942 = vld [vmem:[#allocation5 + $0x650] sm:$0xff]
    %v2943 = vld [vmem:[#allocation5 + $0x658] sm:$0xff]
    %v2944 = vld [vmem:[#allocation5 + $0x660] sm:$0xff]
    %v2945 = vld [vmem:[#allocation5 + $0x668] sm:$0xff]
    %v2946 = vld [vmem:[#allocation5 + $0x670] sm:$0xff]
    %v2947 = vld [vmem:[#allocation5 + $0x678] sm:$0xff]
    %v2948 = vld [vmem:[#allocation5 + $0x680] sm:$0xff]
    %v2949 = vld [vmem:[#allocation5 + $0x688] sm:$0xff]
    %v2950 = vld [vmem:[#allocation5 + $0x690] sm:$0xff]
    %v2951 = vld [vmem:[#allocation5 + $0x698] sm:$0xff]
    %v2952 = vld [vmem:[#allocation5 + $0x6a0] sm:$0xff]
    %v2953 = vld [vmem:[#allocation5 + $0x6a8] sm:$0xff]
    %v2954 = vld [vmem:[#allocation5 + $0x6b0] sm:$0xff]
    %v2955 = vld [vmem:[#allocation5 + $0x6b8] sm:$0xff]
    %v2956 = vld [vmem:[#allocation5 + $0x6c0] sm:$0xff]
    %v2957 = vld [vmem:[#allocation5 + $0x6c8] sm:$0xff]
    %v2958 = vld [vmem:[#allocation5 + $0x6d0] sm:$0xff]
    %v2959 = vld [vmem:[#allocation5 + $0x6d8] sm:$0xff]
    %v2960 = vld [vmem:[#allocation5 + $0x6e0] sm:$0xff]
    %v2961 = vld [vmem:[#allocation5 + $0x6e8] sm:$0xff]
    %v2962 = vld [vmem:[#allocation5 + $0x6f0] sm:$0xff]
    %v2963 = vld [vmem:[#allocation5 + $0x6f8] sm:$0xff]
    %v2964 = vld [vmem:[#allocation5 + $0x700] sm:$0xff]
    %v2965 = vld [vmem:[#allocation5 + $0x708] sm:$0xff]
    %v2966 = vld [vmem:[#allocation5 + $0x710] sm:$0xff]
    %v2967 = vld [vmem:[#allocation5 + $0x718] sm:$0xff]
    %v2968 = vld [vmem:[#allocation5 + $0x720] sm:$0xff]
    %v2969 = vld [vmem:[#allocation5 + $0x728] sm:$0xff]
    %v2970 = vld [vmem:[#allocation5 + $0x730] sm:$0xff]
    %v2971 = vld [vmem:[#allocation5 + $0x738] sm:$0xff]
    %v2972 = vld [vmem:[#allocation5 + $0x740] sm:$0xff]
    %v2973 = vld [vmem:[#allocation5 + $0x748] sm:$0xff]
    %v2974 = vld [vmem:[#allocation5 + $0x750] sm:$0xff]
    %v2975 = vld [vmem:[#allocation5 + $0x758] sm:$0xff]
    %v2976 = vld [vmem:[#allocation5 + $0x760] sm:$0xff]
    %v2977 = vld [vmem:[#allocation5 + $0x768] sm:$0xff]
    %v2978 = vld [vmem:[#allocation5 + $0x770] sm:$0xff]
    %v2979 = vld [vmem:[#allocation5 + $0x778] sm:$0xff]
    %v2980 = vld [vmem:[#allocation5 + $0x780] sm:$0xff]
    %v2981 = vld [vmem:[#allocation5 + $0x788] sm:$0xff]
    %v2982 = vld [vmem:[#allocation5 + $0x790] sm:$0xff]
    %v2983 = vld [vmem:[#allocation5 + $0x798] sm:$0xff]
    %v2984 = vld [vmem:[#allocation5 + $0x7a0] sm:$0xff]
    %v2985 = vld [vmem:[#allocation5 + $0x7a8] sm:$0xff]
    %v2986 = vld [vmem:[#allocation5 + $0x7b0] sm:$0xff]
    %v2987 = vld [vmem:[#allocation5 + $0x7b8] sm:$0xff]
    %v2988 = vld [vmem:[#allocation5 + $0x7c0] sm:$0xff]
    %v2989 = vld [vmem:[#allocation5 + $0x7c8] sm:$0xff]
    %v2990 = vld [vmem:[#allocation5 + $0x7d0] sm:$0xff]
    %v2991 = vld [vmem:[#allocation5 + $0x7d8] sm:$0xff]
    %v2992 = vld [vmem:[#allocation5 + $0x7e0] sm:$0xff]
    %v2993 = vld [vmem:[#allocation5 + $0x7e8] sm:$0xff]
    %v2994 = vld [vmem:[#allocation5 + $0x7f0] sm:$0xff]
    %v2995 = vld [vmem:[#allocation5 + $0x7f8] sm:$0xff]
    %v2996 = vld [vmem:[%s12] sm:$0xff]
    %v3253 = vunpack.c.l.b16 %v2740
    %v3254 = vunpack.c.h.b16 %v2740
    %v3255 = vunpack.c.l.b16 %v2741
    %v3256 = vunpack.c.h.b16 %v2741
    %v3257 = vunpack.c.l.b16 %v2742
    %v3258 = vunpack.c.h.b16 %v2742
    %v3259 = vunpack.c.l.b16 %v2743
    %v3260 = vunpack.c.h.b16 %v2743
    %v3261 = vunpack.c.l.b16 %v2744
    %v3262 = vunpack.c.h.b16 %v2744
    %v3263 = vunpack.c.l.b16 %v2745
    %v3264 = vunpack.c.h.b16 %v2745
    %v3265 = vunpack.c.l.b16 %v2746
    %v3266 = vunpack.c.h.b16 %v2746
    %v3267 = vunpack.c.l.b16 %v2747
    %v3268 = vunpack.c.h.b16 %v2747
    %v3269 = vunpack.c.l.b16 %v2748
    %v3270 = vunpack.c.h.b16 %v2748
    %v3271 = vunpack.c.l.b16 %v2749
    %v3272 = vunpack.c.h.b16 %v2749
    %v3273 = vunpack.c.l.b16 %v2750
    %v3274 = vunpack.c.h.b16 %v2750
    %v3275 = vunpack.c.l.b16 %v2751
    %v3276 = vunpack.c.h.b16 %v2751
    %v3277 = vunpack.c.l.b16 %v2752
    %v3278 = vunpack.c.h.b16 %v2752
    %v3279 = vunpack.c.l.b16 %v2753
    %v3280 = vunpack.c.h.b16 %v2753
    %v3281 = vunpack.c.l.b16 %v2754
    %v3282 = vunpack.c.h.b16 %v2754
    %v3283 = vunpack.c.l.b16 %v2755
    %v3284 = vunpack.c.h.b16 %v2755
    %v3285 = vunpack.c.l.b16 %v2756
    %v3286 = vunpack.c.h.b16 %v2756
    %v3287 = vunpack.c.l.b16 %v2757
    %v3288 = vunpack.c.h.b16 %v2757
    %v3289 = vunpack.c.l.b16 %v2758
    %v3290 = vunpack.c.h.b16 %v2758
    %v3291 = vunpack.c.l.b16 %v2759
    %v3292 = vunpack.c.h.b16 %v2759
    %v3293 = vunpack.c.l.b16 %v2760
    %v3294 = vunpack.c.h.b16 %v2760
    %v3295 = vunpack.c.l.b16 %v2761
    %v3296 = vunpack.c.h.b16 %v2761
    %v3297 = vunpack.c.l.b16 %v2762
    %v3298 = vunpack.c.h.b16 %v2762
    %v3299 = vunpack.c.l.b16 %v2763
    %v3300 = vunpack.c.h.b16 %v2763
    %v3301 = vunpack.c.l.b16 %v2764
    %v3302 = vunpack.c.h.b16 %v2764
    %v3303 = vunpack.c.l.b16 %v2765
    %v3304 = vunpack.c.h.b16 %v2765
    %v3305 = vunpack.c.l.b16 %v2766
    %v3306 = vunpack.c.h.b16 %v2766
    %v3307 = vunpack.c.l.b16 %v2767
    %v3308 = vunpack.c.h.b16 %v2767
    %v3309 = vunpack.c.l.b16 %v2768
    %v3310 = vunpack.c.h.b16 %v2768
    %v3311 = vunpack.c.l.b16 %v2769
    %v3312 = vunpack.c.h.b16 %v2769
    %v3313 = vunpack.c.l.b16 %v2770
    %v3314 = vunpack.c.h.b16 %v2770
    %v3315 = vunpack.c.l.b16 %v2771
    %v3316 = vunpack.c.h.b16 %v2771
    %v3317 = vunpack.c.l.b16 %v2772
    %v3318 = vunpack.c.h.b16 %v2772
    %v3319 = vunpack.c.l.b16 %v2773
    %v3320 = vunpack.c.h.b16 %v2773
    %v3321 = vunpack.c.l.b16 %v2774
    %v3322 = vunpack.c.h.b16 %v2774
    %v3323 = vunpack.c.l.b16 %v2775
    %v3324 = vunpack.c.h.b16 %v2775
    %v3325 = vunpack.c.l.b16 %v2776
    %v3326 = vunpack.c.h.b16 %v2776
    %v3327 = vunpack.c.l.b16 %v2777
    %v3328 = vunpack.c.h.b16 %v2777
    %v3329 = vunpack.c.l.b16 %v2778
    %v3330 = vunpack.c.h.b16 %v2778
    %v3331 = vunpack.c.l.b16 %v2779
    %v3332 = vunpack.c.h.b16 %v2779
    %v3333 = vunpack.c.l.b16 %v2780
    %v3334 = vunpack.c.h.b16 %v2780
    %v3335 = vunpack.c.l.b16 %v2781
    %v3336 = vunpack.c.h.b16 %v2781
    %v3337 = vunpack.c.l.b16 %v2782
    %v3338 = vunpack.c.h.b16 %v2782
    %v3339 = vunpack.c.l.b16 %v2783
    %v3340 = vunpack.c.h.b16 %v2783
    %v3341 = vunpack.c.l.b16 %v2784
    %v3342 = vunpack.c.h.b16 %v2784
    %v3343 = vunpack.c.l.b16 %v2785
    %v3344 = vunpack.c.h.b16 %v2785
    %v3345 = vunpack.c.l.b16 %v2786
    %v3346 = vunpack.c.h.b16 %v2786
    %v3347 = vunpack.c.l.b16 %v2787
    %v3348 = vunpack.c.h.b16 %v2787
    %v3349 = vunpack.c.l.b16 %v2788
    %v3350 = vunpack.c.h.b16 %v2788
    %v3351 = vunpack.c.l.b16 %v2789
    %v3352 = vunpack.c.h.b16 %v2789
    %v3353 = vunpack.c.l.b16 %v2790
    %v3354 = vunpack.c.h.b16 %v2790
    %v3355 = vunpack.c.l.b16 %v2791
    %v3356 = vunpack.c.h.b16 %v2791
    %v3357 = vunpack.c.l.b16 %v2792
    %v3358 = vunpack.c.h.b16 %v2792
    %v3359 = vunpack.c.l.b16 %v2793
    %v3360 = vunpack.c.h.b16 %v2793
    %v3361 = vunpack.c.l.b16 %v2794
    %v3362 = vunpack.c.h.b16 %v2794
    %v3363 = vunpack.c.l.b16 %v2795
    %v3364 = vunpack.c.h.b16 %v2795
    %v3365 = vunpack.c.l.b16 %v2796
    %v3366 = vunpack.c.h.b16 %v2796
    %v3367 = vunpack.c.l.b16 %v2797
    %v3368 = vunpack.c.h.b16 %v2797
    %v3369 = vunpack.c.l.b16 %v2798
    %v3370 = vunpack.c.h.b16 %v2798
    %v3371 = vunpack.c.l.b16 %v2799
    %v3372 = vunpack.c.h.b16 %v2799
    %v3373 = vunpack.c.l.b16 %v2800
    %v3374 = vunpack.c.h.b16 %v2800
    %v3375 = vunpack.c.l.b16 %v2801
    %v3376 = vunpack.c.h.b16 %v2801
    %v3377 = vunpack.c.l.b16 %v2802
    %v3378 = vunpack.c.h.b16 %v2802
    %v3379 = vunpack.c.l.b16 %v2803
    %v3380 = vunpack.c.h.b16 %v2803
    %v3381 = vunpack.c.l.b16 %v2804
    %v3382 = vunpack.c.h.b16 %v2804
    %v3383 = vunpack.c.l.b16 %v2805
    %v3384 = vunpack.c.h.b16 %v2805
    %v3385 = vunpack.c.l.b16 %v2806
    %v3386 = vunpack.c.h.b16 %v2806
    %v3387 = vunpack.c.l.b16 %v2807
    %v3388 = vunpack.c.h.b16 %v2807
    %v3389 = vunpack.c.l.b16 %v2808
    %v3390 = vunpack.c.h.b16 %v2808
    %v3391 = vunpack.c.l.b16 %v2809
    %v3392 = vunpack.c.h.b16 %v2809
    %v3393 = vunpack.c.l.b16 %v2810
    %v3394 = vunpack.c.h.b16 %v2810
    %v3395 = vunpack.c.l.b16 %v2811
    %v3396 = vunpack.c.h.b16 %v2811
    %v3397 = vunpack.c.l.b16 %v2812
    %v3398 = vunpack.c.h.b16 %v2812
    %v3399 = vunpack.c.l.b16 %v2813
    %v3400 = vunpack.c.h.b16 %v2813
    %v3401 = vunpack.c.l.b16 %v2814
    %v3402 = vunpack.c.h.b16 %v2814
    %v3403 = vunpack.c.l.b16 %v2815
    %v3404 = vunpack.c.h.b16 %v2815
    %v3405 = vunpack.c.l.b16 %v2816
    %v3406 = vunpack.c.h.b16 %v2816
    %v3407 = vunpack.c.l.b16 %v2817
    %v3408 = vunpack.c.h.b16 %v2817
    %v3409 = vunpack.c.l.b16 %v2818
    %v3410 = vunpack.c.h.b16 %v2818
    %v3411 = vunpack.c.l.b16 %v2819
    %v3412 = vunpack.c.h.b16 %v2819
    %v3413 = vunpack.c.l.b16 %v2820
    %v3414 = vunpack.c.h.b16 %v2820
    %v3415 = vunpack.c.l.b16 %v2821
    %v3416 = vunpack.c.h.b16 %v2821
    %v3417 = vunpack.c.l.b16 %v2822
    %v3418 = vunpack.c.h.b16 %v2822
    %v3419 = vunpack.c.l.b16 %v2823
    %v3420 = vunpack.c.h.b16 %v2823
    %v3421 = vunpack.c.l.b16 %v2824
    %v3422 = vunpack.c.h.b16 %v2824
    %v3423 = vunpack.c.l.b16 %v2825
    %v3424 = vunpack.c.h.b16 %v2825
    %v3425 = vunpack.c.l.b16 %v2826
    %v3426 = vunpack.c.h.b16 %v2826
    %v3427 = vunpack.c.l.b16 %v2827
    %v3428 = vunpack.c.h.b16 %v2827
    %v3429 = vunpack.c.l.b16 %v2828
    %v3430 = vunpack.c.h.b16 %v2828
    %v3431 = vunpack.c.l.b16 %v2829
    %v3432 = vunpack.c.h.b16 %v2829
    %v3433 = vunpack.c.l.b16 %v2830
    %v3434 = vunpack.c.h.b16 %v2830
    %v3435 = vunpack.c.l.b16 %v2831
    %v3436 = vunpack.c.h.b16 %v2831
    %v3437 = vunpack.c.l.b16 %v2832
    %v3438 = vunpack.c.h.b16 %v2832
    %v3439 = vunpack.c.l.b16 %v2833
    %v3440 = vunpack.c.h.b16 %v2833
    %v3441 = vunpack.c.l.b16 %v2834
    %v3442 = vunpack.c.h.b16 %v2834
    %v3443 = vunpack.c.l.b16 %v2835
    %v3444 = vunpack.c.h.b16 %v2835
    %v3445 = vunpack.c.l.b16 %v2836
    %v3446 = vunpack.c.h.b16 %v2836
    %v3447 = vunpack.c.l.b16 %v2837
    %v3448 = vunpack.c.h.b16 %v2837
    %v3449 = vunpack.c.l.b16 %v2838
    %v3450 = vunpack.c.h.b16 %v2838
    %v3451 = vunpack.c.l.b16 %v2839
    %v3452 = vunpack.c.h.b16 %v2839
    %v3453 = vunpack.c.l.b16 %v2840
    %v3454 = vunpack.c.h.b16 %v2840
    %v3455 = vunpack.c.l.b16 %v2841
    %v3456 = vunpack.c.h.b16 %v2841
    %v3457 = vunpack.c.l.b16 %v2842
    %v3458 = vunpack.c.h.b16 %v2842
    %v3459 = vunpack.c.l.b16 %v2843
    %v3460 = vunpack.c.h.b16 %v2843
    %v3461 = vunpack.c.l.b16 %v2844
    %v3462 = vunpack.c.h.b16 %v2844
    %v3463 = vunpack.c.l.b16 %v2845
    %v3464 = vunpack.c.h.b16 %v2845
    %v3465 = vunpack.c.l.b16 %v2846
    %v3466 = vunpack.c.h.b16 %v2846
    %v3467 = vunpack.c.l.b16 %v2847
    %v3468 = vunpack.c.h.b16 %v2847
    %v3469 = vunpack.c.l.b16 %v2848
    %v3470 = vunpack.c.h.b16 %v2848
    %v3471 = vunpack.c.l.b16 %v2849
    %v3472 = vunpack.c.h.b16 %v2849
    %v3473 = vunpack.c.l.b16 %v2850
    %v3474 = vunpack.c.h.b16 %v2850
    %v3475 = vunpack.c.l.b16 %v2851
    %v3476 = vunpack.c.h.b16 %v2851
    %v3477 = vunpack.c.l.b16 %v2852
    %v3478 = vunpack.c.h.b16 %v2852
    %v3479 = vunpack.c.l.b16 %v2853
    %v3480 = vunpack.c.h.b16 %v2853
    %v3481 = vunpack.c.l.b16 %v2854
    %v3482 = vunpack.c.h.b16 %v2854
    %v3483 = vunpack.c.l.b16 %v2855
    %v3484 = vunpack.c.h.b16 %v2855
    %v3485 = vunpack.c.l.b16 %v2856
    %v3486 = vunpack.c.h.b16 %v2856
    %v3487 = vunpack.c.l.b16 %v2857
    %v3488 = vunpack.c.h.b16 %v2857
    %v3489 = vunpack.c.l.b16 %v2858
    %v3490 = vunpack.c.h.b16 %v2858
    %v3491 = vunpack.c.l.b16 %v2859
    %v3492 = vunpack.c.h.b16 %v2859
    %v3493 = vunpack.c.l.b16 %v2860
    %v3494 = vunpack.c.h.b16 %v2860
    %v3495 = vunpack.c.l.b16 %v2861
    %v3496 = vunpack.c.h.b16 %v2861
    %v3497 = vunpack.c.l.b16 %v2862
    %v3498 = vunpack.c.h.b16 %v2862
    %v3499 = vunpack.c.l.b16 %v2863
    %v3500 = vunpack.c.h.b16 %v2863
    %v3501 = vunpack.c.l.b16 %v2864
    %v3502 = vunpack.c.h.b16 %v2864
    %v3503 = vunpack.c.l.b16 %v2865
    %v3504 = vunpack.c.h.b16 %v2865
    %v3505 = vunpack.c.l.b16 %v2866
    %v3506 = vunpack.c.h.b16 %v2866
    %v3507 = vunpack.c.l.b16 %v2867
    %v3508 = vunpack.c.h.b16 %v2867
    %v3509 = vunpack.c.l.b16 %v2868
    %v3510 = vunpack.c.h.b16 %v2868
    %v3511 = vunpack.c.l.b16 %v2869
    %v3512 = vunpack.c.h.b16 %v2869
    %v3513 = vunpack.c.l.b16 %v2870
    %v3514 = vunpack.c.h.b16 %v2870
    %v3515 = vunpack.c.l.b16 %v2871
    %v3516 = vunpack.c.h.b16 %v2871
    %v3517 = vunpack.c.l.b16 %v2872
    %v3518 = vunpack.c.h.b16 %v2872
    %v3519 = vunpack.c.l.b16 %v2873
    %v3520 = vunpack.c.h.b16 %v2873
    %v3521 = vunpack.c.l.b16 %v2874
    %v3522 = vunpack.c.h.b16 %v2874
    %v3523 = vunpack.c.l.b16 %v2875
    %v3524 = vunpack.c.h.b16 %v2875
    %v3525 = vunpack.c.l.b16 %v2876
    %v3526 = vunpack.c.h.b16 %v2876
    %v3527 = vunpack.c.l.b16 %v2877
    %v3528 = vunpack.c.h.b16 %v2877
    %v3529 = vunpack.c.l.b16 %v2878
    %v3530 = vunpack.c.h.b16 %v2878
    %v3531 = vunpack.c.l.b16 %v2879
    %v3532 = vunpack.c.h.b16 %v2879
    %v3533 = vunpack.c.l.b16 %v2880
    %v3534 = vunpack.c.h.b16 %v2880
    %v3535 = vunpack.c.l.b16 %v2881
    %v3536 = vunpack.c.h.b16 %v2881
    %v3537 = vunpack.c.l.b16 %v2882
    %v3538 = vunpack.c.h.b16 %v2882
    %v3539 = vunpack.c.l.b16 %v2883
    %v3540 = vunpack.c.h.b16 %v2883
    %v3541 = vunpack.c.l.b16 %v2884
    %v3542 = vunpack.c.h.b16 %v2884
    %v3543 = vunpack.c.l.b16 %v2885
    %v3544 = vunpack.c.h.b16 %v2885
    %v3545 = vunpack.c.l.b16 %v2886
    %v3546 = vunpack.c.h.b16 %v2886
    %v3547 = vunpack.c.l.b16 %v2887
    %v3548 = vunpack.c.h.b16 %v2887
    %v3549 = vunpack.c.l.b16 %v2888
    %v3550 = vunpack.c.h.b16 %v2888
    %v3551 = vunpack.c.l.b16 %v2889
    %v3552 = vunpack.c.h.b16 %v2889
    %v3553 = vunpack.c.l.b16 %v2890
    %v3554 = vunpack.c.h.b16 %v2890
    %v3555 = vunpack.c.l.b16 %v2891
    %v3556 = vunpack.c.h.b16 %v2891
    %v3557 = vunpack.c.l.b16 %v2892
    %v3558 = vunpack.c.h.b16 %v2892
    %v3559 = vunpack.c.l.b16 %v2893
    %v3560 = vunpack.c.h.b16 %v2893
    %v3561 = vunpack.c.l.b16 %v2894
    %v3562 = vunpack.c.h.b16 %v2894
    %v3563 = vunpack.c.l.b16 %v2895
    %v3564 = vunpack.c.h.b16 %v2895
    %v3565 = vunpack.c.l.b16 %v2896
    %v3566 = vunpack.c.h.b16 %v2896
    %v3567 = vunpack.c.l.b16 %v2897
    %v3568 = vunpack.c.h.b16 %v2897
    %v3569 = vunpack.c.l.b16 %v2898
    %v3570 = vunpack.c.h.b16 %v2898
    %v3571 = vunpack.c.l.b16 %v2899
    %v3572 = vunpack.c.h.b16 %v2899
    %v3573 = vunpack.c.l.b16 %v2900
    %v3574 = vunpack.c.h.b16 %v2900
    %v3575 = vunpack.c.l.b16 %v2901
    %v3576 = vunpack.c.h.b16 %v2901
    %v3577 = vunpack.c.l.b16 %v2902
    %v3578 = vunpack.c.h.b16 %v2902
    %v3579 = vunpack.c.l.b16 %v2903
    %v3580 = vunpack.c.h.b16 %v2903
    %v3581 = vunpack.c.l.b16 %v2904
    %v3582 = vunpack.c.h.b16 %v2904
    %v3583 = vunpack.c.l.b16 %v2905
    %v3584 = vunpack.c.h.b16 %v2905
    %v3585 = vunpack.c.l.b16 %v2906
    %v3586 = vunpack.c.h.b16 %v2906
    %v3587 = vunpack.c.l.b16 %v2907
    %v3588 = vunpack.c.h.b16 %v2907
    %v3589 = vunpack.c.l.b16 %v2908
    %v3590 = vunpack.c.h.b16 %v2908
    %v3591 = vunpack.c.l.b16 %v2909
    %v3592 = vunpack.c.h.b16 %v2909
    %v3593 = vunpack.c.l.b16 %v2910
    %v3594 = vunpack.c.h.b16 %v2910
    %v3595 = vunpack.c.l.b16 %v2911
    %v3596 = vunpack.c.h.b16 %v2911
    %v3597 = vunpack.c.l.b16 %v2912
    %v3598 = vunpack.c.h.b16 %v2912
    %v3599 = vunpack.c.l.b16 %v2913
    %v3600 = vunpack.c.h.b16 %v2913
    %v3601 = vunpack.c.l.b16 %v2914
    %v3602 = vunpack.c.h.b16 %v2914
    %v3603 = vunpack.c.l.b16 %v2915
    %v3604 = vunpack.c.h.b16 %v2915
    %v3605 = vunpack.c.l.b16 %v2916
    %v3606 = vunpack.c.h.b16 %v2916
    %v3607 = vunpack.c.l.b16 %v2917
    %v3608 = vunpack.c.h.b16 %v2917
    %v3609 = vunpack.c.l.b16 %v2918
    %v3610 = vunpack.c.h.b16 %v2918
    %v3611 = vunpack.c.l.b16 %v2919
    %v3612 = vunpack.c.h.b16 %v2919
    %v3613 = vunpack.c.l.b16 %v2920
    %v3614 = vunpack.c.h.b16 %v2920
    %v3615 = vunpack.c.l.b16 %v2921
    %v3616 = vunpack.c.h.b16 %v2921
    %v3617 = vunpack.c.l.b16 %v2922
    %v3618 = vunpack.c.h.b16 %v2922
    %v3619 = vunpack.c.l.b16 %v2923
    %v3620 = vunpack.c.h.b16 %v2923
    %v3621 = vunpack.c.l.b16 %v2924
    %v3622 = vunpack.c.h.b16 %v2924
    %v3623 = vunpack.c.l.b16 %v2925
    %v3624 = vunpack.c.h.b16 %v2925
    %v3625 = vunpack.c.l.b16 %v2926
    %v3626 = vunpack.c.h.b16 %v2926
    %v3627 = vunpack.c.l.b16 %v2927
    %v3628 = vunpack.c.h.b16 %v2927
    %v3629 = vunpack.c.l.b16 %v2928
    %v3630 = vunpack.c.h.b16 %v2928
    %v3631 = vunpack.c.l.b16 %v2929
    %v3632 = vunpack.c.h.b16 %v2929
    %v3633 = vunpack.c.l.b16 %v2930
    %v3634 = vunpack.c.h.b16 %v2930
    %v3635 = vunpack.c.l.b16 %v2931
    %v3636 = vunpack.c.h.b16 %v2931
    %v3637 = vunpack.c.l.b16 %v2932
    %v3638 = vunpack.c.h.b16 %v2932
    %v3639 = vunpack.c.l.b16 %v2933
    %v3640 = vunpack.c.h.b16 %v2933
    %v3641 = vunpack.c.l.b16 %v2934
    %v3642 = vunpack.c.h.b16 %v2934
    %v3643 = vunpack.c.l.b16 %v2935
    %v3644 = vunpack.c.h.b16 %v2935
    %v3645 = vunpack.c.l.b16 %v2936
    %v3646 = vunpack.c.h.b16 %v2936
    %v3647 = vunpack.c.l.b16 %v2937
    %v3648 = vunpack.c.h.b16 %v2937
    %v3649 = vunpack.c.l.b16 %v2938
    %v3650 = vunpack.c.h.b16 %v2938
    %v3651 = vunpack.c.l.b16 %v2939
    %v3652 = vunpack.c.h.b16 %v2939
    %v3653 = vunpack.c.l.b16 %v2940
    %v3654 = vunpack.c.h.b16 %v2940
    %v3655 = vunpack.c.l.b16 %v2941
    %v3656 = vunpack.c.h.b16 %v2941
    %v3657 = vunpack.c.l.b16 %v2942
    %v3658 = vunpack.c.h.b16 %v2942
    %v3659 = vunpack.c.l.b16 %v2943
    %v3660 = vunpack.c.h.b16 %v2943
    %v3661 = vunpack.c.l.b16 %v2944
    %v3662 = vunpack.c.h.b16 %v2944
    %v3663 = vunpack.c.l.b16 %v2945
    %v3664 = vunpack.c.h.b16 %v2945
    %v3665 = vunpack.c.l.b16 %v2946
    %v3666 = vunpack.c.h.b16 %v2946
    %v3667 = vunpack.c.l.b16 %v2947
    %v3668 = vunpack.c.h.b16 %v2947
    %v3669 = vunpack.c.l.b16 %v2948
    %v3670 = vunpack.c.h.b16 %v2948
    %v3671 = vunpack.c.l.b16 %v2949
    %v3672 = vunpack.c.h.b16 %v2949
    %v3673 = vunpack.c.l.b16 %v2950
    %v3674 = vunpack.c.h.b16 %v2950
    %v3675 = vunpack.c.l.b16 %v2951
    %v3676 = vunpack.c.h.b16 %v2951
    %v3677 = vunpack.c.l.b16 %v2952
    %v3678 = vunpack.c.h.b16 %v2952
    %v3679 = vunpack.c.l.b16 %v2953
    %v3680 = vunpack.c.h.b16 %v2953
    %v3681 = vunpack.c.l.b16 %v2954
    %v3682 = vunpack.c.h.b16 %v2954
    %v3683 = vunpack.c.l.b16 %v2955
    %v3684 = vunpack.c.h.b16 %v2955
    %v3685 = vunpack.c.l.b16 %v2956
    %v3686 = vunpack.c.h.b16 %v2956
    %v3687 = vunpack.c.l.b16 %v2957
    %v3688 = vunpack.c.h.b16 %v2957
    %v3689 = vunpack.c.l.b16 %v2958
    %v3690 = vunpack.c.h.b16 %v2958
    %v3691 = vunpack.c.l.b16 %v2959
    %v3692 = vunpack.c.h.b16 %v2959
    %v3693 = vunpack.c.l.b16 %v2960
    %v3694 = vunpack.c.h.b16 %v2960
    %v3695 = vunpack.c.l.b16 %v2961
    %v3696 = vunpack.c.h.b16 %v2961
    %v3697 = vunpack.c.l.b16 %v2962
    %v3698 = vunpack.c.h.b16 %v2962
    %v3699 = vunpack.c.l.b16 %v2963
    %v3700 = vunpack.c.h.b16 %v2963
    %v3701 = vunpack.c.l.b16 %v2964
    %v3702 = vunpack.c.h.b16 %v2964
    %v3703 = vunpack.c.l.b16 %v2965
    %v3704 = vunpack.c.h.b16 %v2965
    %v3705 = vunpack.c.l.b16 %v2966
    %v3706 = vunpack.c.h.b16 %v2966
    %v3707 = vunpack.c.l.b16 %v2967
    %v3708 = vunpack.c.h.b16 %v2967
    %v3709 = vunpack.c.l.b16 %v2968
    %v3710 = vunpack.c.h.b16 %v2968
    %v3711 = vunpack.c.l.b16 %v2969
    %v3712 = vunpack.c.h.b16 %v2969
    %v3713 = vunpack.c.l.b16 %v2970
    %v3714 = vunpack.c.h.b16 %v2970
    %v3715 = vunpack.c.l.b16 %v2971
    %v3716 = vunpack.c.h.b16 %v2971
    %v3717 = vunpack.c.l.b16 %v2972
    %v3718 = vunpack.c.h.b16 %v2972
    %v3719 = vunpack.c.l.b16 %v2973
    %v3720 = vunpack.c.h.b16 %v2973
    %v3721 = vunpack.c.l.b16 %v2974
    %v3722 = vunpack.c.h.b16 %v2974
    %v3723 = vunpack.c.l.b16 %v2975
    %v3724 = vunpack.c.h.b16 %v2975
    %v3725 = vunpack.c.l.b16 %v2976
    %v3726 = vunpack.c.h.b16 %v2976
    %v3727 = vunpack.c.l.b16 %v2977
    %v3728 = vunpack.c.h.b16 %v2977
    %v3729 = vunpack.c.l.b16 %v2978
    %v3730 = vunpack.c.h.b16 %v2978
    %v3731 = vunpack.c.l.b16 %v2979
    %v3732 = vunpack.c.h.b16 %v2979
    %v3733 = vunpack.c.l.b16 %v2980
    %v3734 = vunpack.c.h.b16 %v2980
    %v3735 = vunpack.c.l.b16 %v2981
    %v3736 = vunpack.c.h.b16 %v2981
    %v3737 = vunpack.c.l.b16 %v2982
    %v3738 = vunpack.c.h.b16 %v2982
    %v3739 = vunpack.c.l.b16 %v2983
    %v3740 = vunpack.c.h.b16 %v2983
    %v3741 = vunpack.c.l.b16 %v2984
    %v3742 = vunpack.c.h.b16 %v2984
    %v3743 = vunpack.c.l.b16 %v2985
    %v3744 = vunpack.c.h.b16 %v2985
    %v3745 = vunpack.c.l.b16 %v2986
    %v3746 = vunpack.c.h.b16 %v2986
    %v3747 = vunpack.c.l.b16 %v2987
    %v3748 = vunpack.c.h.b16 %v2987
    %v3749 = vunpack.c.l.b16 %v2988
    %v3750 = vunpack.c.h.b16 %v2988
    %v3751 = vunpack.c.l.b16 %v2989
    %v3752 = vunpack.c.h.b16 %v2989
    %v3753 = vunpack.c.l.b16 %v2990
    %v3754 = vunpack.c.h.b16 %v2990
    %v3755 = vunpack.c.l.b16 %v2991
    %v3756 = vunpack.c.h.b16 %v2991
    %v3757 = vunpack.c.l.b16 %v2992
    %v3758 = vunpack.c.h.b16 %v2992
    %v3759 = vunpack.c.l.b16 %v2993
    %v3760 = vunpack.c.h.b16 %v2993
    %v3761 = vunpack.c.l.b16 %v2994
    %v3762 = vunpack.c.h.b16 %v2994
    %v3763 = vunpack.c.l.b16 %v2995
    %v3764 = vunpack.c.h.b16 %v2995
    %v3765 = vpack.c.b16 %v3261, %v3253
    %v3766 = vpack.c.b16 %v3262, %v3254
    %v3767 = vpack.c.b16 %v3263, %v3255
    %v3768 = vpack.c.b16 %v3264, %v3256
    %v3769 = vpack.c.b16 %v3265, %v3257
    %v3770 = vpack.c.b16 %v3266, %v3258
    %v3771 = vpack.c.b16 %v3267, %v3259
    %v3772 = vpack.c.b16 %v3268, %v3260
    %v3773 = vpack.c.b16 %v3277, %v3269
    %v3774 = vpack.c.b16 %v3278, %v3270
    %v3775 = vpack.c.b16 %v3279, %v3271
    %v3776 = vpack.c.b16 %v3280, %v3272
    %v3777 = vpack.c.b16 %v3281, %v3273
    %v3778 = vpack.c.b16 %v3282, %v3274
    %v3779 = vpack.c.b16 %v3283, %v3275
    %v3780 = vpack.c.b16 %v3284, %v3276
    %v3781 = vpack.c.b16 %v3293, %v3285
    %v3782 = vpack.c.b16 %v3294, %v3286
    %v3783 = vpack.c.b16 %v3295, %v3287
    %v3784 = vpack.c.b16 %v3296, %v3288
    %v3785 = vpack.c.b16 %v3297, %v3289
    %v3786 = vpack.c.b16 %v3298, %v3290
    %v3787 = vpack.c.b16 %v3299, %v3291
    %v3788 = vpack.c.b16 %v3300, %v3292
    %v3789 = vpack.c.b16 %v3309, %v3301
    %v3790 = vpack.c.b16 %v3310, %v3302
    %v3791 = vpack.c.b16 %v3311, %v3303
    %v3792 = vpack.c.b16 %v3312, %v3304
    %v3793 = vpack.c.b16 %v3313, %v3305
    %v3794 = vpack.c.b16 %v3314, %v3306
    %v3795 = vpack.c.b16 %v3315, %v3307
    %v3796 = vpack.c.b16 %v3316, %v3308
    %v3797 = vpack.c.b16 %v3325, %v3317
    %v3798 = vpack.c.b16 %v3326, %v3318
    %v3799 = vpack.c.b16 %v3327, %v3319
    %v3800 = vpack.c.b16 %v3328, %v3320
    %v3801 = vpack.c.b16 %v3329, %v3321
    %v3802 = vpack.c.b16 %v3330, %v3322
    %v3803 = vpack.c.b16 %v3331, %v3323
    %v3804 = vpack.c.b16 %v3332, %v3324
    %v3805 = vpack.c.b16 %v3341, %v3333
    %v3806 = vpack.c.b16 %v3342, %v3334
    %v3807 = vpack.c.b16 %v3343, %v3335
    %v3808 = vpack.c.b16 %v3344, %v3336
    %v3809 = vpack.c.b16 %v3345, %v3337
    %v3810 = vpack.c.b16 %v3346, %v3338
    %v3811 = vpack.c.b16 %v3347, %v3339
    %v3812 = vpack.c.b16 %v3348, %v3340
    %v3813 = vpack.c.b16 %v3357, %v3349
    %v3814 = vpack.c.b16 %v3358, %v3350
    %v3815 = vpack.c.b16 %v3359, %v3351
    %v3816 = vpack.c.b16 %v3360, %v3352
    %v3817 = vpack.c.b16 %v3361, %v3353
    %v3818 = vpack.c.b16 %v3362, %v3354
    %v3819 = vpack.c.b16 %v3363, %v3355
    %v3820 = vpack.c.b16 %v3364, %v3356
    %v3821 = vpack.c.b16 %v3373, %v3365
    %v3822 = vpack.c.b16 %v3374, %v3366
    %v3823 = vpack.c.b16 %v3375, %v3367
    %v3824 = vpack.c.b16 %v3376, %v3368
    %v3825 = vpack.c.b16 %v3377, %v3369
    %v3826 = vpack.c.b16 %v3378, %v3370
    %v3827 = vpack.c.b16 %v3379, %v3371
    %v3828 = vpack.c.b16 %v3380, %v3372
    %v3829 = vpack.c.b16 %v3389, %v3381
    %v3830 = vpack.c.b16 %v3390, %v3382
    %v3831 = vpack.c.b16 %v3391, %v3383
    %v3832 = vpack.c.b16 %v3392, %v3384
    %v3833 = vpack.c.b16 %v3393, %v3385
    %v3834 = vpack.c.b16 %v3394, %v3386
    %v3835 = vpack.c.b16 %v3395, %v3387
    %v3836 = vpack.c.b16 %v3396, %v3388
    %v3837 = vpack.c.b16 %v3405, %v3397
    %v3838 = vpack.c.b16 %v3406, %v3398
    %v3839 = vpack.c.b16 %v3407, %v3399
    %v3840 = vpack.c.b16 %v3408, %v3400
    %v3841 = vpack.c.b16 %v3409, %v3401
    %v3842 = vpack.c.b16 %v3410, %v3402
    %v3843 = vpack.c.b16 %v3411, %v3403
    %v3844 = vpack.c.b16 %v3412, %v3404
    %v3845 = vpack.c.b16 %v3421, %v3413
    %v3846 = vpack.c.b16 %v3422, %v3414
    %v3847 = vpack.c.b16 %v3423, %v3415
    %v3848 = vpack.c.b16 %v3424, %v3416
    %v3849 = vpack.c.b16 %v3425, %v3417
    %v3850 = vpack.c.b16 %v3426, %v3418
    %v3851 = vpack.c.b16 %v3427, %v3419
    %v3852 = vpack.c.b16 %v3428, %v3420
    %v3853 = vpack.c.b16 %v3437, %v3429
    %v3854 = vpack.c.b16 %v3438, %v3430
    %v3855 = vpack.c.b16 %v3439, %v3431
    %v3856 = vpack.c.b16 %v3440, %v3432
    %v3857 = vpack.c.b16 %v3441, %v3433
    %v3858 = vpack.c.b16 %v3442, %v3434
    %v3859 = vpack.c.b16 %v3443, %v3435
    %v3860 = vpack.c.b16 %v3444, %v3436
    %v3861 = vpack.c.b16 %v3453, %v3445
    %v3862 = vpack.c.b16 %v3454, %v3446
    %v3863 = vpack.c.b16 %v3455, %v3447
    %v3864 = vpack.c.b16 %v3456, %v3448
    %v3865 = vpack.c.b16 %v3457, %v3449
    %v3866 = vpack.c.b16 %v3458, %v3450
    %v3867 = vpack.c.b16 %v3459, %v3451
    %v3868 = vpack.c.b16 %v3460, %v3452
    %v3869 = vpack.c.b16 %v3469, %v3461
    %v3870 = vpack.c.b16 %v3470, %v3462
    %v3871 = vpack.c.b16 %v3471, %v3463
    %v3872 = vpack.c.b16 %v3472, %v3464
    %v3873 = vpack.c.b16 %v3473, %v3465
    %v3874 = vpack.c.b16 %v3474, %v3466
    %v3875 = vpack.c.b16 %v3475, %v3467
    %v3876 = vpack.c.b16 %v3476, %v3468
    %v3877 = vpack.c.b16 %v3485, %v3477
    %v3878 = vpack.c.b16 %v3486, %v3478
    %v3879 = vpack.c.b16 %v3487, %v3479
    %v3880 = vpack.c.b16 %v3488, %v3480
    %v3881 = vpack.c.b16 %v3489, %v3481
    %v3882 = vpack.c.b16 %v3490, %v3482
    %v3883 = vpack.c.b16 %v3491, %v3483
    %v3884 = vpack.c.b16 %v3492, %v3484
    %v3885 = vpack.c.b16 %v3501, %v3493
    %v3886 = vpack.c.b16 %v3502, %v3494
    %v3887 = vpack.c.b16 %v3503, %v3495
    %v3888 = vpack.c.b16 %v3504, %v3496
    %v3889 = vpack.c.b16 %v3505, %v3497
    %v3890 = vpack.c.b16 %v3506, %v3498
    %v3891 = vpack.c.b16 %v3507, %v3499
    %v3892 = vpack.c.b16 %v3508, %v3500
    %v3893 = vpack.c.b16 %v3517, %v3509
    %v3894 = vpack.c.b16 %v3518, %v3510
    %v3895 = vpack.c.b16 %v3519, %v3511
    %v3896 = vpack.c.b16 %v3520, %v3512
    %v3897 = vpack.c.b16 %v3521, %v3513
    %v3898 = vpack.c.b16 %v3522, %v3514
    %v3899 = vpack.c.b16 %v3523, %v3515
    %v3900 = vpack.c.b16 %v3524, %v3516
    %v3901 = vpack.c.b16 %v3533, %v3525
    %v3902 = vpack.c.b16 %v3534, %v3526
    %v3903 = vpack.c.b16 %v3535, %v3527
    %v3904 = vpack.c.b16 %v3536, %v3528
    %v3905 = vpack.c.b16 %v3537, %v3529
    %v3906 = vpack.c.b16 %v3538, %v3530
    %v3907 = vpack.c.b16 %v3539, %v3531
    %v3908 = vpack.c.b16 %v3540, %v3532
    %v3909 = vpack.c.b16 %v3549, %v3541
    %v3910 = vpack.c.b16 %v3550, %v3542
    %v3911 = vpack.c.b16 %v3551, %v3543
    %v3912 = vpack.c.b16 %v3552, %v3544
    %v3913 = vpack.c.b16 %v3553, %v3545
    %v3914 = vpack.c.b16 %v3554, %v3546
    %v3915 = vpack.c.b16 %v3555, %v3547
    %v3916 = vpack.c.b16 %v3556, %v3548
    %v3917 = vpack.c.b16 %v3565, %v3557
    %v3918 = vpack.c.b16 %v3566, %v3558
    %v3919 = vpack.c.b16 %v3567, %v3559
    %v3920 = vpack.c.b16 %v3568, %v3560
    %v3921 = vpack.c.b16 %v3569, %v3561
    %v3922 = vpack.c.b16 %v3570, %v3562
    %v3923 = vpack.c.b16 %v3571, %v3563
    %v3924 = vpack.c.b16 %v3572, %v3564
    %v3925 = vpack.c.b16 %v3581, %v3573
    %v3926 = vpack.c.b16 %v3582, %v3574
    %v3927 = vpack.c.b16 %v3583, %v3575
    %v3928 = vpack.c.b16 %v3584, %v3576
    %v3929 = vpack.c.b16 %v3585, %v3577
    %v3930 = vpack.c.b16 %v3586, %v3578
    %v3931 = vpack.c.b16 %v3587, %v3579
    %v3932 = vpack.c.b16 %v3588, %v3580
    %v3933 = vpack.c.b16 %v3597, %v3589
    %v3934 = vpack.c.b16 %v3598, %v3590
    %v3935 = vpack.c.b16 %v3599, %v3591
    %v3936 = vpack.c.b16 %v3600, %v3592
    %v3937 = vpack.c.b16 %v3601, %v3593
    %v3938 = vpack.c.b16 %v3602, %v3594
    %v3939 = vpack.c.b16 %v3603, %v3595
    %v3940 = vpack.c.b16 %v3604, %v3596
    %v3941 = vpack.c.b16 %v3613, %v3605
    %v3942 = vpack.c.b16 %v3614, %v3606
    %v3943 = vpack.c.b16 %v3615, %v3607
    %v3944 = vpack.c.b16 %v3616, %v3608
    %v3945 = vpack.c.b16 %v3617, %v3609
    %v3946 = vpack.c.b16 %v3618, %v3610
    %v3947 = vpack.c.b16 %v3619, %v3611
    %v3948 = vpack.c.b16 %v3620, %v3612
    %v3949 = vpack.c.b16 %v3629, %v3621
    %v3950 = vpack.c.b16 %v3630, %v3622
    %v3951 = vpack.c.b16 %v3631, %v3623
    %v3952 = vpack.c.b16 %v3632, %v3624
    %v3953 = vpack.c.b16 %v3633, %v3625
    %v3954 = vpack.c.b16 %v3634, %v3626
    %v3955 = vpack.c.b16 %v3635, %v3627
    %v3956 = vpack.c.b16 %v3636, %v3628
    %v3957 = vpack.c.b16 %v3645, %v3637
    %v3958 = vpack.c.b16 %v3646, %v3638
    %v3959 = vpack.c.b16 %v3647, %v3639
    %v3960 = vpack.c.b16 %v3648, %v3640
    %v3961 = vpack.c.b16 %v3649, %v3641
    %v3962 = vpack.c.b16 %v3650, %v3642
    %v3963 = vpack.c.b16 %v3651, %v3643
    %v3964 = vpack.c.b16 %v3652, %v3644
    %v3965 = vpack.c.b16 %v3661, %v3653
    %v3966 = vpack.c.b16 %v3662, %v3654
    %v3967 = vpack.c.b16 %v3663, %v3655
    %v3968 = vpack.c.b16 %v3664, %v3656
    %v3969 = vpack.c.b16 %v3665, %v3657
    %v3970 = vpack.c.b16 %v3666, %v3658
    %v3971 = vpack.c.b16 %v3667, %v3659
    %v3972 = vpack.c.b16 %v3668, %v3660
    %v3973 = vpack.c.b16 %v3677, %v3669
    %v3974 = vpack.c.b16 %v3678, %v3670
    %v3975 = vpack.c.b16 %v3679, %v3671
    %v3976 = vpack.c.b16 %v3680, %v3672
    %v3977 = vpack.c.b16 %v3681, %v3673
    %v3978 = vpack.c.b16 %v3682, %v3674
    %v3979 = vpack.c.b16 %v3683, %v3675
    %v3980 = vpack.c.b16 %v3684, %v3676
    %v3981 = vpack.c.b16 %v3693, %v3685
    %v3982 = vpack.c.b16 %v3694, %v3686
    %v3983 = vpack.c.b16 %v3695, %v3687
    %v3984 = vpack.c.b16 %v3696, %v3688
    %v3985 = vpack.c.b16 %v3697, %v3689
    %v3986 = vpack.c.b16 %v3698, %v3690
    %v3987 = vpack.c.b16 %v3699, %v3691
    %v3988 = vpack.c.b16 %v3700, %v3692
    %v3989 = vpack.c.b16 %v3709, %v3701
    %v3990 = vpack.c.b16 %v3710, %v3702
    %v3991 = vpack.c.b16 %v3711, %v3703
    %v3992 = vpack.c.b16 %v3712, %v3704
    %v3993 = vpack.c.b16 %v3713, %v3705
    %v3994 = vpack.c.b16 %v3714, %v3706
    %v3995 = vpack.c.b16 %v3715, %v3707
    %v3996 = vpack.c.b16 %v3716, %v3708
    %v3997 = vpack.c.b16 %v3725, %v3717
    %v3998 = vpack.c.b16 %v3726, %v3718
    %v3999 = vpack.c.b16 %v3727, %v3719
    %v4000 = vpack.c.b16 %v3728, %v3720
    %v4001 = vpack.c.b16 %v3729, %v3721
    %v4002 = vpack.c.b16 %v3730, %v3722
    %v4003 = vpack.c.b16 %v3731, %v3723
    %v4004 = vpack.c.b16 %v3732, %v3724
    %v4005 = vpack.c.b16 %v3741, %v3733
    %v4006 = vpack.c.b16 %v3742, %v3734
    %v4007 = vpack.c.b16 %v3743, %v3735
    %v4008 = vpack.c.b16 %v3744, %v3736
    %v4009 = vpack.c.b16 %v3745, %v3737
    %v4010 = vpack.c.b16 %v3746, %v3738
    %v4011 = vpack.c.b16 %v3747, %v3739
    %v4012 = vpack.c.b16 %v3748, %v3740
    %v4013 = vpack.c.b16 %v3757, %v3749
    %v4014 = vpack.c.b16 %v3758, %v3750
    %v4015 = vpack.c.b16 %v3759, %v3751
    %v4016 = vpack.c.b16 %v3760, %v3752
    %v4017 = vpack.c.b16 %v3761, %v3753
    %v4018 = vpack.c.b16 %v3762, %v3754
    %v4019 = vpack.c.b16 %v3763, %v3755
    %v4020 = vpack.c.b16 %v3764, %v3756
    %v4278 = vlaneseq
    %v4279 = vshrl.u32 %v4278, 7
    %v4280 = vsub.s32 0, %v4279
    %v4281 = vrot.slane %v2996, %v4280
    %v4282 = vlaneseq
    %v4283 = vshrl.u32 %v4282, 7
    %v4284 = vsub.s32 1, %v4283
    %v4285 = vrot.slane %v2996, %v4284
    %v4286 = vlaneseq
    %v4287 = vshrl.u32 %v4286, 7
    %v4288 = vsub.s32 2, %v4287
    %v4289 = vrot.slane %v2996, %v4288
    %v4290 = vlaneseq
    %v4291 = vshrl.u32 %v4290, 7
    %v4292 = vsub.s32 3, %v4291
    %v4293 = vrot.slane %v2996, %v4292
    %v4294 = vlaneseq
    %v4295 = vshrl.u32 %v4294, 7
    %v4296 = vsub.s32 4, %v4295
    %v4297 = vrot.slane %v2996, %v4296
    %v4298 = vlaneseq
    %v4299 = vshrl.u32 %v4298, 7
    %v4300 = vsub.s32 5, %v4299
    %v4301 = vrot.slane %v2996, %v4300
    %v4302 = vlaneseq
    %v4303 = vshrl.u32 %v4302, 7
    %v4304 = vsub.s32 6, %v4303
    %v4305 = vrot.slane %v2996, %v4304
    %v4306 = vlaneseq
    %v4307 = vshrl.u32 %v4306, 7
    %v4308 = vsub.s32 7, %v4307
    %v4309 = vrot.slane %v2996, %v4308
    %4318 = vmatprep.subr.bf16.mxu0 %v3766
    %4319 = vmatpush1.bf16.msra.mxu0 %v3765
    %4320 = vmatprep.subr.bf16.mxu0 %v3774
    %4321 = vmatpush1.bf16.msra.mxu0 %v3773
    %4322 = vmatprep.subr.bf16.mxu0 %v3782
    %4323 = vmatpush1.bf16.msra.mxu0 %v3781
    %4324 = vmatprep.subr.bf16.mxu0 %v3790
    %4325 = vmatpush1.bf16.msra.mxu0 %v3789
    %4326 = vmatprep.subr.bf16.mxu0 %v3798
    %4327 = vmatpush1.bf16.msra.mxu0 %v3797
    %4328 = vmatprep.subr.bf16.mxu0 %v3806
    %4329 = vmatpush1.bf16.msra.mxu0 %v3805
    %4330 = vmatprep.subr.bf16.mxu0 %v3814
    %4331 = vmatpush1.bf16.msra.mxu0 %v3813
    %4332 = vmatprep.subr.bf16.mxu0 %v3822
    %4333 = vmatpush1.bf16.msra.mxu0 %v3821
    %4334 = vmatprep.subr.bf16.mxu0 %v3830
    %4335 = vmatpush1.bf16.msra.mxu0 %v3829
    %4336 = vmatprep.subr.bf16.mxu0 %v3838
    %4337 = vmatpush1.bf16.msra.mxu0 %v3837
    %4338 = vmatprep.subr.bf16.mxu0 %v3846
    %4339 = vmatpush1.bf16.msra.mxu0 %v3845
    %4340 = vmatprep.subr.bf16.mxu0 %v3854
    %4341 = vmatpush1.bf16.msra.mxu0 %v3853
    %4342 = vmatprep.subr.bf16.mxu0 %v3862
    %4343 = vmatpush1.bf16.msra.mxu0 %v3861
    %4344 = vmatprep.subr.bf16.mxu0 %v3870
    %4345 = vmatpush1.bf16.msra.mxu0 %v3869
    %4346 = vmatprep.subr.bf16.mxu0 %v3878
    %4347 = vmatpush1.bf16.msra.mxu0 %v3877
    %4348 = vmatprep.subr.bf16.mxu0 %v3886
    %4349 = vmatpush1.bf16.msra.mxu0 %v3885
    %4350 = vmatprep.mubr.bf16.mxu0 %v2737
    %4351 = vmatmul.mubr.bf16.gmra.mrb[0].mxu0 %v2736
    %v4352 = vpop.f32.mrb[0].mxu0
    %v4353 = vadd.f32 %v4281, %v4352
    %v4354 = vpop.f32.mrb[0].mxu0
    %v4355 = vadd.f32 %v4285, %v4354
    %v4356 = vpop.f32.mrb[0].mxu0
    %v4357 = vpop.f32.mrb[0].mxu0
    %4358 = vdwg.mxu0
    %4359 = vmatprep.subr.bf16.mxu0 %v3894
    %4360 = vmatpush1.bf16.msra.mxu0 %v3893
    %4361 = vmatprep.subr.bf16.mxu0 %v3902
    %4362 = vmatpush1.bf16.msra.mxu0 %v3901
    %4363 = vmatprep.subr.bf16.mxu0 %v3910
    %4364 = vmatpush1.bf16.msra.mxu0 %v3909
    %4365 = vmatprep.subr.bf16.mxu0 %v3918
    %4366 = vmatpush1.bf16.msra.mxu0 %v3917
    %4367 = vmatprep.subr.bf16.mxu0 %v3926
    %4368 = vmatpush1.bf16.msra.mxu0 %v3925
    %4369 = vmatprep.subr.bf16.mxu0 %v3934
    %4370 = vmatpush1.bf16.msra.mxu0 %v3933
    %4371 = vmatprep.subr.bf16.mxu0 %v3942
    %4372 = vmatpush1.bf16.msra.mxu0 %v3941
    %4373 = vmatprep.subr.bf16.mxu0 %v3950
    %4374 = vmatpush1.bf16.msra.mxu0 %v3949
    %4375 = vmatprep.subr.bf16.mxu0 %v3958
    %4376 = vmatpush1.bf16.msra.mxu0 %v3957
    %4377 = vmatprep.subr.bf16.mxu0 %v3966
    %4378 = vmatpush1.bf16.msra.mxu0 %v3965
    %4379 = vmatprep.subr.bf16.mxu0 %v3974
    %4380 = vmatpush1.bf16.msra.mxu0 %v3973
    %4381 = vmatprep.subr.bf16.mxu0 %v3982
    %4382 = vmatpush1.bf16.msra.mxu0 %v3981
    %4383 = vmatprep.subr.bf16.mxu0 %v3990
    %4384 = vmatpush1.bf16.msra.mxu0 %v3989
    %4385 = vmatprep.subr.bf16.mxu0 %v3998
    %4386 = vmatpush1.bf16.msra.mxu0 %v3997
    %4387 = vmatprep.subr.bf16.mxu0 %v4006
    %4388 = vmatpush1.bf16.msra.mxu0 %v4005
    %4389 = vmatprep.subr.bf16.mxu0 %v4014
    %4390 = vmatpush1.bf16.msra.mxu0 %v4013
    %4391 = vmatprep.mubr.bf16.mxu0 %v2739
    %4392 = vmatmul.mubr.bf16.gmra.mrb[0].mxu0 %v2738
    %v4393 = vpop.f32.mrb[0].mxu0
    %v4394 = vadd.f32 %v4353, %v4393
    %v4395 = vpop.f32.mrb[0].mxu0
    %v4396 = vadd.f32 %v4355, %v4395
    %v4397 = vpop.f32.mrb[0].mxu0
    %v4398 = vpop.f32.mrb[0].mxu0
    %4399 = vdwg.mxu0
    %4400 = vmatprep.subr.bf16.mxu0 %v3768
    %4401 = vmatpush1.bf16.msra.mxu0 %v3767
    %4402 = vmatprep.subr.bf16.mxu0 %v3776
    %4403 = vmatpush1.bf16.msra.mxu0 %v3775
    %4404 = vmatprep.subr.bf16.mxu0 %v3784
    %4405 = vmatpush1.bf16.msra.mxu0 %v3783
    %4406 = vmatprep.subr.bf16.mxu0 %v3792
    %4407 = vmatpush1.bf16.msra.mxu0 %v3791
    %4408 = vmatprep.subr.bf16.mxu0 %v3800
    %4409 = vmatpush1.bf16.msra.mxu0 %v3799
    %4410 = vmatprep.subr.bf16.mxu0 %v3808
    %4411 = vmatpush1.bf16.msra.mxu0 %v3807
    %4412 = vmatprep.subr.bf16.mxu0 %v3816
    %4413 = vmatpush1.bf16.msra.mxu0 %v3815
    %4414 = vmatprep.subr.bf16.mxu0 %v3824
    %4415 = vmatpush1.bf16.msra.mxu0 %v3823
    %4416 = vmatprep.subr.bf16.mxu0 %v3832
    %4417 = vmatpush1.bf16.msra.mxu0 %v3831
    %4418 = vmatprep.subr.bf16.mxu0 %v3840
    %4419 = vmatpush1.bf16.msra.mxu0 %v3839
    %4420 = vmatprep.subr.bf16.mxu0 %v3848
    %4421 = vmatpush1.bf16.msra.mxu0 %v3847
    %4422 = vmatprep.subr.bf16.mxu0 %v3856
    %4423 = vmatpush1.bf16.msra.mxu0 %v3855
    %4424 = vmatprep.subr.bf16.mxu0 %v3864
    %4425 = vmatpush1.bf16.msra.mxu0 %v3863
    %4426 = vmatprep.subr.bf16.mxu0 %v3872
    %4427 = vmatpush1.bf16.msra.mxu0 %v3871
    %4428 = vmatprep.subr.bf16.mxu0 %v3880
    %4429 = vmatpush1.bf16.msra.mxu0 %v3879
    %4430 = vmatprep.subr.bf16.mxu0 %v3888
    %4431 = vmatpush1.bf16.msra.mxu0 %v3887
    %4432 = vmatprep.mubr.bf16.mxu0 %v2737
    %4433 = vmatmul.mubr.bf16.gmra.mrb[0].mxu0 %v2736
    %v4434 = vpop.f32.mrb[0].mxu0
    %v4435 = vadd.f32 %v4289, %v4434
    %v4436 = vpop.f32.mrb[0].mxu0
    %v4437 = vadd.f32 %v4293, %v4436
    %v4438 = vpop.f32.mrb[0].mxu0
    %v4439 = vpop.f32.mrb[0].mxu0
    %4440 = vdwg.mxu0
    %4441 = vmatprep.subr.bf16.mxu0 %v3896
    %4442 = vmatpush1.bf16.msra.mxu0 %v3895
    %4443 = vmatprep.subr.bf16.mxu0 %v3904
    %4444 = vmatpush1.bf16.msra.mxu0 %v3903
    %4445 = vmatprep.subr.bf16.mxu0 %v3912
    %4446 = vmatpush1.bf16.msra.mxu0 %v3911
    %4447 = vmatprep.subr.bf16.mxu0 %v3920
    %4448 = vmatpush1.bf16.msra.mxu0 %v3919
    %4449 = vmatprep.subr.bf16.mxu0 %v3928
    %4450 = vmatpush1.bf16.msra.mxu0 %v3927
    %4451 = vmatprep.subr.bf16.mxu0 %v3936
    %4452 = vmatpush1.bf16.msra.mxu0 %v3935
    %4453 = vmatprep.subr.bf16.mxu0 %v3944
    %4454 = vmatpush1.bf16.msra.mxu0 %v3943
    %4455 = vmatprep.subr.bf16.mxu0 %v3952
    %4456 = vmatpush1.bf16.msra.mxu0 %v3951
    %4457 = vmatprep.subr.bf16.mxu0 %v3960
    %4458 = vmatpush1.bf16.msra.mxu0 %v3959
    %4459 = vmatprep.subr.bf16.mxu0 %v3968
    %4460 = vmatpush1.bf16.msra.mxu0 %v3967
    %4461 = vmatprep.subr.bf16.mxu0 %v3976
    %4462 = vmatpush1.bf16.msra.mxu0 %v3975
    %4463 = vmatprep.subr.bf16.mxu0 %v3984
    %4464 = vmatpush1.bf16.msra.mxu0 %v3983
    %4465 = vmatprep.subr.bf16.mxu0 %v3992
    %4466 = vmatpush1.bf16.msra.mxu0 %v3991
    %4467 = vmatprep.subr.bf16.mxu0 %v4000
    %4468 = vmatpush1.bf16.msra.mxu0 %v3999
    %4469 = vmatprep.subr.bf16.mxu0 %v4008
    %4470 = vmatpush1.bf16.msra.mxu0 %v4007
    %4471 = vmatprep.subr.bf16.mxu0 %v4016
    %4472 = vmatpush1.bf16.msra.mxu0 %v4015
    %4473 = vmatprep.mubr.bf16.mxu0 %v2739
    %4474 = vmatmul.mubr.bf16.gmra.mrb[0].mxu0 %v2738
    %v4475 = vpop.f32.mrb[0].mxu0
    %v4476 = vadd.f32 %v4435, %v4475
    %v4477 = vpop.f32.mrb[0].mxu0
    %v4478 = vadd.f32 %v4437, %v4477
    %v4479 = vpop.f32.mrb[0].mxu0
    %v4480 = vpop.f32.mrb[0].mxu0
    %4481 = vdwg.mxu0
    %4482 = vmatprep.subr.bf16.mxu0 %v3770
    %4483 = vmatpush1.bf16.msra.mxu0 %v3769
    %4484 = vmatprep.subr.bf16.mxu0 %v3778
    %4485 = vmatpush1.bf16.msra.mxu0 %v3777
    %4486 = vmatprep.subr.bf16.mxu0 %v3786
    %4487 = vmatpush1.bf16.msra.mxu0 %v3785
    %4488 = vmatprep.subr.bf16.mxu0 %v3794
    %4489 = vmatpush1.bf16.msra.mxu0 %v3793
    %4490 = vmatprep.subr.bf16.mxu0 %v3802
    %4491 = vmatpush1.bf16.msra.mxu0 %v3801
    %4492 = vmatprep.subr.bf16.mxu0 %v3810
    %4493 = vmatpush1.bf16.msra.mxu0 %v3809
    %4494 = vmatprep.subr.bf16.mxu0 %v3818
    %4495 = vmatpush1.bf16.msra.mxu0 %v3817
    %4496 = vmatprep.subr.bf16.mxu0 %v3826
    %4497 = vmatpush1.bf16.msra.mxu0 %v3825
    %4498 = vmatprep.subr.bf16.mxu0 %v3834
    %4499 = vmatpush1.bf16.msra.mxu0 %v3833
    %4500 = vmatprep.subr.bf16.mxu0 %v3842
    %4501 = vmatpush1.bf16.msra.mxu0 %v3841
    %4502 = vmatprep.subr.bf16.mxu0 %v3850
    %4503 = vmatpush1.bf16.msra.mxu0 %v3849
    %4504 = vmatprep.subr.bf16.mxu0 %v3858
    %4505 = vmatpush1.bf16.msra.mxu0 %v3857
    %4506 = vmatprep.subr.bf16.mxu0 %v3866
    %4507 = vmatpush1.bf16.msra.mxu0 %v3865
    %4508 = vmatprep.subr.bf16.mxu0 %v3874
    %4509 = vmatpush1.bf16.msra.mxu0 %v3873
    %4510 = vmatprep.subr.bf16.mxu0 %v3882
    %4511 = vmatpush1.bf16.msra.mxu0 %v3881
    %4512 = vmatprep.subr.bf16.mxu0 %v3890
    %4513 = vmatpush1.bf16.msra.mxu0 %v3889
    %4514 = vmatprep.mubr.bf16.mxu0 %v2737
    %4515 = vmatmul.mubr.bf16.gmra.mrb[0].mxu0 %v2736
    %v4516 = vpop.f32.mrb[0].mxu0
    %v4517 = vadd.f32 %v4297, %v4516
    %v4518 = vpop.f32.mrb[0].mxu0
    %v4519 = vadd.f32 %v4301, %v4518
    %v4520 = vpop.f32.mrb[0].mxu0
    %v4521 = vpop.f32.mrb[0].mxu0
    %4522 = vdwg.mxu0
    %4523 = vmatprep.subr.bf16.mxu0 %v3898
    %4524 = vmatpush1.bf16.msra.mxu0 %v3897
    %4525 = vmatprep.subr.bf16.mxu0 %v3906
    %4526 = vmatpush1.bf16.msra.mxu0 %v3905
    %4527 = vmatprep.subr.bf16.mxu0 %v3914
    %4528 = vmatpush1.bf16.msra.mxu0 %v3913
    %4529 = vmatprep.subr.bf16.mxu0 %v3922
    %4530 = vmatpush1.bf16.msra.mxu0 %v3921
    %4531 = vmatprep.subr.bf16.mxu0 %v3930
    %4532 = vmatpush1.bf16.msra.mxu0 %v3929
    %4533 = vmatprep.subr.bf16.mxu0 %v3938
    %4534 = vmatpush1.bf16.msra.mxu0 %v3937
    %4535 = vmatprep.subr.bf16.mxu0 %v3946
    %4536 = vmatpush1.bf16.msra.mxu0 %v3945
    %4537 = vmatprep.subr.bf16.mxu0 %v3954
    %4538 = vmatpush1.bf16.msra.mxu0 %v3953
    %4539 = vmatprep.subr.bf16.mxu0 %v3962
    %4540 = vmatpush1.bf16.msra.mxu0 %v3961
    %4541 = vmatprep.subr.bf16.mxu0 %v3970
    %4542 = vmatpush1.bf16.msra.mxu0 %v3969
    %4543 = vmatprep.subr.bf16.mxu0 %v3978
    %4544 = vmatpush1.bf16.msra.mxu0 %v3977
    %4545 = vmatprep.subr.bf16.mxu0 %v3986
    %4546 = vmatpush1.bf16.msra.mxu0 %v3985
    %4547 = vmatprep.subr.bf16.mxu0 %v3994
    %4548 = vmatpush1.bf16.msra.mxu0 %v3993
    %4549 = vmatprep.subr.bf16.mxu0 %v4002
    %4550 = vmatpush1.bf16.msra.mxu0 %v4001
    %4551 = vmatprep.subr.bf16.mxu0 %v4010
    %4552 = vmatpush1.bf16.msra.mxu0 %v4009
    %4553 = vmatprep.subr.bf16.mxu0 %v4018
    %4554 = vmatpush1.bf16.msra.mxu0 %v4017
    %4555 = vmatprep.mubr.bf16.mxu0 %v2739
    %4556 = vmatmul.mubr.bf16.gmra.mrb[0].mxu0 %v2738
    %v4557 = vpop.f32.mrb[0].mxu0
    %v4558 = vadd.f32 %v4517, %v4557
    %v4559 = vpop.f32.mrb[0].mxu0
    %v4560 = vadd.f32 %v4519, %v4559
    %v4561 = vpop.f32.mrb[0].mxu0
    %v4562 = vpop.f32.mrb[0].mxu0
    %4563 = vdwg.mxu0
    %4564 = vmatprep.subr.bf16.mxu0 %v3772
    %4565 = vmatpush1.bf16.msra.mxu0 %v3771
    %4566 = vmatprep.subr.bf16.mxu0 %v3780
    %4567 = vmatpush1.bf16.msra.mxu0 %v3779
    %4568 = vmatprep.subr.bf16.mxu0 %v3788
    %4569 = vmatpush1.bf16.msra.mxu0 %v3787
    %4570 = vmatprep.subr.bf16.mxu0 %v3796
    %4571 = vmatpush1.bf16.msra.mxu0 %v3795
    %4572 = vmatprep.subr.bf16.mxu0 %v3804
    %4573 = vmatpush1.bf16.msra.mxu0 %v3803
    %4574 = vmatprep.subr.bf16.mxu0 %v3812
    %4575 = vmatpush1.bf16.msra.mxu0 %v3811
    %4576 = vmatprep.subr.bf16.mxu0 %v3820
    %4577 = vmatpush1.bf16.msra.mxu0 %v3819
    %4578 = vmatprep.subr.bf16.mxu0 %v3828
    %4579 = vmatpush1.bf16.msra.mxu0 %v3827
    %4580 = vmatprep.subr.bf16.mxu0 %v3836
    %4581 = vmatpush1.bf16.msra.mxu0 %v3835
    %4582 = vmatprep.subr.bf16.mxu0 %v3844
    %4583 = vmatpush1.bf16.msra.mxu0 %v3843
    %4584 = vmatprep.subr.bf16.mxu0 %v3852
    %4585 = vmatpush1.bf16.msra.mxu0 %v3851
    %4586 = vmatprep.subr.bf16.mxu0 %v3860
    %4587 = vmatpush1.bf16.msra.mxu0 %v3859
    %4588 = vmatprep.subr.bf16.mxu0 %v3868
    %4589 = vmatpush1.bf16.msra.mxu0 %v3867
    %4590 = vmatprep.subr.bf16.mxu0 %v3876
    %4591 = vmatpush1.bf16.msra.mxu0 %v3875
    %4592 = vmatprep.subr.bf16.mxu0 %v3884
    %4593 = vmatpush1.bf16.msra.mxu0 %v3883
    %4594 = vmatprep.subr.bf16.mxu0 %v3892
    %4595 = vmatpush1.bf16.msra.mxu0 %v3891
    %4596 = vmatprep.mubr.bf16.mxu0 %v2737
    %4597 = vmatmul.mubr.bf16.gmra.mrb[0].mxu0 %v2736
    %v4598 = vpop.f32.mrb[0].mxu0
    %v4599 = vadd.f32 %v4305, %v4598
    %v4600 = vpop.f32.mrb[0].mxu0
    %v4601 = vadd.f32 %v4309, %v4600
    %v4602 = vpop.f32.mrb[0].mxu0
    %v4603 = vpop.f32.mrb[0].mxu0
    %4604 = vdwg.mxu0
    %4605 = vmatprep.subr.bf16.mxu0 %v3900
    %4606 = vmatpush1.bf16.msra.mxu0 %v3899
    %4607 = vmatprep.subr.bf16.mxu0 %v3908
    %4608 = vmatpush1.bf16.msra.mxu0 %v3907
    %4609 = vmatprep.subr.bf16.mxu0 %v3916
    %4610 = vmatpush1.bf16.msra.mxu0 %v3915
    %4611 = vmatprep.subr.bf16.mxu0 %v3924
    %4612 = vmatpush1.bf16.msra.mxu0 %v3923
    %4613 = vmatprep.subr.bf16.mxu0 %v3932
    %4614 = vmatpush1.bf16.msra.mxu0 %v3931
    %4615 = vmatprep.subr.bf16.mxu0 %v3940
    %4616 = vmatpush1.bf16.msra.mxu0 %v3939
    %4617 = vmatprep.subr.bf16.mxu0 %v3948
    %4618 = vmatpush1.bf16.msra.mxu0 %v3947
    %4619 = vmatprep.subr.bf16.mxu0 %v3956
    %4620 = vmatpush1.bf16.msra.mxu0 %v3955
    %4621 = vmatprep.subr.bf16.mxu0 %v3964
    %4622 = vmatpush1.bf16.msra.mxu0 %v3963
    %4623 = vmatprep.subr.bf16.mxu0 %v3972
    %4624 = vmatpush1.bf16.msra.mxu0 %v3971
    %4625 = vmatprep.subr.bf16.mxu0 %v3980
    %4626 = vmatpush1.bf16.msra.mxu0 %v3979
    %4627 = vmatprep.subr.bf16.mxu0 %v3988
    %4628 = vmatpush1.bf16.msra.mxu0 %v3987
    %4629 = vmatprep.subr.bf16.mxu0 %v3996
    %4630 = vmatpush1.bf16.msra.mxu0 %v3995
    %4631 = vmatprep.subr.bf16.mxu0 %v4004
    %4632 = vmatpush1.bf16.msra.mxu0 %v4003
    %4633 = vmatprep.subr.bf16.mxu0 %v4012
    %4634 = vmatpush1.bf16.msra.mxu0 %v4011
    %4635 = vmatprep.subr.bf16.mxu0 %v4020
    %4636 = vmatpush1.bf16.msra.mxu0 %v4019
    %4637 = vmatprep.mubr.bf16.mxu0 %v2739
    %4638 = vmatmul.mubr.bf16.gmra.mrb[0].mxu0 %v2738
    %v4639 = vpop.f32.mrb[0].mxu0
    %v4640 = vadd.f32 %v4599, %v4639
    %v4641 = vpop.f32.mrb[0].mxu0
    %v4642 = vadd.f32 %v4601, %v4641
    %v4643 = vpop.f32.mrb[0].mxu0
    %v4644 = vpop.f32.mrb[0].mxu0
    %4645 = vdwg.mxu0
    %v4646 = vmax.f32 %v4394, 0.0
    %v4647 = vmax.f32 %v4396, 0.0
    %v4648 = vmax.f32 %v4476, 0.0
    %v4649 = vmax.f32 %v4478, 0.0
    %v4650 = vmax.f32 %v4558, 0.0
    %v4651 = vmax.f32 %v4560, 0.0
    %v4652 = vmax.f32 %v4640, 0.0
    %v4653 = vmax.f32 %v4642, 0.0
    %v4654 = vpack.c.bf16 %v4646, %v4646
    %v4655 = vpack.c.bf16 %v4647, %v4647
    %v4656 = vpack.c.bf16 %v4648, %v4648
    %v4657 = vpack.c.bf16 %v4649, %v4649
    %v4658 = vpack.c.bf16 %v4650, %v4650
    %v4659 = vpack.c.bf16 %v4651, %v4651
    %v4660 = vpack.c.bf16 %v4652, %v4652
    %v4661 = vpack.c.bf16 %v4653, %v4653
    %v4662 = vld [vmem:[%s13] sm:$0xf]
    %v4663 = vld [vmem:[%s13 + $0x4] sm:$0xf]
    %v4664 = vld [vmem:[%s13 + $0x8] sm:$0xf]
    %v4665 = vld [vmem:[%s13 + $0xc] sm:$0xf]
    %v4666 = vld [vmem:[%s13 + $0x10] sm:$0xf]
    %v4667 = vld [vmem:[%s13 + $0x14] sm:$0xf]
    %v4668 = vld [vmem:[%s13 + $0x18] sm:$0xf]
    %v4669 = vld [vmem:[%s13 + $0x1c] sm:$0xf]
    %v4670 = vld [vmem:[%s13 + $0x20] sm:$0xf]
    %v4671 = vld [vmem:[%s13 + $0x24] sm:$0xf]
    %v4672 = vld [vmem:[%s13 + $0x28] sm:$0xf]
    %v4673 = vld [vmem:[%s13 + $0x2c] sm:$0xf]
    %v4674 = vld [vmem:[%s13 + $0x30] sm:$0xf]
    %v4675 = vld [vmem:[%s13 + $0x34] sm:$0xf]
    %v4676 = vld [vmem:[%s13 + $0x38] sm:$0xf]
    %v4677 = vld [vmem:[%s13 + $0x3c] sm:$0xf]
    %v4678 = vld [vmem:[%s13 + $0x40] sm:$0xf]
    %v4679 = vld [vmem:[%s13 + $0x44] sm:$0xf]
    %v4680 = vld [vmem:[%s13 + $0x48] sm:$0xf]
    %v4681 = vld [vmem:[%s13 + $0x4c] sm:$0xf]
    %v4682 = vld [vmem:[%s13 + $0x50] sm:$0xf]
    %v4683 = vld [vmem:[%s13 + $0x54] sm:$0xf]
    %v4684 = vld [vmem:[%s13 + $0x58] sm:$0xf]
    %v4685 = vld [vmem:[%s13 + $0x5c] sm:$0xf]
    %v4686 = vld [vmem:[%s13 + $0x60] sm:$0xf]
    %v4687 = vld [vmem:[%s13 + $0x64] sm:$0xf]
    %v4688 = vld [vmem:[%s13 + $0x68] sm:$0xf]
    %v4689 = vld [vmem:[%s13 + $0x6c] sm:$0xf]
    %v4690 = vld [vmem:[%s13 + $0x70] sm:$0xf]
    %v4691 = vld [vmem:[%s13 + $0x74] sm:$0xf]
    %v4692 = vld [vmem:[%s13 + $0x78] sm:$0xf]
    %v4693 = vld [vmem:[%s13 + $0x7c] sm:$0xf]
    %v4694 = vld [vmem:[%s13 + $0x80] sm:$0xf]
    %v4695 = vld [vmem:[%s13 + $0x84] sm:$0xf]
    %v4696 = vld [vmem:[%s13 + $0x88] sm:$0xf]
    %v4697 = vld [vmem:[%s13 + $0x8c] sm:$0xf]
    %v4698 = vld [vmem:[%s13 + $0x90] sm:$0xf]
    %v4699 = vld [vmem:[%s13 + $0x94] sm:$0xf]
    %v4700 = vld [vmem:[%s13 + $0x98] sm:$0xf]
    %v4701 = vld [vmem:[%s13 + $0x9c] sm:$0xf]
    %v4702 = vld [vmem:[%s13 + $0xa0] sm:$0xf]
    %v4703 = vld [vmem:[%s13 + $0xa4] sm:$0xf]
    %v4704 = vld [vmem:[%s13 + $0xa8] sm:$0xf]
    %v4705 = vld [vmem:[%s13 + $0xac] sm:$0xf]
    %v4706 = vld [vmem:[%s13 + $0xb0] sm:$0xf]
    %v4707 = vld [vmem:[%s13 + $0xb4] sm:$0xf]
    %v4708 = vld [vmem:[%s13 + $0xb8] sm:$0xf]
    %v4709 = vld [vmem:[%s13 + $0xbc] sm:$0xf]
    %v4710 = vld [vmem:[%s13 + $0xc0] sm:$0xf]
    %v4711 = vld [vmem:[%s13 + $0xc4] sm:$0xf]
    %v4712 = vld [vmem:[%s13 + $0xc8] sm:$0xf]
    %v4713 = vld [vmem:[%s13 + $0xcc] sm:$0xf]
    %v4714 = vld [vmem:[%s13 + $0xd0] sm:$0xf]
    %v4715 = vld [vmem:[%s13 + $0xd4] sm:$0xf]
    %v4716 = vld [vmem:[%s13 + $0xd8] sm:$0xf]
    %v4717 = vld [vmem:[%s13 + $0xdc] sm:$0xf]
    %v4718 = vld [vmem:[%s13 + $0xe0] sm:$0xf]
    %v4719 = vld [vmem:[%s13 + $0xe4] sm:$0xf]
    %v4720 = vld [vmem:[%s13 + $0xe8] sm:$0xf]
    %v4721 = vld [vmem:[%s13 + $0xec] sm:$0xf]
    %v4722 = vld [vmem:[%s13 + $0xf0] sm:$0xf]
    %v4723 = vld [vmem:[%s13 + $0xf4] sm:$0xf]
    %v4724 = vld [vmem:[%s13 + $0xf8] sm:$0xf]
    %v4725 = vld [vmem:[%s13 + $0xfc] sm:$0xf]
    %v4726 = vld [vmem:[%s13 + $0x100] sm:$0xf]
    %v4727 = vld [vmem:[%s13 + $0x104] sm:$0xf]
    %v4728 = vld [vmem:[%s13 + $0x108] sm:$0xf]
    %v4729 = vld [vmem:[%s13 + $0x10c] sm:$0xf]
    %v4730 = vld [vmem:[%s13 + $0x110] sm:$0xf]
    %v4731 = vld [vmem:[%s13 + $0x114] sm:$0xf]
    %v4732 = vld [vmem:[%s13 + $0x118] sm:$0xf]
    %v4733 = vld [vmem:[%s13 + $0x11c] sm:$0xf]
    %v4734 = vld [vmem:[%s13 + $0x120] sm:$0xf]
    %v4735 = vld [vmem:[%s13 + $0x124] sm:$0xf]
    %v4736 = vld [vmem:[%s13 + $0x128] sm:$0xf]
    %v4737 = vld [vmem:[%s13 + $0x12c] sm:$0xf]
    %v4738 = vld [vmem:[%s13 + $0x130] sm:$0xf]
    %v4739 = vld [vmem:[%s13 + $0x134] sm:$0xf]
    %v4740 = vld [vmem:[%s13 + $0x138] sm:$0xf]
    %v4741 = vld [vmem:[%s13 + $0x13c] sm:$0xf]
    %v4742 = vld [vmem:[%s13 + $0x140] sm:$0xf]
    %v4743 = vld [vmem:[%s13 + $0x144] sm:$0xf]
    %v4744 = vld [vmem:[%s13 + $0x148] sm:$0xf]
    %v4745 = vld [vmem:[%s13 + $0x14c] sm:$0xf]
    %v4746 = vld [vmem:[%s13 + $0x150] sm:$0xf]
    %v4747 = vld [vmem:[%s13 + $0x154] sm:$0xf]
    %v4748 = vld [vmem:[%s13 + $0x158] sm:$0xf]
    %v4749 = vld [vmem:[%s13 + $0x15c] sm:$0xf]
    %v4750 = vld [vmem:[%s13 + $0x160] sm:$0xf]
    %v4751 = vld [vmem:[%s13 + $0x164] sm:$0xf]
    %v4752 = vld [vmem:[%s13 + $0x168] sm:$0xf]
    %v4753 = vld [vmem:[%s13 + $0x16c] sm:$0xf]
    %v4754 = vld [vmem:[%s13 + $0x170] sm:$0xf]
    %v4755 = vld [vmem:[%s13 + $0x174] sm:$0xf]
    %v4756 = vld [vmem:[%s13 + $0x178] sm:$0xf]
    %v4757 = vld [vmem:[%s13 + $0x17c] sm:$0xf]
    %v4758 = vld [vmem:[%s13 + $0x180] sm:$0xf]
    %v4759 = vld [vmem:[%s13 + $0x184] sm:$0xf]
    %v4760 = vld [vmem:[%s13 + $0x188] sm:$0xf]
    %v4761 = vld [vmem:[%s13 + $0x18c] sm:$0xf]
    %v4762 = vld [vmem:[%s13 + $0x190] sm:$0xf]
    %v4763 = vld [vmem:[%s13 + $0x194] sm:$0xf]
    %v4764 = vld [vmem:[%s13 + $0x198] sm:$0xf]
    %v4765 = vld [vmem:[%s13 + $0x19c] sm:$0xf]
    %v4766 = vld [vmem:[%s13 + $0x1a0] sm:$0xf]
    %v4767 = vld [vmem:[%s13 + $0x1a4] sm:$0xf]
    %v4768 = vld [vmem:[%s13 + $0x1a8] sm:$0xf]
    %v4769 = vld [vmem:[%s13 + $0x1ac] sm:$0xf]
    %v4770 = vld [vmem:[%s13 + $0x1b0] sm:$0xf]
    %v4771 = vld [vmem:[%s13 + $0x1b4] sm:$0xf]
    %v4772 = vld [vmem:[%s13 + $0x1b8] sm:$0xf]
    %v4773 = vld [vmem:[%s13 + $0x1bc] sm:$0xf]
    %v4774 = vld [vmem:[%s13 + $0x1c0] sm:$0xf]
    %v4775 = vld [vmem:[%s13 + $0x1c4] sm:$0xf]
    %v4776 = vld [vmem:[%s13 + $0x1c8] sm:$0xf]
    %v4777 = vld [vmem:[%s13 + $0x1cc] sm:$0xf]
    %v4778 = vld [vmem:[%s13 + $0x1d0] sm:$0xf]
    %v4779 = vld [vmem:[%s13 + $0x1d4] sm:$0xf]
    %v4780 = vld [vmem:[%s13 + $0x1d8] sm:$0xf]
    %v4781 = vld [vmem:[%s13 + $0x1dc] sm:$0xf]
    %v4782 = vld [vmem:[%s13 + $0x1e0] sm:$0xf]
    %v4783 = vld [vmem:[%s13 + $0x1e4] sm:$0xf]
    %v4784 = vld [vmem:[%s13 + $0x1e8] sm:$0xf]
    %v4785 = vld [vmem:[%s13 + $0x1ec] sm:$0xf]
    %v4786 = vld [vmem:[%s13 + $0x1f0] sm:$0xf]
    %v4787 = vld [vmem:[%s13 + $0x1f4] sm:$0xf]
    %v4788 = vld [vmem:[%s13 + $0x1f8] sm:$0xf]
    %v4789 = vld [vmem:[%s13 + $0x1fc] sm:$0xf]
    %v4790 = vld [vmem:[%s14] sm:$0x1]
    %v4919 = vunpack.c.l.b16 %v4662
    %v4920 = vunpack.c.l.b16 %v4663
    %v4921 = vunpack.c.l.b16 %v4664
    %v4922 = vunpack.c.l.b16 %v4665
    %v4923 = vunpack.c.l.b16 %v4666
    %v4924 = vunpack.c.l.b16 %v4667
    %v4925 = vunpack.c.l.b16 %v4668
    %v4926 = vunpack.c.l.b16 %v4669
    %v4927 = vunpack.c.l.b16 %v4670
    %v4928 = vunpack.c.l.b16 %v4671
    %v4929 = vunpack.c.l.b16 %v4672
    %v4930 = vunpack.c.l.b16 %v4673
    %v4931 = vunpack.c.l.b16 %v4674
    %v4932 = vunpack.c.l.b16 %v4675
    %v4933 = vunpack.c.l.b16 %v4676
    %v4934 = vunpack.c.l.b16 %v4677
    %v4935 = vunpack.c.l.b16 %v4678
    %v4936 = vunpack.c.l.b16 %v4679
    %v4937 = vunpack.c.l.b16 %v4680
    %v4938 = vunpack.c.l.b16 %v4681
    %v4939 = vunpack.c.l.b16 %v4682
    %v4940 = vunpack.c.l.b16 %v4683
    %v4941 = vunpack.c.l.b16 %v4684
    %v4942 = vunpack.c.l.b16 %v4685
    %v4943 = vunpack.c.l.b16 %v4686
    %v4944 = vunpack.c.l.b16 %v4687
    %v4945 = vunpack.c.l.b16 %v4688
    %v4946 = vunpack.c.l.b16 %v4689
    %v4947 = vunpack.c.l.b16 %v4690
    %v4948 = vunpack.c.l.b16 %v4691
    %v4949 = vunpack.c.l.b16 %v4692
    %v4950 = vunpack.c.l.b16 %v4693
    %v4951 = vunpack.c.l.b16 %v4694
    %v4952 = vunpack.c.l.b16 %v4695
    %v4953 = vunpack.c.l.b16 %v4696
    %v4954 = vunpack.c.l.b16 %v4697
    %v4955 = vunpack.c.l.b16 %v4698
    %v4956 = vunpack.c.l.b16 %v4699
    %v4957 = vunpack.c.l.b16 %v4700
    %v4958 = vunpack.c.l.b16 %v4701
    %v4959 = vunpack.c.l.b16 %v4702
    %v4960 = vunpack.c.l.b16 %v4703
    %v4961 = vunpack.c.l.b16 %v4704
    %v4962 = vunpack.c.l.b16 %v4705
    %v4963 = vunpack.c.l.b16 %v4706
    %v4964 = vunpack.c.l.b16 %v4707
    %v4965 = vunpack.c.l.b16 %v4708
    %v4966 = vunpack.c.l.b16 %v4709
    %v4967 = vunpack.c.l.b16 %v4710
    %v4968 = vunpack.c.l.b16 %v4711
    %v4969 = vunpack.c.l.b16 %v4712
    %v4970 = vunpack.c.l.b16 %v4713
    %v4971 = vunpack.c.l.b16 %v4714
    %v4972 = vunpack.c.l.b16 %v4715
    %v4973 = vunpack.c.l.b16 %v4716
    %v4974 = vunpack.c.l.b16 %v4717
    %v4975 = vunpack.c.l.b16 %v4718
    %v4976 = vunpack.c.l.b16 %v4719
    %v4977 = vunpack.c.l.b16 %v4720
    %v4978 = vunpack.c.l.b16 %v4721
    %v4979 = vunpack.c.l.b16 %v4722
    %v4980 = vunpack.c.l.b16 %v4723
    %v4981 = vunpack.c.l.b16 %v4724
    %v4982 = vunpack.c.l.b16 %v4725
    %v4983 = vunpack.c.l.b16 %v4726
    %v4984 = vunpack.c.l.b16 %v4727
    %v4985 = vunpack.c.l.b16 %v4728
    %v4986 = vunpack.c.l.b16 %v4729
    %v4987 = vunpack.c.l.b16 %v4730
    %v4988 = vunpack.c.l.b16 %v4731
    %v4989 = vunpack.c.l.b16 %v4732
    %v4990 = vunpack.c.l.b16 %v4733
    %v4991 = vunpack.c.l.b16 %v4734
    %v4992 = vunpack.c.l.b16 %v4735
    %v4993 = vunpack.c.l.b16 %v4736
    %v4994 = vunpack.c.l.b16 %v4737
    %v4995 = vunpack.c.l.b16 %v4738
    %v4996 = vunpack.c.l.b16 %v4739
    %v4997 = vunpack.c.l.b16 %v4740
    %v4998 = vunpack.c.l.b16 %v4741
    %v4999 = vunpack.c.l.b16 %v4742
    %v5000 = vunpack.c.l.b16 %v4743
    %v5001 = vunpack.c.l.b16 %v4744
    %v5002 = vunpack.c.l.b16 %v4745
    %v5003 = vunpack.c.l.b16 %v4746
    %v5004 = vunpack.c.l.b16 %v4747
    %v5005 = vunpack.c.l.b16 %v4748
    %v5006 = vunpack.c.l.b16 %v4749
    %v5007 = vunpack.c.l.b16 %v4750
    %v5008 = vunpack.c.l.b16 %v4751
    %v5009 = vunpack.c.l.b16 %v4752
    %v5010 = vunpack.c.l.b16 %v4753
    %v5011 = vunpack.c.l.b16 %v4754
    %v5012 = vunpack.c.l.b16 %v4755
    %v5013 = vunpack.c.l.b16 %v4756
    %v5014 = vunpack.c.l.b16 %v4757
    %v5015 = vunpack.c.l.b16 %v4758
    %v5016 = vunpack.c.l.b16 %v4759
    %v5017 = vunpack.c.l.b16 %v4760
    %v5018 = vunpack.c.l.b16 %v4761
    %v5019 = vunpack.c.l.b16 %v4762
    %v5020 = vunpack.c.l.b16 %v4763
    %v5021 = vunpack.c.l.b16 %v4764
    %v5022 = vunpack.c.l.b16 %v4765
    %v5023 = vunpack.c.l.b16 %v4766
    %v5024 = vunpack.c.l.b16 %v4767
    %v5025 = vunpack.c.l.b16 %v4768
    %v5026 = vunpack.c.l.b16 %v4769
    %v5027 = vunpack.c.l.b16 %v4770
    %v5028 = vunpack.c.l.b16 %v4771
    %v5029 = vunpack.c.l.b16 %v4772
    %v5030 = vunpack.c.l.b16 %v4773
    %v5031 = vunpack.c.l.b16 %v4774
    %v5032 = vunpack.c.l.b16 %v4775
    %v5033 = vunpack.c.l.b16 %v4776
    %v5034 = vunpack.c.l.b16 %v4777
    %v5035 = vunpack.c.l.b16 %v4778
    %v5036 = vunpack.c.l.b16 %v4779
    %v5037 = vunpack.c.l.b16 %v4780
    %v5038 = vunpack.c.l.b16 %v4781
    %v5039 = vunpack.c.l.b16 %v4782
    %v5040 = vunpack.c.l.b16 %v4783
    %v5041 = vunpack.c.l.b16 %v4784
    %v5042 = vunpack.c.l.b16 %v4785
    %v5043 = vunpack.c.l.b16 %v4786
    %v5044 = vunpack.c.l.b16 %v4787
    %v5045 = vunpack.c.l.b16 %v4788
    %v5046 = vunpack.c.l.b16 %v4789
    %v5047 = vpack.c.b16 %v4920, %v4919
    %v5048 = vpack.c.b16 %v4922, %v4921
    %v5049 = vpack.c.b16 %v4924, %v4923
    %v5050 = vpack.c.b16 %v4926, %v4925
    %v5051 = vpack.c.b16 %v4928, %v4927
    %v5052 = vpack.c.b16 %v4930, %v4929
    %v5053 = vpack.c.b16 %v4932, %v4931
    %v5054 = vpack.c.b16 %v4934, %v4933
    %v5055 = vpack.c.b16 %v4936, %v4935
    %v5056 = vpack.c.b16 %v4938, %v4937
    %v5057 = vpack.c.b16 %v4940, %v4939
    %v5058 = vpack.c.b16 %v4942, %v4941
    %v5059 = vpack.c.b16 %v4944, %v4943
    %v5060 = vpack.c.b16 %v4946, %v4945
    %v5061 = vpack.c.b16 %v4948, %v4947
    %v5062 = vpack.c.b16 %v4950, %v4949
    %v5063 = vpack.c.b16 %v4952, %v4951
    %v5064 = vpack.c.b16 %v4954, %v4953
    %v5065 = vpack.c.b16 %v4956, %v4955
    %v5066 = vpack.c.b16 %v4958, %v4957
    %v5067 = vpack.c.b16 %v4960, %v4959
    %v5068 = vpack.c.b16 %v4962, %v4961
    %v5069 = vpack.c.b16 %v4964, %v4963
    %v5070 = vpack.c.b16 %v4966, %v4965
    %v5071 = vpack.c.b16 %v4968, %v4967
    %v5072 = vpack.c.b16 %v4970, %v4969
    %v5073 = vpack.c.b16 %v4972, %v4971
    %v5074 = vpack.c.b16 %v4974, %v4973
    %v5075 = vpack.c.b16 %v4976, %v4975
    %v5076 = vpack.c.b16 %v4978, %v4977
    %v5077 = vpack.c.b16 %v4980, %v4979
    %v5078 = vpack.c.b16 %v4982, %v4981
    %v5079 = vpack.c.b16 %v4984, %v4983
    %v5080 = vpack.c.b16 %v4986, %v4985
    %v5081 = vpack.c.b16 %v4988, %v4987
    %v5082 = vpack.c.b16 %v4990, %v4989
    %v5083 = vpack.c.b16 %v4992, %v4991
    %v5084 = vpack.c.b16 %v4994, %v4993
    %v5085 = vpack.c.b16 %v4996, %v4995
    %v5086 = vpack.c.b16 %v4998, %v4997
    %v5087 = vpack.c.b16 %v5000, %v4999
    %v5088 = vpack.c.b16 %v5002, %v5001
    %v5089 = vpack.c.b16 %v5004, %v5003
    %v5090 = vpack.c.b16 %v5006, %v5005
    %v5091 = vpack.c.b16 %v5008, %v5007
    %v5092 = vpack.c.b16 %v5010, %v5009
    %v5093 = vpack.c.b16 %v5012, %v5011
    %v5094 = vpack.c.b16 %v5014, %v5013
    %v5095 = vpack.c.b16 %v5016, %v5015
    %v5096 = vpack.c.b16 %v5018, %v5017
    %v5097 = vpack.c.b16 %v5020, %v5019
    %v5098 = vpack.c.b16 %v5022, %v5021
    %v5099 = vpack.c.b16 %v5024, %v5023
    %v5100 = vpack.c.b16 %v5026, %v5025
    %v5101 = vpack.c.b16 %v5028, %v5027
    %v5102 = vpack.c.b16 %v5030, %v5029
    %v5103 = vpack.c.b16 %v5032, %v5031
    %v5104 = vpack.c.b16 %v5034, %v5033
    %v5105 = vpack.c.b16 %v5036, %v5035
    %v5106 = vpack.c.b16 %v5038, %v5037
    %v5107 = vpack.c.b16 %v5040, %v5039
    %v5108 = vpack.c.b16 %v5042, %v5041
    %v5109 = vpack.c.b16 %v5044, %v5043
    %v5110 = vpack.c.b16 %v5046, %v5045
    %5175 = vmatprep.subr.bf16.mxu0 0
    %5176 = vmatpush1.bf16.msra.mxu0 %v5047
    %5177 = vmatprep.subr.bf16.mxu0 0
    %5178 = vmatpush1.bf16.msra.mxu0 %v5048
    %5179 = vmatprep.subr.bf16.mxu0 0
    %5180 = vmatpush1.bf16.msra.mxu0 %v5049
    %5181 = vmatprep.subr.bf16.mxu0 0
    %5182 = vmatpush1.bf16.msra.mxu0 %v5050
    %5183 = vmatprep.subr.bf16.mxu0 0
    %5184 = vmatpush1.bf16.msra.mxu0 %v5051
    %5185 = vmatprep.subr.bf16.mxu0 0
    %5186 = vmatpush1.bf16.msra.mxu0 %v5052
    %5187 = vmatprep.subr.bf16.mxu0 0
    %5188 = vmatpush1.bf16.msra.mxu0 %v5053
    %5189 = vmatprep.subr.bf16.mxu0 0
    %5190 = vmatpush1.bf16.msra.mxu0 %v5054
    %5191 = vmatprep.subr.bf16.mxu0 0
    %5192 = vmatpush1.bf16.msra.mxu0 %v5055
    %5193 = vmatprep.subr.bf16.mxu0 0
    %5194 = vmatpush1.bf16.msra.mxu0 %v5056
    %5195 = vmatprep.subr.bf16.mxu0 0
    %5196 = vmatpush1.bf16.msra.mxu0 %v5057
    %5197 = vmatprep.subr.bf16.mxu0 0
    %5198 = vmatpush1.bf16.msra.mxu0 %v5058
    %5199 = vmatprep.subr.bf16.mxu0 0
    %5200 = vmatpush1.bf16.msra.mxu0 %v5059
    %5201 = vmatprep.subr.bf16.mxu0 0
    %5202 = vmatpush1.bf16.msra.mxu0 %v5060
    %5203 = vmatprep.subr.bf16.mxu0 0
    %5204 = vmatpush1.bf16.msra.mxu0 %v5061
    %5205 = vmatprep.subr.bf16.mxu0 0
    %5206 = vmatpush1.bf16.msra.mxu0 %v5062
    %5207 = vmatprep.mubr.bf16.mxu0 %v4655
    %5208 = vmatmul.mubr.bf16.gmra.mrb[0].mxu0 %v4654
    %v5209 = vpop.f32.mrb[0].mxu0
    %v5210 = vadd.f32 %v4790, %v5209
    %v5211 = vpop.f32.mrb[0].mxu0
    %v5212 = vpop.f32.mrb[0].mxu0
    %v5213 = vpop.f32.mrb[0].mxu0
    %5214 = vdwg.mxu0
    %5215 = vmatprep.subr.bf16.mxu0 0
    %5216 = vmatpush1.bf16.msra.mxu0 %v5063
    %5217 = vmatprep.subr.bf16.mxu0 0
    %5218 = vmatpush1.bf16.msra.mxu0 %v5064
    %5219 = vmatprep.subr.bf16.mxu0 0
    %5220 = vmatpush1.bf16.msra.mxu0 %v5065
    %5221 = vmatprep.subr.bf16.mxu0 0
    %5222 = vmatpush1.bf16.msra.mxu0 %v5066
    %5223 = vmatprep.subr.bf16.mxu0 0
    %5224 = vmatpush1.bf16.msra.mxu0 %v5067
    %5225 = vmatprep.subr.bf16.mxu0 0
    %5226 = vmatpush1.bf16.msra.mxu0 %v5068
    %5227 = vmatprep.subr.bf16.mxu0 0
    %5228 = vmatpush1.bf16.msra.mxu0 %v5069
    %5229 = vmatprep.subr.bf16.mxu0 0
    %5230 = vmatpush1.bf16.msra.mxu0 %v5070
    %5231 = vmatprep.subr.bf16.mxu0 0
    %5232 = vmatpush1.bf16.msra.mxu0 %v5071
    %5233 = vmatprep.subr.bf16.mxu0 0
    %5234 = vmatpush1.bf16.msra.mxu0 %v5072
    %5235 = vmatprep.subr.bf16.mxu0 0
    %5236 = vmatpush1.bf16.msra.mxu0 %v5073
    %5237 = vmatprep.subr.bf16.mxu0 0
    %5238 = vmatpush1.bf16.msra.mxu0 %v5074
    %5239 = vmatprep.subr.bf16.mxu0 0
    %5240 = vmatpush1.bf16.msra.mxu0 %v5075
    %5241 = vmatprep.subr.bf16.mxu0 0
    %5242 = vmatpush1.bf16.msra.mxu0 %v5076
    %5243 = vmatprep.subr.bf16.mxu0 0
    %5244 = vmatpush1.bf16.msra.mxu0 %v5077
    %5245 = vmatprep.subr.bf16.mxu0 0
    %5246 = vmatpush1.bf16.msra.mxu0 %v5078
    %5247 = vmatprep.mubr.bf16.mxu0 %v4657
    %5248 = vmatmul.mubr.bf16.gmra.mrb[0].mxu0 %v4656
    %v5249 = vpop.f32.mrb[0].mxu0
    %v5250 = vadd.f32 %v5210, %v5249
    %v5251 = vpop.f32.mrb[0].mxu0
    %v5252 = vpop.f32.mrb[0].mxu0
    %v5253 = vpop.f32.mrb[0].mxu0
    %5254 = vdwg.mxu0
    %5255 = vmatprep.subr.bf16.mxu0 0
    %5256 = vmatpush1.bf16.msra.mxu0 %v5079
    %5257 = vmatprep.subr.bf16.mxu0 0
    %5258 = vmatpush1.bf16.msra.mxu0 %v5080
    %5259 = vmatprep.subr.bf16.mxu0 0
    %5260 = vmatpush1.bf16.msra.mxu0 %v5081
    %5261 = vmatprep.subr.bf16.mxu0 0
    %5262 = vmatpush1.bf16.msra.mxu0 %v5082
    %5263 = vmatprep.subr.bf16.mxu0 0
    %5264 = vmatpush1.bf16.msra.mxu0 %v5083
    %5265 = vmatprep.subr.bf16.mxu0 0
    %5266 = vmatpush1.bf16.msra.mxu0 %v5084
    %5267 = vmatprep.subr.bf16.mxu0 0
    %5268 = vmatpush1.bf16.msra.mxu0 %v5085
    %5269 = vmatprep.subr.bf16.mxu0 0
    %5270 = vmatpush1.bf16.msra.mxu0 %v5086
    %5271 = vmatprep.subr.bf16.mxu0 0
    %5272 = vmatpush1.bf16.msra.mxu0 %v5087
    %5273 = vmatprep.subr.bf16.mxu0 0
    %5274 = vmatpush1.bf16.msra.mxu0 %v5088
    %5275 = vmatprep.subr.bf16.mxu0 0
    %5276 = vmatpush1.bf16.msra.mxu0 %v5089
    %5277 = vmatprep.subr.bf16.mxu0 0
    %5278 = vmatpush1.bf16.msra.mxu0 %v5090
    %5279 = vmatprep.subr.bf16.mxu0 0
    %5280 = vmatpush1.bf16.msra.mxu0 %v5091
    %5281 = vmatprep.subr.bf16.mxu0 0
    %5282 = vmatpush1.bf16.msra.mxu0 %v5092
    %5283 = vmatprep.subr.bf16.mxu0 0
    %5284 = vmatpush1.bf16.msra.mxu0 %v5093
    %5285 = vmatprep.subr.bf16.mxu0 0
    %5286 = vmatpush1.bf16.msra.mxu0 %v5094
    %5287 = vmatprep.mubr.bf16.mxu0 %v4659
    %5288 = vmatmul.mubr.bf16.gmra.mrb[0].mxu0 %v4658
    %v5289 = vpop.f32.mrb[0].mxu0
    %v5290 = vadd.f32 %v5250, %v5289
    %v5291 = vpop.f32.mrb[0].mxu0
    %v5292 = vpop.f32.mrb[0].mxu0
    %v5293 = vpop.f32.mrb[0].mxu0
    %5294 = vdwg.mxu0
    %5295 = vmatprep.subr.bf16.mxu0 0
    %5296 = vmatpush1.bf16.msra.mxu0 %v5095
    %5297 = vmatprep.subr.bf16.mxu0 0
    %5298 = vmatpush1.bf16.msra.mxu0 %v5096
    %5299 = vmatprep.subr.bf16.mxu0 0
    %5300 = vmatpush1.bf16.msra.mxu0 %v5097
    %5301 = vmatprep.subr.bf16.mxu0 0
    %5302 = vmatpush1.bf16.msra.mxu0 %v5098
    %5303 = vmatprep.subr.bf16.mxu0 0
    %5304 = vmatpush1.bf16.msra.mxu0 %v5099
    %5305 = vmatprep.subr.bf16.mxu0 0
    %5306 = vmatpush1.bf16.msra.mxu0 %v5100
    %5307 = vmatprep.subr.bf16.mxu0 0
    %5308 = vmatpush1.bf16.msra.mxu0 %v5101
    %5309 = vmatprep.subr.bf16.mxu0 0
    %5310 = vmatpush1.bf16.msra.mxu0 %v5102
    %5311 = vmatprep.subr.bf16.mxu0 0
    %5312 = vmatpush1.bf16.msra.mxu0 %v5103
    %5313 = vmatprep.subr.bf16.mxu0 0
    %5314 = vmatpush1.bf16.msra.mxu0 %v5104
    %5315 = vmatprep.subr.bf16.mxu0 0
    %5316 = vmatpush1.bf16.msra.mxu0 %v5105
    %5317 = vmatprep.subr.bf16.mxu0 0
    %5318 = vmatpush1.bf16.msra.mxu0 %v5106
    %5319 = vmatprep.subr.bf16.mxu0 0
    %5320 = vmatpush1.bf16.msra.mxu0 %v5107
    %5321 = vmatprep.subr.bf16.mxu0 0
    %5322 = vmatpush1.bf16.msra.mxu0 %v5108
    %5323 = vmatprep.subr.bf16.mxu0 0
    %5324 = vmatpush1.bf16.msra.mxu0 %v5109
    %5325 = vmatprep.subr.bf16.mxu0 0
    %5326 = vmatpush1.bf16.msra.mxu0 %v5110
    %5327 = vmatprep.mubr.bf16.mxu0 %v4661
    %5328 = vmatmul.mubr.bf16.gmra.mrb[0].mxu0 %v4660
    %v5329 = vpop.f32.mrb[0].mxu0
    %v5330 = vadd.f32 %v5290, %v5329
    %v5331 = vpop.f32.mrb[0].mxu0
    %v5332 = vpop.f32.mrb[0].mxu0
    %v5333 = vpop.f32.mrb[0].mxu0
    %5334 = vdwg.mxu0
    %v5335 = vtanh.pop %v5330
    %v5336 = vld [vmem:[%s15] sm:$0xff]
    %v5337 = vld [vmem:[%s15 + $0x8] sm:$0xff]
    %v5338 = vld [vmem:[%s15 + $0x10] sm:$0xff]
    %v5339 = vld [vmem:[%s15 + $0x18] sm:$0xff]
    %v5340 = vld [vmem:[%s15 + $0x20] sm:$0xff]
    %v5341 = vld [vmem:[%s15 + $0x28] sm:$0xff]
    %v5342 = vld [vmem:[%s15 + $0x30] sm:$0xff]
    %v5343 = vld [vmem:[%s15 + $0x38] sm:$0xff]
    %v5344 = vlaneseq
    %v5345 = vshrl.u32 %v5344, 7
    %v5346 = vsub.s32 0, %v5345
    %v5347 = vrot.slane %v5335, %v5346
    %v5348 = vsub.f32 %v5336, %v5347
    %v5349 = vsub.f32 %v5337, %v5347
    %v5350 = vsub.f32 %v5338, %v5347
    %v5351 = vsub.f32 %v5339, %v5347
    %v5352 = vsub.f32 %v5340, %v5347
    %v5353 = vsub.f32 %v5341, %v5347
    %v5354 = vsub.f32 %v5342, %v5347
    %v5355 = vsub.f32 %v5343, %v5347
    %v5356 = vand.u32 2147483647, %v5348
    %v5357 = vand.u32 2147483647, %v5349
    %v5358 = vand.u32 2147483647, %v5350
    %v5359 = vand.u32 2147483647, %v5351
    %v5360 = vand.u32 2147483647, %v5352
    %v5361 = vand.u32 2147483647, %v5353
    %v5362 = vand.u32 2147483647, %v5354
    %v5363 = vand.u32 2147483647, %v5355
    %vm5364 = vcmask 261120
    %v5365 = vsel %vm5364, %v5356, 0.0
    %5366 = vadd.xlane.f32.xlu0 %v5365
    %v5367 = vpop.xlane.xlu0 %5366
    %v5368 = vsel %vm5364, %v5357, 0.0
    %5369 = vadd.xlane.f32.xlu0 %v5368
    %v5370 = vpop.xlane.xlu0 %5369
    %v5371 = vsel %vm5364, %v5358, 0.0
    %5372 = vadd.xlane.f32.xlu0 %v5371
    %v5373 = vpop.xlane.xlu0 %5372
    %v5374 = vsel %vm5364, %v5359, 0.0
    %5375 = vadd.xlane.f32.xlu0 %v5374
    %v5376 = vpop.xlane.xlu0 %5375
    %v5377 = vsel %vm5364, %v5360, 0.0
    %5378 = vadd.xlane.f32.xlu0 %v5377
    %v5379 = vpop.xlane.xlu0 %5378
    %v5380 = vsel %vm5364, %v5361, 0.0
    %5381 = vadd.xlane.f32.xlu0 %v5380
    %v5382 = vpop.xlane.xlu0 %5381
    %v5383 = vsel %vm5364, %v5362, 0.0
    %5384 = vadd.xlane.f32.xlu0 %v5383
    %v5385 = vpop.xlane.xlu0 %5384
    %v5386 = vsel %vm5364, %v5363, 0.0
    %5387 = vadd.xlane.f32.xlu0 %v5386
    %v5388 = vpop.xlane.xlu0 %5387
    %v5389 = vmin.f32 %v5367, %v5379
    %v5390 = vmin.f32 %v5370, %v5382
    %v5391 = vmin.f32 %v5373, %v5385
    %v5392 = vmin.f32 %v5376, %v5388
    %v5393 = vmin.f32 %v5389, %v5390
    %v5394 = vmin.f32 %v5391, %v5392
    %v5395 = vmin.f32 %v5393, %v5394
    %v5396 = vrot.slane %v5395, 4
    %v5397 = vmin.f32 %v5395, %v5396
    %v5398 = vrot.slane %v5397, 2
    %v5399 = vmin.f32 %v5397, %v5398
    %v5400 = vrot.slane %v5399, 1
    %v5401 = vmin.f32 %v5399, %v5400
    %vm5402 = vcmask 0
    %5403 = vst.msk [vmem:[#allocation7] sm:$0x1] %vm5402, %v5401
    // Predicated region
    $region74: #{memstream_forward.1} parent=1 // pred_check
      _
    $region75: #{memstream_forward.1} parent=1 // pred_check_branch
      %5405 = sbr.rel (0) target = $region77
    $region76: #{memstream_forward.1} parent=1 // pred_region
      %s5407 = ssub.s32 16, 16
      %5408 = vsyncadd [#allocation4], %s5407
      %s5410 = sshll.u32 [#allocation7], 4
      %s5411 = int_to_ptr.vmem [resolvable:$true] %s5410
      %5413 = dma.vmem_to_hbm [thread:$0]  %s5411, 16, %s16, [#allocation4]
    $region77: #{memstream_forward.1} parent=1 // pred_fallthru
      _
    // Predicated region
    $region78: #{memstream_forward.1} parent=1 // pred_check
      _
    $region79: #{memstream_forward.1} parent=1 // pred_check_branch
      %5415 = sbr.rel (0) target = $region81
    $region80: #{memstream_forward.1} parent=1 // pred_region
      %5416 = dma.done [#allocation4], 16
    $region81: #{memstream_forward.1} parent=1 // pred_fallthru
      _
    %5417 = vsyncpa [#allocation3], 1
    %5418 = vsyncpa [#allocation6], 1
    %5419 = vsyncpa [#allocation4], 1

</llo_original>
